<compile_context>
chip_gen: v6e
topology: v6e:2x2x1
jax: 0.10.0
libtpu: 0.0.40
codegen_flags: <defaults>
</compile_context>

<pallas_src>
import math

import jax
import jax.numpy as jnp
from jax.experimental import pallas as pl
from jax.experimental.pallas import tpu as pltpu


def _round_up(a, m):
    return ((a + m - 1) // m) * m


# ----------------------------------------------------------------------------
# Fused Pallas kernel: conv1 + ReLU + conv2 + ReLU + flatten + Linear + PosEnc
# ----------------------------------------------------------------------------
def _fused_subsample_kernel(xw_ref, w1_ref, w2_ref, b2_ref, wl_ref, bl_ref,
                            pe_ref, o_ref):
    # xw_ref: (5, 1, TT2, 3*idim+1)  time-windowed rows + ones column     (bf16)
    # w1_ref: (3*idim+1, F1*odim)    conv1 folded dense, bias as last row (bf16)
    # w2_ref: (5, 5*odim, odim)      conv2 per-time-tap band weight       (bf16)
    # b2_ref: (1, odim)              conv2 bias                            (f32)
    # wl_ref: (F2, odim, odim_pad)   Linear per freq band, *sqrt(d), pad  (bf16)
    # bl_ref: (1, odim_pad)          Linear bias * sqrt(d), padded         (f32)
    # pe_ref: (TT2, odim_pad)        positional encoding, padded           (f32)
    # o_ref : (1, TT2, odim_pad)                                           (f32)
    cdt = w1_ref.dtype
    tt2 = xw_ref.shape[2]
    odim = b2_ref.shape[1]
    odim_pad = o_ref.shape[2]
    F2 = wl_ref.shape[0]

    w1 = w1_ref[...]          # hoisted once: shared by all 5 conv2 time taps
    b2 = b2_ref[...]

    def ki_body(ki, accs):
        # conv1 rows t1 = 3*t2 + ki; bias comes in via the folded ones column,
        # so the per-tap epilogue is just ReLU + cast.
        y1 = jnp.dot(xw_ref[ki, 0], w1, preferred_element_type=jnp.float32)
        y1 = jnp.maximum(y1, 0.0).astype(cdt)                 # (TT2, F1*odim)
        w2k = w2_ref[ki]                                      # (5*odim, odim)
        # conv2 tap ki: contract the 5-wide freq window per output band f2.
        # (Band slices are lane-128-aligned whenever odim % 128 == 0.)
        return tuple(
            accs[f2] + jnp.dot(y1[:, 3 * f2 * odim:(3 * f2 + 5) * odim], w2k,
                               preferred_element_type=jnp.float32)
            for f2 in range(F2))

    init = tuple(jnp.zeros((tt2, odim), jnp.float32) for _ in range(F2))
    accs = jax.lax.fori_loop(0, 5, ki_body, init, unroll=True)

    # conv2 bias + ReLU, then the per-band Linear (flatten permutation and
    # xscale already folded into wl) — the wide concatenated activation is
    # never materialized, and the output matmul/store are lane-dense.
    out = jnp.zeros((tt2, odim_pad), jnp.float32)
    for f2 in range(F2):
        z = jnp.maximum(accs[f2] + b2, 0.0).astype(cdt)
        out = out + jnp.dot(z, wl_ref[f2], preferred_element_type=jnp.float32)
    o_ref[0] = (out + bl_ref[...] + pe_ref[...]).astype(o_ref.dtype)


# ----------------------------------------------------------------------------
# One-time parameter prep: fold windows, bias, flatten permutation and xscale
# ----------------------------------------------------------------------------
def prepare_conv2d_subsampling6_params(params, idim, compute_dtype=jnp.bfloat16):
    w1, b1 = params["w1"], params["b1"]          # (odim,1,3,3), (odim,)
    w2, b2 = params["w2"], params["b2"]          # (odim,odim,5,5), (odim,)
    wl, bl = params["wl"], params["bl"]          # (odim, odim*F2), (odim,)
    odim = int(w1.shape[0])
    assert odim % 2 == 0, "sinusoidal PositionalEncoding assumes even d_model"
    F1 = (idim - 3) // 2 + 1
    F2 = (F1 - 5) // 3 + 1
    odim_pad = _round_up(odim, 128)
    xscale = math.sqrt(odim)

    # conv1 -> dense (3*idim+1, F1*odim); bias folded as the last row (it hits
    # the ones column appended to the input windows).
    j = jnp.arange(idim)[:, None, None]
    f1 = jnp.arange(F1)[None, :, None]
    kj1 = jnp.arange(3)[None, None, :]
    sel1 = (j == 2 * f1 + kj1).astype(jnp.float32)              # (idim, F1, 3)
    w1c = jnp.einsum("jfk,cik->ijfc", sel1, w1[:, 0])           # (3, idim, F1, odim)
    w1c = w1c.reshape(3 * idim, F1 * odim)
    b1row = jnp.tile(b1, F1).reshape(1, F1 * odim)
    w1c = jnp.concatenate([w1c, b1row], axis=0)                 # (3*idim+1, F1*odim)

    # conv2: keep the true per-time-tap band weight (no F1/F2 replication).
    # w2k[ki, kj*odim + c1, c2] = w2[c2, c1, ki, kj]
    w2k = jnp.transpose(w2, (2, 3, 1, 0)).reshape(5, 5 * odim, odim)
    b2d = b2.reshape(1, odim)

    # Linear: PyTorch flattens channel-major (fan-in index = c2*F2 + f2).
    # Split per conv2 freq band f2, fold xscale, pad output dim to 128 lanes.
    wlp = jnp.transpose(wl.reshape(odim, odim, F2), (2, 1, 0)) * xscale  # (F2, odim, odim)
    blp = (bl * xscale).reshape(1, odim)
    if odim_pad != odim:
        wlp = jnp.pad(wlp, ((0, 0), (0, 0), (0, odim_pad - odim)))
        blp = jnp.pad(blp, ((0, 0), (0, odim_pad - odim)))

    return dict(
        w1c=w1c.astype(compute_dtype),
        w2k=w2k.astype(compute_dtype), b2d=b2d.astype(jnp.float32),
        wlp=wlp.astype(compute_dtype), blp=blp.astype(jnp.float32),
        odim=odim, odim_pad=odim_pad, idim=idim, F1=F1, F2=F2,
        compute_dtype=compute_dtype,
    )


# ----------------------------------------------------------------------------
# Plain-JAX glue: halo-free stride-6 time deinterleave + PE table
# ----------------------------------------------------------------------------
def _time_windows(x, T2p, dtype):
    """(B, T, idim) -> (5, B, T2p, 3*idim + 1):
       out[ki, b, t2, kI*idim + j] = x[b, 6*t2 + 2*ki + kI, j]  (zero padded),
       plus a trailing ones column that picks up the folded conv1 bias row."""
    B, T, idim = x.shape
    need = 6 * T2p + 5
    if need > T:
        x = jnp.pad(x, ((0, 0), (0, need - T), (0, 0)))
    slabs = []
    for ki in range(5):
        for kI in range(3):
            d = 2 * ki + kI
            slabs.append(jax.lax.slice(
                x, (0, d, 0), (B, d + 6 * (T2p - 1) + 1, idim), (1, 6, 1)))
    xs = jnp.stack(slabs, axis=0).reshape(5, 3, B, T2p, idim)
    xs = jnp.transpose(xs, (0, 2, 3, 1, 4)).reshape(5, B, T2p, 3 * idim)
    ones = jnp.ones((5, B, T2p, 1), xs.dtype)
    # TODO(synk): this ~2.5x-of-x deinterleave is materialized in HBM; at long T
    # it could be fused into the pallas_call input DMA (allow_input_fusion) or
    # produced by the upstream op to save one HBM round-trip.
    return jnp.concatenate([xs, ones], axis=-1).astype(dtype)


def _sinusoidal_pe(length, d_model):
    pos = jnp.arange(length, dtype=jnp.float32)[:, None]
    div = jnp.exp(jnp.arange(0, d_model, 2, dtype=jnp.float32)
                  * -(math.log(10000.0) / d_model))
    pe = jnp.zeros((length, d_model), jnp.float32)
    pe = pe.at[:, 0::2].set(jnp.sin(pos * div))
    pe = pe.at[:, 1::2].set(jnp.cos(pos * div))
    return pe


# ----------------------------------------------------------------------------
# Forward pass (mirrors Conv2dSubsampling6.forward)
# ----------------------------------------------------------------------------
def conv2d_subsampling6(x, x_mask, prepped, *, tile_t2=256):
    """x: (B, T, idim) float32, x_mask: (B, 1, T) bool or None."""
    B, T, idim = x.shape
    assert idim == prepped["idim"]
    odim, odim_pad = prepped["odim"], prepped["odim_pad"]
    F1, F2 = prepped["F1"], prepped["F2"]
    cdt = prepped["compute_dtype"]

    T1 = (T - 3) // 2 + 1
    T2 = (T1 - 5) // 3 + 1
    if T2 < 1:
        raise ValueError(f"sequence too short for 1/6 subsampling: T={T}")

    # Rows per grid step: multiple of 8, large enough to fill the MXU M dim
    # (256 on v6e/v7x), capped by the (padded) output sequence length.
    TT2 = max(8, min(_round_up(tile_t2, 8), _round_up(T2, 8)))
    T2p = _round_up(T2, TT2)
    n_t = T2p // TT2

    xw = _time_windows(x, T2p, cdt)               # (5, B, T2p, 3*idim+1)
    pe = _sinusoidal_pe(T2p, odim)                # (T2p, odim) f32
    if odim_pad != odim:
        pe = jnp.pad(pe, ((0, 0), (0, odim_pad - odim)))

    K1a = 3 * idim + 1
    N1 = F1 * odim

    # Rough per-step VMEM need (weights + double-buffered streamed blocks +
    # compiler temporaries), used to raise the scoped-VMEM limit explicitly.
    weight_bytes = (prepped["w1c"].size + prepped["w2k"].size
                    + prepped["wlp"].size) * 2 \
                   + (prepped["b2d"].size + prepped["blp"].size) * 4
    stream_bytes = 5 * TT2 * K1a * 2 + 2 * TT2 * odim_pad * 4
    scratch_bytes = (2 * TT2 * N1 + F2 * TT2 * odim + TT2 * odim_pad) * 4
    vmem_budget = int(min(64 * 1024 * 1024,
                          max(16 * 1024 * 1024,
                              2 * (weight_bytes + 2 * stream_bytes)
                              + scratch_bytes)))

    out = pl.pallas_call(
        _fused_subsample_kernel,
        out_shape=jax.ShapeDtypeStruct((B, T2p, odim_pad), jnp.float32),
        grid=(B, n_t),
        in_specs=[
            pl.BlockSpec((5, 1, TT2, K1a), lambda b, j: (0, b, j, 0)),   # xw
            # TODO(synk): the constant-index weights below would ideally be
            # single-buffered (pipeline_mode=pl.Buffered(1)); left at the
            # default for compatibility — they are small after the band fold.
            pl.BlockSpec((K1a, N1), lambda b, j: (0, 0)),                # w1c
            pl.BlockSpec((5, 5 * odim, odim), lambda b, j: (0, 0, 0)),   # w2k
            pl.BlockSpec((1, odim), lambda b, j: (0, 0)),                # b2d
            pl.BlockSpec((F2, odim, odim_pad), lambda b, j: (0, 0, 0)),  # wlp
            pl.BlockSpec((1, odim_pad), lambda b, j: (0, 0)),            # blp
            pl.BlockSpec((TT2, odim_pad), lambda b, j: (j, 0)),          # pe
        ],
        out_specs=pl.BlockSpec((1, TT2, odim_pad), lambda b, j: (b, j, 0)),
        compiler_params=pltpu.CompilerParams(
            dimension_semantics=("parallel", "parallel"),
            vmem_limit_bytes=vmem_budget),
    )(xw, prepped["w1c"], prepped["w2k"], prepped["b2d"],
      prepped["wlp"], prepped["blp"], pe)

    out = out[:, :T2, :odim]
    if x_mask is None:
        return out, None
    return out, x_mask[:, :, :-2:2][:, :, :-4:3]


# ----------------------------------------------------------------------------
# Plain-JAX f32 reference (mirrors the PyTorch module in eval mode)
# ----------------------------------------------------------------------------
def _reference_forward(x, params):
    odim = params["b1"].shape[0]
    h = x[:, None, :, :]                                        # NCHW, C=1
    h = jax.lax.conv_general_dilated(h, params["w1"], (2, 2), "VALID",
                                     dimension_numbers=("NCHW", "OIHW", "NCHW"))
    h = jax.nn.relu(h + params["b1"][None, :, None, None])
    h = jax.lax.conv_general_dilated(h, params["w2"], (3, 3), "VALID",
                                     dimension_numbers=("NCHW", "OIHW", "NCHW"))
    h = jax.nn.relu(h + params["b2"][None, :, None, None])
    b, c, t, f = h.shape
    h = jnp.transpose(h, (0, 2, 1, 3)).reshape(b, t, c * f)     # transpose(1,2).view
    h = h @ params["wl"].T + params["bl"]
    return h * math.sqrt(odim) + _sinusoidal_pe(t, odim)[None]


# ----------------------------------------------------------------------------
if __name__ == "__main__":
    B, T, idim, odim = 2, 64, 40, 32
    dropout_rate = 0.1  # unused (eval-mode dropout is identity)

    key = jax.random.PRNGKey(0)
    k_x, k1, k2, k3, k4, k5, k6 = jax.random.split(key, 7)

    x = jax.random.normal(k_x, (B, T, idim), jnp.float32)
    x_mask = jnp.ones((B, 1, T), dtype=bool)

    F2_out = ((idim - 1) // 2 - 2) // 3  # freq dim after both convs
    params = dict(
        w1=0.10 * jax.random.normal(k1, (odim, 1, 3, 3), jnp.float32),
        b1=0.10 * jax.random.normal(k2, (odim,), jnp.float32),
        w2=0.05 * jax.random.normal(k3, (odim, odim, 5, 5), jnp.float32),
        b2=0.10 * jax.random.normal(k4, (odim,), jnp.float32),
        wl=0.05 * jax.random.normal(k5, (odim, odim * F2_out), jnp.float32),
        bl=0.10 * jax.random.normal(k6, (odim,), jnp.float32),
    )

    prepped = prepare_conv2d_subsampling6_params(params, idim)
    y, y_mask = conv2d_subsampling6(x, x_mask, prepped)
    jax.block_until_ready(y)

    T1 = (T - 3) // 2 + 1
    T2 = (T1 - 5) // 3 + 1
    assert y.shape == (B, T2, odim), y.shape
    assert y_mask.shape == (B, 1, T2), y_mask.shape
    assert bool(jnp.all(jnp.isfinite(y)))

    # numerical check vs. plain-JAX f32 reference (kernel uses bf16 operands / f32 accum)
    y_ref = _reference_forward(x, params)
    err = float(jnp.max(jnp.abs(y - y_ref)))
    assert err < 0.15, f"max abs err vs reference: {err}"

    print("KERNEL_OK")
</pallas_src>

<mosaic_0001>
module attributes {stable_mosaic.version = 11 : i64} {
  func.func @_fused_subsample_kernel(%arg0: i32, %arg1: i32, %arg2: memref<5x1x16x121xbf16, #tpu.memory_space<vmem>>, %arg3: memref<121x608xbf16, #tpu.memory_space<vmem>>, %arg4: memref<5x160x32xbf16, #tpu.memory_space<vmem>>, %arg5: memref<1x32xf32, #tpu.memory_space<vmem>>, %arg6: memref<5x32x128xbf16, #tpu.memory_space<vmem>>, %arg7: memref<1x128xf32, #tpu.memory_space<vmem>>, %arg8: memref<16x128xf32, #tpu.memory_space<vmem>>, %arg9: memref<1x16x128xf32, #tpu.memory_space<vmem>>) attributes {dimension_semantics = [#tpu.dimension_semantics<parallel>, #tpu.dimension_semantics<parallel>], iteration_bounds = array<i64: 2, 1>, scalar_prefetch = 0 : i64, scratch_operands = 0 : i64, tpu.core_type = #tpu.core_type<tc>, window_params = [{transform_indices = @transform_0, window_bounds = array<i64: 5, 1, 16, 121>}, {pipeline_mode = #tpu.pipeline_mode<synchronous>, transform_indices = @transform_1, window_bounds = array<i64: 121, 608>}, {pipeline_mode = #tpu.pipeline_mode<synchronous>, transform_indices = @transform_2, window_bounds = array<i64: 5, 160, 32>}, {pipeline_mode = #tpu.pipeline_mode<synchronous>, transform_indices = @transform_3, window_bounds = array<i64: 1, 32>}, {pipeline_mode = #tpu.pipeline_mode<synchronous>, transform_indices = @transform_4, window_bounds = array<i64: 5, 32, 128>}, {pipeline_mode = #tpu.pipeline_mode<synchronous>, transform_indices = @transform_5, window_bounds = array<i64: 1, 128>}, {transform_indices = @transform_6, window_bounds = array<i64: 16, 128>}, {transform_indices = @transform_7, window_bounds = array<i64: 1, 16, 128>}]} {
    %c0 = arith.constant 0 : index
    %c0_0 = arith.constant 0 : index
    %0 = vector.load %arg3[%c0, %c0_0] : memref<121x608xbf16, #tpu.memory_space<vmem>>, vector<121x608xbf16>
    %c0_1 = arith.constant 0 : index
    %c0_2 = arith.constant 0 : index
    %1 = vector.load %arg5[%c0_1, %c0_2] : memref<1x32xf32, #tpu.memory_space<vmem>>, vector<1x32xf32>
    %cst = arith.constant 0.000000e+00 : f32
    %2 = vector.broadcast %cst : f32 to vector<16x32xf32>
    %cst_3 = arith.constant 0.000000e+00 : f32
    %3 = vector.broadcast %cst_3 : f32 to vector<16x32xf32>
    %cst_4 = arith.constant 0.000000e+00 : f32
    %4 = vector.broadcast %cst_4 : f32 to vector<16x32xf32>
    %cst_5 = arith.constant 0.000000e+00 : f32
    %5 = vector.broadcast %cst_5 : f32 to vector<16x32xf32>
    %cst_6 = arith.constant 0.000000e+00 : f32
    %6 = vector.broadcast %cst_6 : f32 to vector<16x32xf32>
    %c0_i32 = arith.constant 0 : i32
    %7 = arith.index_cast %c0_i32 : i32 to index
    %c0_7 = arith.constant 0 : index
    %c0_8 = arith.constant 0 : index
    %c0_9 = arith.constant 0 : index
    %8 = vector.load %arg2[%7, %c0_7, %c0_8, %c0_9] : memref<5x1x16x121xbf16, #tpu.memory_space<vmem>>, vector<1x1x16x121xbf16>
    %9 = vector.shape_cast %8 : vector<1x1x16x121xbf16> to vector<16x121xbf16>
    %cst_10 = arith.constant dense<0.000000e+00> : vector<16x608xf32>
    %10 = tpu.matmul %9, %0, %cst_10 {dimension_numbers = #tpu.dot_dimension_numbers<[1], [0], [0], [1], [0, 0, 1, 1], [], []>} : vector<16x121xbf16>, vector<121x608xbf16>, vector<16x608xf32> -> vector<16x608xf32>
    %cst_11 = arith.constant 0.000000e+00 : f32
    %11 = vector.broadcast %cst_11 : f32 to vector<16x608xf32>
    %12 = arith.maximumf %10, %11 : vector<16x608xf32>
    %13 = arith.truncf %12 : vector<16x608xf32> to vector<16x608xbf16>
    %14 = arith.index_cast %c0_i32 : i32 to index
    %c0_12 = arith.constant 0 : index
    %c0_13 = arith.constant 0 : index
    %15 = vector.load %arg4[%14, %c0_12, %c0_13] : memref<5x160x32xbf16, #tpu.memory_space<vmem>>, vector<1x160x32xbf16>
    %16 = vector.shape_cast %15 : vector<1x160x32xbf16> to vector<160x32xbf16>
    %17 = vector.extract_strided_slice %13 {offsets = [0, 0], sizes = [16, 160], strides = [1, 1]} : vector<16x608xbf16> to vector<16x160xbf16>
    %cst_14 = arith.constant dense<0.000000e+00> : vector<16x32xf32>
    %18 = tpu.matmul %17, %16, %cst_14 {dimension_numbers = #tpu.dot_dimension_numbers<[1], [0], [0], [1], [0, 0, 1, 1], [], []>} : vector<16x160xbf16>, vector<160x32xbf16>, vector<16x32xf32> -> vector<16x32xf32>
    %19 = arith.addf %2, %18 : vector<16x32xf32>
    %20 = vector.extract_strided_slice %13 {offsets = [0, 96], sizes = [16, 160], strides = [1, 1]} : vector<16x608xbf16> to vector<16x160xbf16>
    %cst_15 = arith.constant dense<0.000000e+00> : vector<16x32xf32>
    %21 = tpu.matmul %20, %16, %cst_15 {dimension_numbers = #tpu.dot_dimension_numbers<[1], [0], [0], [1], [0, 0, 1, 1], [], []>} : vector<16x160xbf16>, vector<160x32xbf16>, vector<16x32xf32> -> vector<16x32xf32>
    %22 = arith.addf %3, %21 : vector<16x32xf32>
    %23 = vector.extract_strided_slice %13 {offsets = [0, 192], sizes = [16, 160], strides = [1, 1]} : vector<16x608xbf16> to vector<16x160xbf16>
    %cst_16 = arith.constant dense<0.000000e+00> : vector<16x32xf32>
    %24 = tpu.matmul %23, %16, %cst_16 {dimension_numbers = #tpu.dot_dimension_numbers<[1], [0], [0], [1], [0, 0, 1, 1], [], []>} : vector<16x160xbf16>, vector<160x32xbf16>, vector<16x32xf32> -> vector<16x32xf32>
    %25 = arith.addf %4, %24 : vector<16x32xf32>
    %26 = vector.extract_strided_slice %13 {offsets = [0, 288], sizes = [16, 160], strides = [1, 1]} : vector<16x608xbf16> to vector<16x160xbf16>
    %cst_17 = arith.constant dense<0.000000e+00> : vector<16x32xf32>
    %27 = tpu.matmul %26, %16, %cst_17 {dimension_numbers = #tpu.dot_dimension_numbers<[1], [0], [0], [1], [0, 0, 1, 1], [], []>} : vector<16x160xbf16>, vector<160x32xbf16>, vector<16x32xf32> -> vector<16x32xf32>
    %28 = arith.addf %5, %27 : vector<16x32xf32>
    %29 = vector.extract_strided_slice %13 {offsets = [0, 384], sizes = [16, 160], strides = [1, 1]} : vector<16x608xbf16> to vector<16x160xbf16>
    %cst_18 = arith.constant dense<0.000000e+00> : vector<16x32xf32>
    %30 = tpu.matmul %29, %16, %cst_18 {dimension_numbers = #tpu.dot_dimension_numbers<[1], [0], [0], [1], [0, 0, 1, 1], [], []>} : vector<16x160xbf16>, vector<160x32xbf16>, vector<16x32xf32> -> vector<16x32xf32>
    %31 = arith.addf %6, %30 : vector<16x32xf32>
    %c1_i32 = arith.constant 1 : i32
    %32 = arith.index_cast %c1_i32 : i32 to index
    %c0_19 = arith.constant 0 : index
    %c0_20 = arith.constant 0 : index
    %c0_21 = arith.constant 0 : index
    %33 = vector.load %arg2[%32, %c0_19, %c0_20, %c0_21] : memref<5x1x16x121xbf16, #tpu.memory_space<vmem>>, vector<1x1x16x121xbf16>
    %34 = vector.shape_cast %33 : vector<1x1x16x121xbf16> to vector<16x121xbf16>
    %cst_22 = arith.constant dense<0.000000e+00> : vector<16x608xf32>
    %35 = tpu.matmul %34, %0, %cst_22 {dimension_numbers = #tpu.dot_dimension_numbers<[1], [0], [0], [1], [0, 0, 1, 1], [], []>} : vector<16x121xbf16>, vector<121x608xbf16>, vector<16x608xf32> -> vector<16x608xf32>
    %cst_23 = arith.constant 0.000000e+00 : f32
    %36 = vector.broadcast %cst_23 : f32 to vector<16x608xf32>
    %37 = arith.maximumf %35, %36 : vector<16x608xf32>
    %38 = arith.truncf %37 : vector<16x608xf32> to vector<16x608xbf16>
    %39 = arith.index_cast %c1_i32 : i32 to index
    %c0_24 = arith.constant 0 : index
    %c0_25 = arith.constant 0 : index
    %40 = vector.load %arg4[%39, %c0_24, %c0_25] : memref<5x160x32xbf16, #tpu.memory_space<vmem>>, vector<1x160x32xbf16>
    %41 = vector.shape_cast %40 : vector<1x160x32xbf16> to vector<160x32xbf16>
    %42 = vector.extract_strided_slice %38 {offsets = [0, 0], sizes = [16, 160], strides = [1, 1]} : vector<16x608xbf16> to vector<16x160xbf16>
    %cst_26 = arith.constant dense<0.000000e+00> : vector<16x32xf32>
    %43 = tpu.matmul %42, %41, %cst_26 {dimension_numbers = #tpu.dot_dimension_numbers<[1], [0], [0], [1], [0, 0, 1, 1], [], []>} : vector<16x160xbf16>, vector<160x32xbf16>, vector<16x32xf32> -> vector<16x32xf32>
    %44 = arith.addf %19, %43 : vector<16x32xf32>
    %45 = vector.extract_strided_slice %38 {offsets = [0, 96], sizes = [16, 160], strides = [1, 1]} : vector<16x608xbf16> to vector<16x160xbf16>
    %cst_27 = arith.constant dense<0.000000e+00> : vector<16x32xf32>
    %46 = tpu.matmul %45, %41, %cst_27 {dimension_numbers = #tpu.dot_dimension_numbers<[1], [0], [0], [1], [0, 0, 1, 1], [], []>} : vector<16x160xbf16>, vector<160x32xbf16>, vector<16x32xf32> -> vector<16x32xf32>
    %47 = arith.addf %22, %46 : vector<16x32xf32>
    %48 = vector.extract_strided_slice %38 {offsets = [0, 192], sizes = [16, 160], strides = [1, 1]} : vector<16x608xbf16> to vector<16x160xbf16>
    %cst_28 = arith.constant dense<0.000000e+00> : vector<16x32xf32>
    %49 = tpu.matmul %48, %41, %cst_28 {dimension_numbers = #tpu.dot_dimension_numbers<[1], [0], [0], [1], [0, 0, 1, 1], [], []>} : vector<16x160xbf16>, vector<160x32xbf16>, vector<16x32xf32> -> vector<16x32xf32>
    %50 = arith.addf %25, %49 : vector<16x32xf32>
    %51 = vector.extract_strided_slice %38 {offsets = [0, 288], sizes = [16, 160], strides = [1, 1]} : vector<16x608xbf16> to vector<16x160xbf16>
    %cst_29 = arith.constant dense<0.000000e+00> : vector<16x32xf32>
    %52 = tpu.matmul %51, %41, %cst_29 {dimension_numbers = #tpu.dot_dimension_numbers<[1], [0], [0], [1], [0, 0, 1, 1], [], []>} : vector<16x160xbf16>, vector<160x32xbf16>, vector<16x32xf32> -> vector<16x32xf32>
    %53 = arith.addf %28, %52 : vector<16x32xf32>
    %54 = vector.extract_strided_slice %38 {offsets = [0, 384], sizes = [16, 160], strides = [1, 1]} : vector<16x608xbf16> to vector<16x160xbf16>
    %cst_30 = arith.constant dense<0.000000e+00> : vector<16x32xf32>
    %55 = tpu.matmul %54, %41, %cst_30 {dimension_numbers = #tpu.dot_dimension_numbers<[1], [0], [0], [1], [0, 0, 1, 1], [], []>} : vector<16x160xbf16>, vector<160x32xbf16>, vector<16x32xf32> -> vector<16x32xf32>
    %56 = arith.addf %31, %55 : vector<16x32xf32>
    %c2_i32 = arith.constant 2 : i32
    %57 = arith.index_cast %c2_i32 : i32 to index
    %c0_31 = arith.constant 0 : index
    %c0_32 = arith.constant 0 : index
    %c0_33 = arith.constant 0 : index
    %58 = vector.load %arg2[%57, %c0_31, %c0_32, %c0_33] : memref<5x1x16x121xbf16, #tpu.memory_space<vmem>>, vector<1x1x16x121xbf16>
    %59 = vector.shape_cast %58 : vector<1x1x16x121xbf16> to vector<16x121xbf16>
    %cst_34 = arith.constant dense<0.000000e+00> : vector<16x608xf32>
    %60 = tpu.matmul %59, %0, %cst_34 {dimension_numbers = #tpu.dot_dimension_numbers<[1], [0], [0], [1], [0, 0, 1, 1], [], []>} : vector<16x121xbf16>, vector<121x608xbf16>, vector<16x608xf32> -> vector<16x608xf32>
    %cst_35 = arith.constant 0.000000e+00 : f32
    %61 = vector.broadcast %cst_35 : f32 to vector<16x608xf32>
    %62 = arith.maximumf %60, %61 : vector<16x608xf32>
    %63 = arith.truncf %62 : vector<16x608xf32> to vector<16x608xbf16>
    %64 = arith.index_cast %c2_i32 : i32 to index
    %c0_36 = arith.constant 0 : index
    %c0_37 = arith.constant 0 : index
    %65 = vector.load %arg4[%64, %c0_36, %c0_37] : memref<5x160x32xbf16, #tpu.memory_space<vmem>>, vector<1x160x32xbf16>
    %66 = vector.shape_cast %65 : vector<1x160x32xbf16> to vector<160x32xbf16>
    %67 = vector.extract_strided_slice %63 {offsets = [0, 0], sizes = [16, 160], strides = [1, 1]} : vector<16x608xbf16> to vector<16x160xbf16>
    %cst_38 = arith.constant dense<0.000000e+00> : vector<16x32xf32>
    %68 = tpu.matmul %67, %66, %cst_38 {dimension_numbers = #tpu.dot_dimension_numbers<[1], [0], [0], [1], [0, 0, 1, 1], [], []>} : vector<16x160xbf16>, vector<160x32xbf16>, vector<16x32xf32> -> vector<16x32xf32>
    %69 = arith.addf %44, %68 : vector<16x32xf32>
    %70 = vector.extract_strided_slice %63 {offsets = [0, 96], sizes = [16, 160], strides = [1, 1]} : vector<16x608xbf16> to vector<16x160xbf16>
    %cst_39 = arith.constant dense<0.000000e+00> : vector<16x32xf32>
    %71 = tpu.matmul %70, %66, %cst_39 {dimension_numbers = #tpu.dot_dimension_numbers<[1], [0], [0], [1], [0, 0, 1, 1], [], []>} : vector<16x160xbf16>, vector<160x32xbf16>, vector<16x32xf32> -> vector<16x32xf32>
    %72 = arith.addf %47, %71 : vector<16x32xf32>
    %73 = vector.extract_strided_slice %63 {offsets = [0, 192], sizes = [16, 160], strides = [1, 1]} : vector<16x608xbf16> to vector<16x160xbf16>
    %cst_40 = arith.constant dense<0.000000e+00> : vector<16x32xf32>
    %74 = tpu.matmul %73, %66, %cst_40 {dimension_numbers = #tpu.dot_dimension_numbers<[1], [0], [0], [1], [0, 0, 1, 1], [], []>} : vector<16x160xbf16>, vector<160x32xbf16>, vector<16x32xf32> -> vector<16x32xf32>
    %75 = arith.addf %50, %74 : vector<16x32xf32>
    %76 = vector.extract_strided_slice %63 {offsets = [0, 288], sizes = [16, 160], strides = [1, 1]} : vector<16x608xbf16> to vector<16x160xbf16>
    %cst_41 = arith.constant dense<0.000000e+00> : vector<16x32xf32>
    %77 = tpu.matmul %76, %66, %cst_41 {dimension_numbers = #tpu.dot_dimension_numbers<[1], [0], [0], [1], [0, 0, 1, 1], [], []>} : vector<16x160xbf16>, vector<160x32xbf16>, vector<16x32xf32> -> vector<16x32xf32>
    %78 = arith.addf %53, %77 : vector<16x32xf32>
    %79 = vector.extract_strided_slice %63 {offsets = [0, 384], sizes = [16, 160], strides = [1, 1]} : vector<16x608xbf16> to vector<16x160xbf16>
    %cst_42 = arith.constant dense<0.000000e+00> : vector<16x32xf32>
    %80 = tpu.matmul %79, %66, %cst_42 {dimension_numbers = #tpu.dot_dimension_numbers<[1], [0], [0], [1], [0, 0, 1, 1], [], []>} : vector<16x160xbf16>, vector<160x32xbf16>, vector<16x32xf32> -> vector<16x32xf32>
    %81 = arith.addf %56, %80 : vector<16x32xf32>
    %c3_i32 = arith.constant 3 : i32
    %82 = arith.index_cast %c3_i32 : i32 to index
    %c0_43 = arith.constant 0 : index
    %c0_44 = arith.constant 0 : index
    %c0_45 = arith.constant 0 : index
    %83 = vector.load %arg2[%82, %c0_43, %c0_44, %c0_45] : memref<5x1x16x121xbf16, #tpu.memory_space<vmem>>, vector<1x1x16x121xbf16>
    %84 = vector.shape_cast %83 : vector<1x1x16x121xbf16> to vector<16x121xbf16>
    %cst_46 = arith.constant dense<0.000000e+00> : vector<16x608xf32>
    %85 = tpu.matmul %84, %0, %cst_46 {dimension_numbers = #tpu.dot_dimension_numbers<[1], [0], [0], [1], [0, 0, 1, 1], [], []>} : vector<16x121xbf16>, vector<121x608xbf16>, vector<16x608xf32> -> vector<16x608xf32>
    %cst_47 = arith.constant 0.000000e+00 : f32
    %86 = vector.broadcast %cst_47 : f32 to vector<16x608xf32>
    %87 = arith.maximumf %85, %86 : vector<16x608xf32>
    %88 = arith.truncf %87 : vector<16x608xf32> to vector<16x608xbf16>
    %89 = arith.index_cast %c3_i32 : i32 to index
    %c0_48 = arith.constant 0 : index
    %c0_49 = arith.constant 0 : index
    %90 = vector.load %arg4[%89, %c0_48, %c0_49] : memref<5x160x32xbf16, #tpu.memory_space<vmem>>, vector<1x160x32xbf16>
    %91 = vector.shape_cast %90 : vector<1x160x32xbf16> to vector<160x32xbf16>
    %92 = vector.extract_strided_slice %88 {offsets = [0, 0], sizes = [16, 160], strides = [1, 1]} : vector<16x608xbf16> to vector<16x160xbf16>
    %cst_50 = arith.constant dense<0.000000e+00> : vector<16x32xf32>
    %93 = tpu.matmul %92, %91, %cst_50 {dimension_numbers = #tpu.dot_dimension_numbers<[1], [0], [0], [1], [0, 0, 1, 1], [], []>} : vector<16x160xbf16>, vector<160x32xbf16>, vector<16x32xf32> -> vector<16x32xf32>
    %94 = arith.addf %69, %93 : vector<16x32xf32>
    %95 = vector.extract_strided_slice %88 {offsets = [0, 96], sizes = [16, 160], strides = [1, 1]} : vector<16x608xbf16> to vector<16x160xbf16>
    %cst_51 = arith.constant dense<0.000000e+00> : vector<16x32xf32>
    %96 = tpu.matmul %95, %91, %cst_51 {dimension_numbers = #tpu.dot_dimension_numbers<[1], [0], [0], [1], [0, 0, 1, 1], [], []>} : vector<16x160xbf16>, vector<160x32xbf16>, vector<16x32xf32> -> vector<16x32xf32>
    %97 = arith.addf %72, %96 : vector<16x32xf32>
    %98 = vector.extract_strided_slice %88 {offsets = [0, 192], sizes = [16, 160], strides = [1, 1]} : vector<16x608xbf16> to vector<16x160xbf16>
    %cst_52 = arith.constant dense<0.000000e+00> : vector<16x32xf32>
    %99 = tpu.matmul %98, %91, %cst_52 {dimension_numbers = #tpu.dot_dimension_numbers<[1], [0], [0], [1], [0, 0, 1, 1], [], []>} : vector<16x160xbf16>, vector<160x32xbf16>, vector<16x32xf32> -> vector<16x32xf32>
    %100 = arith.addf %75, %99 : vector<16x32xf32>
    %101 = vector.extract_strided_slice %88 {offsets = [0, 288], sizes = [16, 160], strides = [1, 1]} : vector<16x608xbf16> to vector<16x160xbf16>
    %cst_53 = arith.constant dense<0.000000e+00> : vector<16x32xf32>
    %102 = tpu.matmul %101, %91, %cst_53 {dimension_numbers = #tpu.dot_dimension_numbers<[1], [0], [0], [1], [0, 0, 1, 1], [], []>} : vector<16x160xbf16>, vector<160x32xbf16>, vector<16x32xf32> -> vector<16x32xf32>
    %103 = arith.addf %78, %102 : vector<16x32xf32>
    %104 = vector.extract_strided_slice %88 {offsets = [0, 384], sizes = [16, 160], strides = [1, 1]} : vector<16x608xbf16> to vector<16x160xbf16>
    %cst_54 = arith.constant dense<0.000000e+00> : vector<16x32xf32>
    %105 = tpu.matmul %104, %91, %cst_54 {dimension_numbers = #tpu.dot_dimension_numbers<[1], [0], [0], [1], [0, 0, 1, 1], [], []>} : vector<16x160xbf16>, vector<160x32xbf16>, vector<16x32xf32> -> vector<16x32xf32>
    %106 = arith.addf %81, %105 : vector<16x32xf32>
    %c4_i32 = arith.constant 4 : i32
    %107 = arith.index_cast %c4_i32 : i32 to index
    %c0_55 = arith.constant 0 : index
    %c0_56 = arith.constant 0 : index
    %c0_57 = arith.constant 0 : index
    %108 = vector.load %arg2[%107, %c0_55, %c0_56, %c0_57] : memref<5x1x16x121xbf16, #tpu.memory_space<vmem>>, vector<1x1x16x121xbf16>
    %109 = vector.shape_cast %108 : vector<1x1x16x121xbf16> to vector<16x121xbf16>
    %cst_58 = arith.constant dense<0.000000e+00> : vector<16x608xf32>
    %110 = tpu.matmul %109, %0, %cst_58 {dimension_numbers = #tpu.dot_dimension_numbers<[1], [0], [0], [1], [0, 0, 1, 1], [], []>} : vector<16x121xbf16>, vector<121x608xbf16>, vector<16x608xf32> -> vector<16x608xf32>
    %cst_59 = arith.constant 0.000000e+00 : f32
    %111 = vector.broadcast %cst_59 : f32 to vector<16x608xf32>
    %112 = arith.maximumf %110, %111 : vector<16x608xf32>
    %113 = arith.truncf %112 : vector<16x608xf32> to vector<16x608xbf16>
    %114 = arith.index_cast %c4_i32 : i32 to index
    %c0_60 = arith.constant 0 : index
    %c0_61 = arith.constant 0 : index
    %115 = vector.load %arg4[%114, %c0_60, %c0_61] : memref<5x160x32xbf16, #tpu.memory_space<vmem>>, vector<1x160x32xbf16>
    %116 = vector.shape_cast %115 : vector<1x160x32xbf16> to vector<160x32xbf16>
    %117 = vector.extract_strided_slice %113 {offsets = [0, 0], sizes = [16, 160], strides = [1, 1]} : vector<16x608xbf16> to vector<16x160xbf16>
    %cst_62 = arith.constant dense<0.000000e+00> : vector<16x32xf32>
    %118 = tpu.matmul %117, %116, %cst_62 {dimension_numbers = #tpu.dot_dimension_numbers<[1], [0], [0], [1], [0, 0, 1, 1], [], []>} : vector<16x160xbf16>, vector<160x32xbf16>, vector<16x32xf32> -> vector<16x32xf32>
    %119 = arith.addf %94, %118 : vector<16x32xf32>
    %120 = vector.extract_strided_slice %113 {offsets = [0, 96], sizes = [16, 160], strides = [1, 1]} : vector<16x608xbf16> to vector<16x160xbf16>
    %cst_63 = arith.constant dense<0.000000e+00> : vector<16x32xf32>
    %121 = tpu.matmul %120, %116, %cst_63 {dimension_numbers = #tpu.dot_dimension_numbers<[1], [0], [0], [1], [0, 0, 1, 1], [], []>} : vector<16x160xbf16>, vector<160x32xbf16>, vector<16x32xf32> -> vector<16x32xf32>
    %122 = arith.addf %97, %121 : vector<16x32xf32>
    %123 = vector.extract_strided_slice %113 {offsets = [0, 192], sizes = [16, 160], strides = [1, 1]} : vector<16x608xbf16> to vector<16x160xbf16>
    %cst_64 = arith.constant dense<0.000000e+00> : vector<16x32xf32>
    %124 = tpu.matmul %123, %116, %cst_64 {dimension_numbers = #tpu.dot_dimension_numbers<[1], [0], [0], [1], [0, 0, 1, 1], [], []>} : vector<16x160xbf16>, vector<160x32xbf16>, vector<16x32xf32> -> vector<16x32xf32>
    %125 = arith.addf %100, %124 : vector<16x32xf32>
    %126 = vector.extract_strided_slice %113 {offsets = [0, 288], sizes = [16, 160], strides = [1, 1]} : vector<16x608xbf16> to vector<16x160xbf16>
    %cst_65 = arith.constant dense<0.000000e+00> : vector<16x32xf32>
    %127 = tpu.matmul %126, %116, %cst_65 {dimension_numbers = #tpu.dot_dimension_numbers<[1], [0], [0], [1], [0, 0, 1, 1], [], []>} : vector<16x160xbf16>, vector<160x32xbf16>, vector<16x32xf32> -> vector<16x32xf32>
    %128 = arith.addf %103, %127 : vector<16x32xf32>
    %129 = vector.extract_strided_slice %113 {offsets = [0, 384], sizes = [16, 160], strides = [1, 1]} : vector<16x608xbf16> to vector<16x160xbf16>
    %cst_66 = arith.constant dense<0.000000e+00> : vector<16x32xf32>
    %130 = tpu.matmul %129, %116, %cst_66 {dimension_numbers = #tpu.dot_dimension_numbers<[1], [0], [0], [1], [0, 0, 1, 1], [], []>} : vector<16x160xbf16>, vector<160x32xbf16>, vector<16x32xf32> -> vector<16x32xf32>
    %131 = arith.addf %106, %130 : vector<16x32xf32>
    %c5_i32 = arith.constant 5 : i32
    %cst_67 = arith.constant 0.000000e+00 : f32
    %132 = vector.broadcast %cst_67 : f32 to vector<16x128xf32>
    %133 = vector.broadcast %1 : vector<1x32xf32> to vector<16x32xf32>
    %134 = arith.addf %119, %133 : vector<16x32xf32>
    %cst_68 = arith.constant 0.000000e+00 : f32
    %135 = vector.broadcast %cst_68 : f32 to vector<16x32xf32>
    %136 = arith.maximumf %134, %135 : vector<16x32xf32>
    %137 = arith.truncf %136 : vector<16x32xf32> to vector<16x32xbf16>
    %c0_69 = arith.constant 0 : index
    %c0_70 = arith.constant 0 : index
    %c0_71 = arith.constant 0 : index
    %138 = vector.load %arg6[%c0_69, %c0_70, %c0_71] : memref<5x32x128xbf16, #tpu.memory_space<vmem>>, vector<1x32x128xbf16>
    %139 = vector.shape_cast %138 : vector<1x32x128xbf16> to vector<32x128xbf16>
    %cst_72 = arith.constant dense<0.000000e+00> : vector<16x128xf32>
    %140 = tpu.matmul %137, %139, %cst_72 {dimension_numbers = #tpu.dot_dimension_numbers<[1], [0], [0], [1], [0, 0, 1, 1], [], []>} : vector<16x32xbf16>, vector<32x128xbf16>, vector<16x128xf32> -> vector<16x128xf32>
    %141 = arith.addf %132, %140 : vector<16x128xf32>
    %142 = vector.broadcast %1 : vector<1x32xf32> to vector<16x32xf32>
    %143 = arith.addf %122, %142 : vector<16x32xf32>
    %cst_73 = arith.constant 0.000000e+00 : f32
    %144 = vector.broadcast %cst_73 : f32 to vector<16x32xf32>
    %145 = arith.maximumf %143, %144 : vector<16x32xf32>
    %146 = arith.truncf %145 : vector<16x32xf32> to vector<16x32xbf16>
    %c1 = arith.constant 1 : index
    %c0_74 = arith.constant 0 : index
    %c0_75 = arith.constant 0 : index
    %147 = vector.load %arg6[%c1, %c0_74, %c0_75] : memref<5x32x128xbf16, #tpu.memory_space<vmem>>, vector<1x32x128xbf16>
    %148 = vector.shape_cast %147 : vector<1x32x128xbf16> to vector<32x128xbf16>
    %cst_76 = arith.constant dense<0.000000e+00> : vector<16x128xf32>
    %149 = tpu.matmul %146, %148, %cst_76 {dimension_numbers = #tpu.dot_dimension_numbers<[1], [0], [0], [1], [0, 0, 1, 1], [], []>} : vector<16x32xbf16>, vector<32x128xbf16>, vector<16x128xf32> -> vector<16x128xf32>
    %150 = arith.addf %141, %149 : vector<16x128xf32>
    %151 = vector.broadcast %1 : vector<1x32xf32> to vector<16x32xf32>
    %152 = arith.addf %125, %151 : vector<16x32xf32>
    %cst_77 = arith.constant 0.000000e+00 : f32
    %153 = vector.broadcast %cst_77 : f32 to vector<16x32xf32>
    %154 = arith.maximumf %152, %153 : vector<16x32xf32>
    %155 = arith.truncf %154 : vector<16x32xf32> to vector<16x32xbf16>
    %c2 = arith.constant 2 : index
    %c0_78 = arith.constant 0 : index
    %c0_79 = arith.constant 0 : index
    %156 = vector.load %arg6[%c2, %c0_78, %c0_79] : memref<5x32x128xbf16, #tpu.memory_space<vmem>>, vector<1x32x128xbf16>
    %157 = vector.shape_cast %156 : vector<1x32x128xbf16> to vector<32x128xbf16>
    %cst_80 = arith.constant dense<0.000000e+00> : vector<16x128xf32>
    %158 = tpu.matmul %155, %157, %cst_80 {dimension_numbers = #tpu.dot_dimension_numbers<[1], [0], [0], [1], [0, 0, 1, 1], [], []>} : vector<16x32xbf16>, vector<32x128xbf16>, vector<16x128xf32> -> vector<16x128xf32>
    %159 = arith.addf %150, %158 : vector<16x128xf32>
    %160 = vector.broadcast %1 : vector<1x32xf32> to vector<16x32xf32>
    %161 = arith.addf %128, %160 : vector<16x32xf32>
    %cst_81 = arith.constant 0.000000e+00 : f32
    %162 = vector.broadcast %cst_81 : f32 to vector<16x32xf32>
    %163 = arith.maximumf %161, %162 : vector<16x32xf32>
    %164 = arith.truncf %163 : vector<16x32xf32> to vector<16x32xbf16>
    %c3 = arith.constant 3 : index
    %c0_82 = arith.constant 0 : index
    %c0_83 = arith.constant 0 : index
    %165 = vector.load %arg6[%c3, %c0_82, %c0_83] : memref<5x32x128xbf16, #tpu.memory_space<vmem>>, vector<1x32x128xbf16>
    %166 = vector.shape_cast %165 : vector<1x32x128xbf16> to vector<32x128xbf16>
    %cst_84 = arith.constant dense<0.000000e+00> : vector<16x128xf32>
    %167 = tpu.matmul %164, %166, %cst_84 {dimension_numbers = #tpu.dot_dimension_numbers<[1], [0], [0], [1], [0, 0, 1, 1], [], []>} : vector<16x32xbf16>, vector<32x128xbf16>, vector<16x128xf32> -> vector<16x128xf32>
    %168 = arith.addf %159, %167 : vector<16x128xf32>
    %169 = vector.broadcast %1 : vector<1x32xf32> to vector<16x32xf32>
    %170 = arith.addf %131, %169 : vector<16x32xf32>
    %cst_85 = arith.constant 0.000000e+00 : f32
    %171 = vector.broadcast %cst_85 : f32 to vector<16x32xf32>
    %172 = arith.maximumf %170, %171 : vector<16x32xf32>
    %173 = arith.truncf %172 : vector<16x32xf32> to vector<16x32xbf16>
    %c4 = arith.constant 4 : index
    %c0_86 = arith.constant 0 : index
    %c0_87 = arith.constant 0 : index
    %174 = vector.load %arg6[%c4, %c0_86, %c0_87] : memref<5x32x128xbf16, #tpu.memory_space<vmem>>, vector<1x32x128xbf16>
    %175 = vector.shape_cast %174 : vector<1x32x128xbf16> to vector<32x128xbf16>
    %cst_88 = arith.constant dense<0.000000e+00> : vector<16x128xf32>
    %176 = tpu.matmul %173, %175, %cst_88 {dimension_numbers = #tpu.dot_dimension_numbers<[1], [0], [0], [1], [0, 0, 1, 1], [], []>} : vector<16x32xbf16>, vector<32x128xbf16>, vector<16x128xf32> -> vector<16x128xf32>
    %177 = arith.addf %168, %176 : vector<16x128xf32>
    %c0_89 = arith.constant 0 : index
    %c0_90 = arith.constant 0 : index
    %178 = vector.load %arg7[%c0_89, %c0_90] : memref<1x128xf32, #tpu.memory_space<vmem>>, vector<1x128xf32>
    %179 = vector.broadcast %178 : vector<1x128xf32> to vector<16x128xf32>
    %180 = arith.addf %177, %179 : vector<16x128xf32>
    %c0_91 = arith.constant 0 : index
    %c0_92 = arith.constant 0 : index
    %181 = vector.load %arg8[%c0_91, %c0_92] : memref<16x128xf32, #tpu.memory_space<vmem>>, vector<16x128xf32>
    %182 = arith.addf %180, %181 : vector<16x128xf32>
    %c0_93 = arith.constant 0 : index
    %c0_94 = arith.constant 0 : index
    %c0_95 = arith.constant 0 : index
    %183 = vector.load %arg9[%c0_93, %c0_94, %c0_95] : memref<1x16x128xf32, #tpu.memory_space<vmem>>, vector<1x16x128xf32>
    %184 = vector.shape_cast %183 : vector<1x16x128xf32> to vector<16x128xf32>
    %185 = vector.shape_cast %182 : vector<16x128xf32> to vector<1x16x128xf32>
    tpu.vector_store %arg9[%c0_93, %c0_94, %c0_95], %185 {strides = array<i32>} : memref<1x16x128xf32, #tpu.memory_space<vmem>>, vector<1x16x128xf32>,
    return
  }
  func.func @transform_0(%arg0: i32, %arg1: i32) -> (i32, i32, i32, i32) {
    %c0_i32 = arith.constant 0 : i32
    %c0_i32_0 = arith.constant 0 : i32
    %c0_i32_1 = arith.constant 0 : i32
    return %c0_i32, %arg0, %arg1, %c0_i32_0 : i32, i32, i32, i32
  }
  func.func @transform_1(%arg0: i32, %arg1: i32) -> (i32, i32) {
    %c0_i32 = arith.constant 0 : i32
    %c0_i32_0 = arith.constant 0 : i32
    %c0_i32_1 = arith.constant 0 : i32
    return %c0_i32, %c0_i32_0 : i32, i32
  }
  func.func @transform_2(%arg0: i32, %arg1: i32) -> (i32, i32, i32) {
    %c0_i32 = arith.constant 0 : i32
    %c0_i32_0 = arith.constant 0 : i32
    %c0_i32_1 = arith.constant 0 : i32
    %c0_i32_2 = arith.constant 0 : i32
    return %c0_i32, %c0_i32_0, %c0_i32_1 : i32, i32, i32
  }
  func.func @transform_3(%arg0: i32, %arg1: i32) -> (i32, i32) {
    %c0_i32 = arith.constant 0 : i32
    %c0_i32_0 = arith.constant 0 : i32
    %c0_i32_1 = arith.constant 0 : i32
    return %c0_i32, %c0_i32_0 : i32, i32
  }
  func.func @transform_4(%arg0: i32, %arg1: i32) -> (i32, i32, i32) {
    %c0_i32 = arith.constant 0 : i32
    %c0_i32_0 = arith.constant 0 : i32
    %c0_i32_1 = arith.constant 0 : i32
    %c0_i32_2 = arith.constant 0 : i32
    return %c0_i32, %c0_i32_0, %c0_i32_1 : i32, i32, i32
  }
  func.func @transform_5(%arg0: i32, %arg1: i32) -> (i32, i32) {
    %c0_i32 = arith.constant 0 : i32
    %c0_i32_0 = arith.constant 0 : i32
    %c0_i32_1 = arith.constant 0 : i32
    return %c0_i32, %c0_i32_0 : i32, i32
  }
  func.func @transform_6(%arg0: i32, %arg1: i32) -> (i32, i32) {
    %c0_i32 = arith.constant 0 : i32
    %c0_i32_0 = arith.constant 0 : i32
    return %arg1, %c0_i32 : i32, i32
  }
  func.func @transform_7(%arg0: i32, %arg1: i32) -> (i32, i32, i32) {
    %c0_i32 = arith.constant 0 : i32
    %c0_i32_0 = arith.constant 0 : i32
    return %arg0, %arg1, %c0_i32 : i32, i32, i32
  }
}

</mosaic_0001>

<llo_original>
// kernel: tpu_custom_call.1
$region0: #{tpu_custom_call.1}
  #allocation0 [shape = 'u32[]', space=smem, size = 0x4, offset = 0x4, fixed_abs, tag = 'smem constant byte address 0x4 - core index']
  #allocation1 [shape = 'u32[144,128]{1,0:T(1,128)}', space=vmem, size = 0x12000, scoped, tag = 'internal scratch']
  %s0 = inlined_call_operand.vmem [shape: bf16[5,2,16,121], index: 0, kind: input, shape index: {}]
  %s1 = inlined_call_operand.vmem [shape: bf16[121,608], index: 1, kind: input, shape index: {}]
  %s2 = inlined_call_operand.vmem [shape: bf16[5,160,32], index: 2, kind: input, shape index: {}]
  %s3 = inlined_call_operand.vmem [shape: f32[1,32], index: 3, kind: input, shape index: {}]
  %s4 = inlined_call_operand.vmem [shape: bf16[5,32,128], index: 4, kind: input, shape index: {}]
  %s5 = inlined_call_operand.vmem [shape: f32[1,128], index: 5, kind: input, shape index: {}]
  %s6 = inlined_call_operand.vmem [shape: f32[16,128], index: 6, kind: input, shape index: {}]
  %s7 = inlined_call_operand.hbm [shape: f32[2,16,128], index: 7, kind: output, shape index: {}]
  %s8 = sld [smem:[#allocation0]]
  $region102: #{tpu_custom_call.1} parent=0
    _
  %s10 = ssub.s32 1, %s8
  %s11 = scalar_select 0, %s10, %s8
  $region1: #{tpu_custom_call.1} parent=0
    #allocation2 [shape = 'u8[40960]{0}', space=vmem, size = 0xa000, scoped, tag = 'input window, operand 0']
    #allocation3 [shape = 'u8[16384]{0}', space=vmem, size = 0x4000, scoped, tag = 'output window, operand 0']
    #allocation4 [shape = 's32[2]{0}', space=sflag, size = 0x8, scoped, tag = 'scoped memory for tpu_custom_call.1']
    %12 = vsyncpa [#allocation4], 0
    %s13 = scalar_lea.sflag [#allocation4], 1
    %14 = vsyncpa %s13, 0
    loop: start=0, step=1, limit=4
    $region2: #{tpu_custom_call.1} parent=1 // loop_pre_header
      _
    $region3: #{tpu_custom_call.1} parent=1 // loop_header
      %s16 = sphi 0, %s20
      %p17 = scmp.ge.s32.totalorder %s16, 4
      %s23 = sphi 0, %s35
      %s24 = sphi 0, %s31
      %s25 = sphi 0, %s23
      %s26 = sphi 0, %s24
      %s27 = sphi 0, %s25
      %s28 = sphi 0, %s26
      %s40 = sphi 0, %s42
      %s43 = sphi 0, %s40
      %s44 = sphi 0, %s43
      %s60 = sphi 0, %s44
      %s64 = sphi 0, %s64
      %s66 = sphi 0, %s64
      %s67 = sphi 0, %s66
      %s81 = sphi 0, %s67
      %s85 = sphi 0, %s85
      %s87 = sphi 0, %s85
      %s88 = sphi 0, %s87
      %s102 = sphi 0, %s88
      %s106 = sphi 0, %s106
      %s108 = sphi 0, %s106
      %s109 = sphi 0, %s108
      %s123 = sphi 0, %s109
      %s127 = sphi 0, %s127
      %s129 = sphi 0, %s127
      %s130 = sphi 0, %s129
      %s144 = sphi 0, %s130
      %s148 = sphi 0, %s148
      %s150 = sphi 0, %s148
      %s151 = sphi 0, %s150
      %s165 = sphi 0, %s151
      %s171 = sphi 0, %s173
      %s174 = sphi 0, %s171
      %s175 = sphi 0, %s174
      %s191 = sphi 0, %s175
      %s199 = sphi 0, %s201
      %s202 = sphi 0, %s199
      %s203 = sphi 0, %s202
      %s219 = sphi 0, %s203
    $region4: #{tpu_custom_call.1} parent=1 // loop_header_branch
      %19 = sbr.rel (%p17) target = $region8
    $region5: #{tpu_custom_call.1} parent=1 // loop_body
      %s21 = ssub.s32 %s16, 1
      %s22 = ssub.s32 %s16, 2
      %s29 = sadd.s32 1, %s24
      %p30 = scmp.ge.s32.totalorder %s29, 1
      %s31 = scalar_select %p30, 0, %s29
      %s32 = sadd.s32 1, %s23
      %s33 = scalar_select %p30, %s32, %s23
      %p34 = scmp.ge.s32.totalorder %s33, 2
      %s35 = scalar_select %p34, 0, %s33
      %s36 = ssub.s32 %s23, %s35
      %s37 = ssub.s32 %s24, %s31
      %s38 = sor.u32 %s36, %s37
      %p39 = scmp.eq.s32.totalorder %s38, 0
      %s41 = sadd.s32 %s40, 1
      %s42 = scalar_select %p39, %s40, %s41
      %p45 = pneg %p39
      %p46 = scmp.eq.s32.totalorder %s16, 1
      %p47 = por %p45, %p46
      %p48 = scmp.ne.s32.totalorder %s40, %s43
      %p49 = scmp.eq.s32.totalorder %s16, 0
      %p50 = por %p48, %p49
      %p51 = scmp.ne.s32.totalorder %s40, %s43
      %p52 = scmp.eq.s32.totalorder %s21, 1
      %p53 = por %p51, %p52
      %p54 = scmp.ne.s32.totalorder %s43, %s44
      %p55 = scmp.eq.s32.totalorder %s21, 0
      %p56 = por %p54, %p55
      %p57 = scmp.ne.s32.totalorder %s43, %s44
      %p58 = scmp.eq.s32.totalorder %s22, 1
      %p59 = por %p57, %p58
      %p61 = scmp.ne.s32.totalorder %s44, %s60
      %p62 = scmp.eq.s32.totalorder %s22, 0
      %p63 = por %p61, %p62
      %s65 = sadd.s32 %s64, 1
      %p68 = scmp.eq.s32.totalorder %s16, 1
      %p69 = scmp.ne.s32.totalorder %s64, %s66
      %p70 = scmp.eq.s32.totalorder %s16, 0
      %p71 = por %p69, %p70
      %p72 = scmp.ne.s32.totalorder %s64, %s66
      %p73 = scmp.eq.s32.totalorder %s21, 1
      %p74 = por %p72, %p73
      %p75 = scmp.ne.s32.totalorder %s66, %s67
      %p76 = scmp.eq.s32.totalorder %s21, 0
      %p77 = por %p75, %p76
      %p78 = scmp.ne.s32.totalorder %s66, %s67
      %p79 = scmp.eq.s32.totalorder %s22, 1
      %p80 = por %p78, %p79
      %p82 = scmp.ne.s32.totalorder %s67, %s81
      %p83 = scmp.eq.s32.totalorder %s22, 0
      %p84 = por %p82, %p83
      %s86 = sadd.s32 %s85, 1
      %p89 = scmp.eq.s32.totalorder %s16, 1
      %p90 = scmp.ne.s32.totalorder %s85, %s87
      %p91 = scmp.eq.s32.totalorder %s16, 0
      %p92 = por %p90, %p91
      %p93 = scmp.ne.s32.totalorder %s85, %s87
      %p94 = scmp.eq.s32.totalorder %s21, 1
      %p95 = por %p93, %p94
      %p96 = scmp.ne.s32.totalorder %s87, %s88
      %p97 = scmp.eq.s32.totalorder %s21, 0
      %p98 = por %p96, %p97
      %p99 = scmp.ne.s32.totalorder %s87, %s88
      %p100 = scmp.eq.s32.totalorder %s22, 1
      %p101 = por %p99, %p100
      %p103 = scmp.ne.s32.totalorder %s88, %s102
      %p104 = scmp.eq.s32.totalorder %s22, 0
      %p105 = por %p103, %p104
      %s107 = sadd.s32 %s106, 1
      %p110 = scmp.eq.s32.totalorder %s16, 1
      %p111 = scmp.ne.s32.totalorder %s106, %s108
      %p112 = scmp.eq.s32.totalorder %s16, 0
      %p113 = por %p111, %p112
      %p114 = scmp.ne.s32.totalorder %s106, %s108
      %p115 = scmp.eq.s32.totalorder %s21, 1
      %p116 = por %p114, %p115
      %p117 = scmp.ne.s32.totalorder %s108, %s109
      %p118 = scmp.eq.s32.totalorder %s21, 0
      %p119 = por %p117, %p118
      %p120 = scmp.ne.s32.totalorder %s108, %s109
      %p121 = scmp.eq.s32.totalorder %s22, 1
      %p122 = por %p120, %p121
      %p124 = scmp.ne.s32.totalorder %s109, %s123
      %p125 = scmp.eq.s32.totalorder %s22, 0
      %p126 = por %p124, %p125
      %s128 = sadd.s32 %s127, 1
      %p131 = scmp.eq.s32.totalorder %s16, 1
      %p132 = scmp.ne.s32.totalorder %s127, %s129
      %p133 = scmp.eq.s32.totalorder %s16, 0
      %p134 = por %p132, %p133
      %p135 = scmp.ne.s32.totalorder %s127, %s129
      %p136 = scmp.eq.s32.totalorder %s21, 1
      %p137 = por %p135, %p136
      %p138 = scmp.ne.s32.totalorder %s129, %s130
      %p139 = scmp.eq.s32.totalorder %s21, 0
      %p140 = por %p138, %p139
      %p141 = scmp.ne.s32.totalorder %s129, %s130
      %p142 = scmp.eq.s32.totalorder %s22, 1
      %p143 = por %p141, %p142
      %p145 = scmp.ne.s32.totalorder %s130, %s144
      %p146 = scmp.eq.s32.totalorder %s22, 0
      %p147 = por %p145, %p146
      %s149 = sadd.s32 %s148, 1
      %p152 = scmp.eq.s32.totalorder %s16, 1
      %p153 = scmp.ne.s32.totalorder %s148, %s150
      %p154 = scmp.eq.s32.totalorder %s16, 0
      %p155 = por %p153, %p154
      %p156 = scmp.ne.s32.totalorder %s148, %s150
      %p157 = scmp.eq.s32.totalorder %s21, 1
      %p158 = por %p156, %p157
      %p159 = scmp.ne.s32.totalorder %s150, %s151
      %p160 = scmp.eq.s32.totalorder %s21, 0
      %p161 = por %p159, %p160
      %p162 = scmp.ne.s32.totalorder %s150, %s151
      %p163 = scmp.eq.s32.totalorder %s22, 1
      %p164 = por %p162, %p163
      %p166 = scmp.ne.s32.totalorder %s151, %s165
      %p167 = scmp.eq.s32.totalorder %s22, 0
      %p168 = por %p166, %p167
      %s169 = ssub.s32 %s24, %s31
      %p170 = scmp.eq.s32.totalorder %s169, 0
      %s172 = sadd.s32 %s171, 1
      %s173 = scalar_select %p170, %s171, %s172
      %p176 = pneg %p170
      %p177 = scmp.eq.s32.totalorder %s16, 1
      %p178 = por %p176, %p177
      %p179 = scmp.ne.s32.totalorder %s171, %s174
      %p180 = scmp.eq.s32.totalorder %s16, 0
      %p181 = por %p179, %p180
      %p182 = scmp.ne.s32.totalorder %s171, %s174
      %p183 = scmp.eq.s32.totalorder %s21, 1
      %p184 = por %p182, %p183
      %p185 = scmp.ne.s32.totalorder %s174, %s175
      %p186 = scmp.eq.s32.totalorder %s21, 0
      %p187 = por %p185, %p186
      %p188 = scmp.ne.s32.totalorder %s174, %s175
      %p189 = scmp.eq.s32.totalorder %s22, 1
      %p190 = por %p188, %p189
      %p192 = scmp.ne.s32.totalorder %s175, %s191
      %p193 = scmp.eq.s32.totalorder %s22, 0
      %p194 = por %p192, %p193
      %s195 = ssub.s32 %s23, %s35
      %s196 = ssub.s32 %s24, %s31
      %s197 = sor.u32 %s195, %s196
      %p198 = scmp.eq.s32.totalorder %s197, 0
      %s200 = sadd.s32 %s199, 1
      %s201 = scalar_select %p198, %s199, %s200
      %p204 = pneg %p198
      %p205 = scmp.eq.s32.totalorder %s16, 1
      %p206 = por %p204, %p205
      %p207 = scmp.ne.s32.totalorder %s199, %s202
      %p208 = scmp.eq.s32.totalorder %s16, 0
      %p209 = por %p207, %p208
      %p210 = scmp.ne.s32.totalorder %s199, %s202
      %p211 = scmp.eq.s32.totalorder %s21, 1
      %p212 = por %p210, %p211
      %p213 = scmp.ne.s32.totalorder %s202, %s203
      %p214 = scmp.eq.s32.totalorder %s21, 0
      %p215 = por %p213, %p214
      %p216 = scmp.ne.s32.totalorder %s202, %s203
      %p217 = scmp.eq.s32.totalorder %s22, 1
      %p218 = por %p216, %p217
      %p220 = scmp.ne.s32.totalorder %s203, %s219
      %p221 = scmp.eq.s32.totalorder %s22, 0
      %p222 = por %p220, %p221
      %p223 = scmp.le.s32.totalorder 1, %s16
      %p224 = scmp.lt.s32.totalorder %s16, 3
      %p225 = pnand %p223, %p224
      %p226 = pneg %p225
      // Predicated region
      $region9: #{tpu_custom_call.1} parent=5 // pred_check
        _
      $region10: #{tpu_custom_call.1} parent=5 // pred_check_branch
        %228 = sbr.rel (%p225) target = $region12
      $region11: #{tpu_custom_call.1} parent=5 // pred_region
        %s229 = ssub.s32 %s16, 1
        // Predicated region
        $region13: #{tpu_custom_call.1} parent=11 // pred_check
          %p230 = pneg %p77
        $region14: #{tpu_custom_call.1} parent=11 // pred_check_branch
          %232 = sbr.rel (%p230) target = $region16
        $region15: #{tpu_custom_call.1} parent=11 // pred_region
          _
        $region16: #{tpu_custom_call.1} parent=11 // pred_fallthru
          _
        // Predicated region
        $region17: #{tpu_custom_call.1} parent=11 // pred_check
          %p233 = pneg %p98
        $region18: #{tpu_custom_call.1} parent=11 // pred_check_branch
          %235 = sbr.rel (%p233) target = $region20
        $region19: #{tpu_custom_call.1} parent=11 // pred_region
          _
        $region20: #{tpu_custom_call.1} parent=11 // pred_fallthru
          _
        // Predicated region
        $region21: #{tpu_custom_call.1} parent=11 // pred_check
          %p236 = pneg %p119
        $region22: #{tpu_custom_call.1} parent=11 // pred_check_branch
          %238 = sbr.rel (%p236) target = $region24
        $region23: #{tpu_custom_call.1} parent=11 // pred_region
          _
        $region24: #{tpu_custom_call.1} parent=11 // pred_fallthru
          _
        // Predicated region
        $region25: #{tpu_custom_call.1} parent=11 // pred_check
          %p239 = pneg %p140
        $region26: #{tpu_custom_call.1} parent=11 // pred_check_branch
          %241 = sbr.rel (%p239) target = $region28
        $region27: #{tpu_custom_call.1} parent=11 // pred_region
          _
        $region28: #{tpu_custom_call.1} parent=11 // pred_fallthru
          _
        // Predicated region
        $region29: #{tpu_custom_call.1} parent=11 // pred_check
          %p242 = pneg %p161
        $region30: #{tpu_custom_call.1} parent=11 // pred_check_branch
          %244 = sbr.rel (%p242) target = $region32
        $region31: #{tpu_custom_call.1} parent=11 // pred_region
          _
        $region32: #{tpu_custom_call.1} parent=11 // pred_fallthru
          _
        // Predicated region
        $region33: #{tpu_custom_call.1} parent=11 // pred_check
          %p245 = pneg %p187
        $region34: #{tpu_custom_call.1} parent=11 // pred_check_branch
          %247 = sbr.rel (%p245) target = $region36
        $region35: #{tpu_custom_call.1} parent=11 // pred_region
          %s248 = smul.u32 2, %s26
          %p249 = scmp.lt.s32.totalorder %s248, 1
          %s250 = scalar_select %p249, %s248, 1
          %s251 = smul.addr %s250, 8
          %s252 = scalar_lea.vmem %s6, %s251
          %s253 = smul.u32 2, %s26
        $region36: #{tpu_custom_call.1} parent=11 // pred_fallthru
          _
      $region12: #{tpu_custom_call.1} parent=5 // pred_fallthru
        _
      %p254 = scmp.lt.s32.totalorder %s16, 2
      // Predicated region
      $region37: #{tpu_custom_call.1} parent=5 // pred_check
        %p255 = pneg %p254
      $region38: #{tpu_custom_call.1} parent=5 // pred_check_branch
        %257 = sbr.rel (%p255) target = $region40
      $region39: #{tpu_custom_call.1} parent=5 // pred_region
        // Predicated region
        $region41: #{tpu_custom_call.1} parent=39 // pred_check
          %p258 = pneg %p50
        $region42: #{tpu_custom_call.1} parent=39 // pred_check_branch
          %260 = sbr.rel (%p258) target = $region44
        $region43: #{tpu_custom_call.1} parent=39 // pred_region
          %s261 = sand.u32 %s40, 1
          %s262 = sand.u32 %s40, 1
          %s263 = smul.addr %s262, 40
          %s264 = scalar_lea.vmem [#allocation2], %s263
          %s265 = smul.u32 2, %s24
          %s266 = smul.addr %s23, 2
          %s267 = sadd.s32 %s265, %s266
          %s268 = smul.addr %s267, 4
          %s269 = scalar_lea.vmem %s0, %s268
          // Predicated region
          $region45: #{tpu_custom_call.1} parent=43 // pred_check
            _
          $region46: #{tpu_custom_call.1} parent=43 // pred_check_branch
            %271 = sbr.rel (0) target = $region48
          $region47: #{tpu_custom_call.1} parent=43 // pred_region
            // Predicated region
            $region49: #{tpu_custom_call.1} parent=47 // pred_check
              _
            $region50: #{tpu_custom_call.1} parent=47 // pred_check_branch
              %273 = sbr.rel target = $region52
            $region51: #{tpu_custom_call.1} parent=47 // pred_region
              // Predicated region
              $region64: #{tpu_custom_call.1} parent=51 // pred_check
                _
              $region65: #{tpu_custom_call.1} parent=51 // pred_check_branch
                %307 = sbr.rel (0) target = $region67
              $region66: #{tpu_custom_call.1} parent=51 // pred_region
                loop: start=0, step=1, limit=1
                $region68: #{tpu_custom_call.1} parent=66 // loop_pre_header
                  _
                $region69: #{tpu_custom_call.1} parent=66 // loop_header
                  %s309 = sphi 0, %s313
                  %p310 = scmp.ge.s32.totalorder %s309, 1
                  %s314 = sphi %s269, %s269
                  %s315 = sphi %s264, %s264
                $region70: #{tpu_custom_call.1} parent=66 // loop_header_branch
                  %312 = sbr.rel (%p310) target = $region74
                $region71: #{tpu_custom_call.1} parent=66 // loop_body
                  _
                $region72: #{tpu_custom_call.1} parent=66 // loop_footer
                  %s313 = sadd.s32 1, %s309
                $region73: #{tpu_custom_call.1} parent=66 // loop_footer_branch
                  %308 = sbr.rel target = $region69
                $region74: #{tpu_custom_call.1} parent=66 // loop_exit
                  _
                %s317 = ssub.s32 16, 1
                loop: start=0, step=1, limit=1
                $region75: #{tpu_custom_call.1} parent=66 // loop_pre_header
                  _
                $region76: #{tpu_custom_call.1} parent=66 // loop_header
                  %s319 = sphi 0, %s323
                  %p320 = scmp.ge.s32.totalorder %s319, 1
                  %s324 = sphi %s269, %s269
                  %s325 = sphi %s264, %s264
                $region77: #{tpu_custom_call.1} parent=66 // loop_header_branch
                  %322 = sbr.rel (%p320) target = $region81
                $region78: #{tpu_custom_call.1} parent=66 // loop_body
                  %v326 = vld [vmem:[%s324] sm:%s317]
                  %327 = vst [vmem:[%s325] sm:%s317] %v326
                  %v328 = vld [vmem:[%s324 + $0x4] sm:%s317]
                  %329 = vst [vmem:[%s325 + $0x4] sm:%s317] %v328
                  %v330 = vld [vmem:[%s324 + $0x10] sm:%s317]
                  %331 = vst [vmem:[%s325 + $0x8] sm:%s317] %v330
                  %v332 = vld [vmem:[%s324 + $0x14] sm:%s317]
                  %333 = vst [vmem:[%s325 + $0xc] sm:%s317] %v332
                  %v334 = vld [vmem:[%s324 + $0x20] sm:%s317]
                  %335 = vst [vmem:[%s325 + $0x10] sm:%s317] %v334
                  %v336 = vld [vmem:[%s324 + $0x24] sm:%s317]
                  %337 = vst [vmem:[%s325 + $0x14] sm:%s317] %v336
                  %v338 = vld [vmem:[%s324 + $0x30] sm:%s317]
                  %339 = vst [vmem:[%s325 + $0x18] sm:%s317] %v338
                  %v340 = vld [vmem:[%s324 + $0x34] sm:%s317]
                  %341 = vst [vmem:[%s325 + $0x1c] sm:%s317] %v340
                  %v342 = vld [vmem:[%s324 + $0x40] sm:%s317]
                  %343 = vst [vmem:[%s325 + $0x20] sm:%s317] %v342
                  %v344 = vld [vmem:[%s324 + $0x44] sm:%s317]
                  %345 = vst [vmem:[%s325 + $0x24] sm:%s317] %v344
                $region79: #{tpu_custom_call.1} parent=66 // loop_footer
                  %s323 = sadd.s32 1, %s319
                $region80: #{tpu_custom_call.1} parent=66 // loop_footer_branch
                  %318 = sbr.rel target = $region76
                $region81: #{tpu_custom_call.1} parent=66 // loop_exit
                  _
              $region67: #{tpu_custom_call.1} parent=51 // pred_fallthru
                _
            $region52: #{tpu_custom_call.1} parent=47 // pred_fallthru
              _
            // Predicated region
            $region53: #{tpu_custom_call.1} parent=47 // pred_check
              _
            $region54: #{tpu_custom_call.1} parent=47 // pred_check_branch
              %275 = sbr.rel (0) target = $region56
            $region55: #{tpu_custom_call.1} parent=47 // pred_region
              %s277 = ssub.s32 16, 1
              loop: start=0, step=1, limit=1
              $region57: #{tpu_custom_call.1} parent=55 // loop_pre_header
                _
              $region58: #{tpu_custom_call.1} parent=55 // loop_header
                %s279 = sphi 0, %s283
                %p280 = scmp.ge.s32.totalorder %s279, 1
                %s284 = sphi %s269, %s269
                %s285 = sphi %s264, %s264
              $region59: #{tpu_custom_call.1} parent=55 // loop_header_branch
                %282 = sbr.rel (%p280) target = $region63
              $region60: #{tpu_custom_call.1} parent=55 // loop_body
                %v286 = vld [vmem:[%s284] sm:%s277]
                %287 = vst [vmem:[%s285] sm:%s277] %v286
                %v288 = vld [vmem:[%s284 + $0x4] sm:%s277]
                %289 = vst [vmem:[%s285 + $0x4] sm:%s277] %v288
                %v290 = vld [vmem:[%s284 + $0x10] sm:%s277]
                %291 = vst [vmem:[%s285 + $0x8] sm:%s277] %v290
                %v292 = vld [vmem:[%s284 + $0x14] sm:%s277]
                %293 = vst [vmem:[%s285 + $0xc] sm:%s277] %v292
                %v294 = vld [vmem:[%s284 + $0x20] sm:%s277]
                %295 = vst [vmem:[%s285 + $0x10] sm:%s277] %v294
                %v296 = vld [vmem:[%s284 + $0x24] sm:%s277]
                %297 = vst [vmem:[%s285 + $0x14] sm:%s277] %v296
                %v298 = vld [vmem:[%s284 + $0x30] sm:%s277]
                %299 = vst [vmem:[%s285 + $0x18] sm:%s277] %v298
                %v300 = vld [vmem:[%s284 + $0x34] sm:%s277]
                %301 = vst [vmem:[%s285 + $0x1c] sm:%s277] %v300
                %v302 = vld [vmem:[%s284 + $0x40] sm:%s277]
                %303 = vst [vmem:[%s285 + $0x20] sm:%s277] %v302
                %v304 = vld [vmem:[%s284 + $0x44] sm:%s277]
                %305 = vst [vmem:[%s285 + $0x24] sm:%s277] %v304
              $region61: #{tpu_custom_call.1} parent=55 // loop_footer
                %s283 = sadd.s32 1, %s279
              $region62: #{tpu_custom_call.1} parent=55 // loop_footer_branch
                %278 = sbr.rel target = $region58
              $region63: #{tpu_custom_call.1} parent=55 // loop_exit
                _
            $region56: #{tpu_custom_call.1} parent=47 // pred_fallthru
              _
          $region48: #{tpu_custom_call.1} parent=43 // pred_fallthru
            _
          %346 = vnop
        $region44: #{tpu_custom_call.1} parent=39 // pred_fallthru
          _
      $region40: #{tpu_custom_call.1} parent=5 // pred_fallthru
        _
      %p347 = scmp.le.s32.totalorder 1, %s16
      %p348 = scmp.lt.s32.totalorder %s16, 3
      %p349 = pnand %p347, %p348
      %p350 = pneg %p349
      // Predicated region
      $region82: #{tpu_custom_call.1} parent=5 // pred_check
        _
      $region83: #{tpu_custom_call.1} parent=5 // pred_check_branch
        %352 = sbr.rel (%p349) target = $region85
      $region84: #{tpu_custom_call.1} parent=5 // pred_region
        %s353 = ssub.s32 %s16, 1
        %s354 = sand.u32 %s43, 1
        %s355 = sand.u32 %s43, 1
        %s356 = smul.addr %s355, 40
        %s357 = scalar_lea.vmem [#allocation2], %s356
        // Predicated region
        $region86: #{tpu_custom_call.1} parent=84 // pred_check
          %p358 = pneg %p56
        $region87: #{tpu_custom_call.1} parent=84 // pred_check_branch
          %360 = sbr.rel (%p358) target = $region89
        $region88: #{tpu_custom_call.1} parent=84 // pred_region
          _
        $region89: #{tpu_custom_call.1} parent=84 // pred_fallthru
          _
        %s361 = sand.u32 %s43, 1
        %s362 = sand.u32 %s43, 1
        %s363 = smul.addr %s362, 40
        %s364 = scalar_lea.vmem [#allocation2], %s363
        %p365 = pneg %p56
        %p366 = pneg %p53
        %p367 = pneg %p77
        %p368 = pneg %p74
        %p369 = pneg %p98
        %p370 = pneg %p95
        %p371 = pneg %p119
        %p372 = pneg %p116
        %p373 = pneg %p140
        %p374 = pneg %p137
        %p375 = pneg %p161
        %p376 = pneg %p158
        %s377 = smul.u32 2, %s26
        %p378 = scmp.lt.s32.totalorder %s377, 1
        %s379 = scalar_select %p378, %s377, 1
        %s380 = smul.addr %s379, 8
        %s381 = scalar_lea.vmem %s6, %s380
        %p382 = pneg %p187
        %p383 = pneg %p184
        %p384 = pneg %p215
        %p385 = pneg %p212
        %s386 = sand.u32 %s202, 1
        %s387 = scalar_lea.sflag [#allocation4], %s386
        %s388 = sand.u32 %s202, 1
        %s389 = smul.addr %s388, 16
        %s390 = scalar_lea.vmem [#allocation3], %s389
        %s391 = smul.u32 2, %s26
        %s392 = smul.u32 2, %s26
        %p393 = scmp.lt.s32.totalorder %s392, 1
        %s394 = scalar_select %p393, %s392, 1
        %s395 = smul.addr %s394, 8
        %s396 = scalar_lea.vmem %s6, %s395
        %s397 = smul.u32 2, %s26
        %s398 = smul.u32 2, %s26
        %v400 = vld [vmem:[%s1] sm:$0xff]
        %v401 = vld [vmem:[%s1 + $0x8] sm:$0xff]
        %v402 = vld [vmem:[%s1 + $0x10] sm:$0xf]
        %v403 = vld [vmem:[%s1 + $0x14] sm:$0xff]
        %v404 = vld [vmem:[%s1 + $0x1c] sm:$0xff]
        %v405 = vld [vmem:[%s1 + $0x24] sm:$0xf]
        %v406 = vld [vmem:[%s1 + $0x28] sm:$0xff]
        %v407 = vld [vmem:[%s1 + $0x30] sm:$0xff]
        %v408 = vld [vmem:[%s1 + $0x38] sm:$0xf]
        %v409 = vld [vmem:[%s1 + $0x3c] sm:$0xff]
        %v410 = vld [vmem:[%s1 + $0x44] sm:$0xff]
        %v411 = vld [vmem:[%s1 + $0x4c] sm:$0xf]
        %v412 = vld [vmem:[%s1 + $0x50] sm:$0xff]
        %v413 = vld [vmem:[%s1 + $0x58] sm:$0xff]
        %v414 = vld [vmem:[%s1 + $0x60] sm:$0xf]
        %v415 = vld [vmem:[%s1 + $0x64] sm:$0xff]
        %v416 = vld [vmem:[%s1 + $0x6c] sm:$0xff]
        %v417 = vld [vmem:[%s1 + $0x74] sm:$0xf]
        %v418 = vld [vmem:[%s1 + $0x78] sm:$0xff]
        %v419 = vld [vmem:[%s1 + $0x80] sm:$0xff]
        %v420 = vld [vmem:[%s1 + $0x88] sm:$0xf]
        %v421 = vld [vmem:[%s1 + $0x8c] sm:$0xff]
        %v422 = vld [vmem:[%s1 + $0x94] sm:$0xff]
        %v423 = vld [vmem:[%s1 + $0x9c] sm:$0xf]
        %v424 = vld [vmem:[%s1 + $0xa0] sm:$0xff]
        %v425 = vld [vmem:[%s1 + $0xa8] sm:$0xff]
        %v426 = vld [vmem:[%s1 + $0xb0] sm:$0xf]
        %v427 = vld [vmem:[%s1 + $0xb4] sm:$0xff]
        %v428 = vld [vmem:[%s1 + $0xbc] sm:$0xff]
        %v429 = vld [vmem:[%s1 + $0xc4] sm:$0xf]
        %v430 = vld [vmem:[%s1 + $0xc8] sm:$0xff]
        %v431 = vld [vmem:[%s1 + $0xd0] sm:$0xff]
        %v432 = vld [vmem:[%s1 + $0xd8] sm:$0xf]
        %v433 = vld [vmem:[%s1 + $0xdc] sm:$0xff]
        %v434 = vld [vmem:[%s1 + $0xe4] sm:$0xff]
        %v435 = vld [vmem:[%s1 + $0xec] sm:$0xf]
        %v436 = vld [vmem:[%s1 + $0xf0] sm:$0xff]
        %v437 = vld [vmem:[%s1 + $0xf8] sm:$0xff]
        %v438 = vld [vmem:[%s1 + $0x100] sm:$0xf]
        %v439 = vld [vmem:[%s1 + $0x104] sm:$0xff]
        %v440 = vld [vmem:[%s1 + $0x10c] sm:$0xff]
        %v441 = vld [vmem:[%s1 + $0x114] sm:$0xf]
        %v442 = vld [vmem:[%s1 + $0x118] sm:$0xff]
        %v443 = vld [vmem:[%s1 + $0x120] sm:$0xff]
        %v444 = vld [vmem:[%s1 + $0x128] sm:$0xf]
        %v445 = vld [vmem:[%s1 + $0x12c] sm:$0x11]
        %v446 = vld [vmem:[%s1 + $0x134] sm:$0x11]
        %v447 = vld [vmem:[%s1 + $0x13c] sm:$0x1]
        %v448 = vld [vmem:[%s3] sm:$0x1]
        %v449 = vld [vmem:[%s357] sm:$0xf]
        %v450 = vld [vmem:[%s357 + $0x4] sm:$0xf]
        %v453 = vunpack.c.l.b16 %v449
        %v454 = vunpack.c.l.b16 %v450
        %v455 = vpack.c.b16 %v454, %v453
        %v504 = vunpack.c.l.b16 %v400
        %v505 = vunpack.c.h.b16 %v400
        %v506 = vunpack.c.l.b16 %v401
        %v507 = vunpack.c.h.b16 %v401
        %v508 = vunpack.c.l.b16 %v402
        %v509 = vunpack.c.l.b16 %v403
        %v510 = vunpack.c.h.b16 %v403
        %v511 = vunpack.c.l.b16 %v404
        %v512 = vunpack.c.h.b16 %v404
        %v513 = vunpack.c.l.b16 %v405
        %v514 = vunpack.c.l.b16 %v406
        %v515 = vunpack.c.h.b16 %v406
        %v516 = vunpack.c.l.b16 %v407
        %v517 = vunpack.c.h.b16 %v407
        %v518 = vunpack.c.l.b16 %v408
        %v519 = vunpack.c.l.b16 %v409
        %v520 = vunpack.c.h.b16 %v409
        %v521 = vunpack.c.l.b16 %v410
        %v522 = vunpack.c.h.b16 %v410
        %v523 = vunpack.c.l.b16 %v411
        %v524 = vunpack.c.l.b16 %v412
        %v525 = vunpack.c.h.b16 %v412
        %v526 = vunpack.c.l.b16 %v413
        %v527 = vunpack.c.h.b16 %v413
        %v528 = vunpack.c.l.b16 %v414
        %v529 = vunpack.c.l.b16 %v415
        %v530 = vunpack.c.h.b16 %v415
        %v531 = vunpack.c.l.b16 %v416
        %v532 = vunpack.c.h.b16 %v416
        %v533 = vunpack.c.l.b16 %v417
        %v534 = vunpack.c.l.b16 %v418
        %v535 = vunpack.c.h.b16 %v418
        %v536 = vunpack.c.l.b16 %v419
        %v537 = vunpack.c.h.b16 %v419
        %v538 = vunpack.c.l.b16 %v420
        %v539 = vunpack.c.l.b16 %v421
        %v540 = vunpack.c.h.b16 %v421
        %v541 = vunpack.c.l.b16 %v422
        %v542 = vunpack.c.h.b16 %v422
        %v543 = vunpack.c.l.b16 %v423
        %v544 = vunpack.c.l.b16 %v424
        %v545 = vunpack.c.h.b16 %v424
        %v546 = vunpack.c.l.b16 %v425
        %v547 = vunpack.c.h.b16 %v425
        %v548 = vunpack.c.l.b16 %v426
        %v549 = vunpack.c.l.b16 %v427
        %v550 = vunpack.c.h.b16 %v427
        %v551 = vunpack.c.l.b16 %v428
        %v552 = vunpack.c.h.b16 %v428
        %v553 = vunpack.c.l.b16 %v429
        %v554 = vunpack.c.l.b16 %v430
        %v555 = vunpack.c.h.b16 %v430
        %v556 = vunpack.c.l.b16 %v431
        %v557 = vunpack.c.h.b16 %v431
        %v558 = vunpack.c.l.b16 %v432
        %v559 = vunpack.c.l.b16 %v433
        %v560 = vunpack.c.h.b16 %v433
        %v561 = vunpack.c.l.b16 %v434
        %v562 = vunpack.c.h.b16 %v434
        %v563 = vunpack.c.l.b16 %v435
        %v564 = vunpack.c.l.b16 %v436
        %v565 = vunpack.c.h.b16 %v436
        %v566 = vunpack.c.l.b16 %v437
        %v567 = vunpack.c.h.b16 %v437
        %v568 = vunpack.c.l.b16 %v438
        %v569 = vunpack.c.l.b16 %v439
        %v570 = vunpack.c.h.b16 %v439
        %v571 = vunpack.c.l.b16 %v440
        %v572 = vunpack.c.h.b16 %v440
        %v573 = vunpack.c.l.b16 %v441
        %v574 = vunpack.c.l.b16 %v442
        %v575 = vunpack.c.h.b16 %v442
        %v576 = vunpack.c.l.b16 %v443
        %v577 = vunpack.c.h.b16 %v443
        %v578 = vunpack.c.l.b16 %v444
        %v579 = vunpack.c.l.b16 %v445
        %v580 = vunpack.c.h.b16 %v445
        %v581 = vunpack.c.l.b16 %v446
        %v582 = vunpack.c.h.b16 %v446
        %v583 = vunpack.c.l.b16 %v447
        %v584 = vpack.c.b16 %v509, %v504
        %v585 = vpack.c.b16 %v510, %v505
        %v586 = vpack.c.b16 %v511, %v506
        %v587 = vpack.c.b16 %v512, %v507
        %v588 = vpack.c.b16 %v513, %v508
        %v589 = vpack.c.b16 %v519, %v514
        %v590 = vpack.c.b16 %v520, %v515
        %v591 = vpack.c.b16 %v521, %v516
        %v592 = vpack.c.b16 %v522, %v517
        %v593 = vpack.c.b16 %v523, %v518
        %v594 = vpack.c.b16 %v529, %v524
        %v595 = vpack.c.b16 %v530, %v525
        %v596 = vpack.c.b16 %v531, %v526
        %v597 = vpack.c.b16 %v532, %v527
        %v598 = vpack.c.b16 %v533, %v528
        %v599 = vpack.c.b16 %v539, %v534
        %v600 = vpack.c.b16 %v540, %v535
        %v601 = vpack.c.b16 %v541, %v536
        %v602 = vpack.c.b16 %v542, %v537
        %v603 = vpack.c.b16 %v543, %v538
        %v604 = vpack.c.b16 %v549, %v544
        %v605 = vpack.c.b16 %v550, %v545
        %v606 = vpack.c.b16 %v551, %v546
        %v607 = vpack.c.b16 %v552, %v547
        %v608 = vpack.c.b16 %v553, %v548
        %v609 = vpack.c.b16 %v559, %v554
        %v610 = vpack.c.b16 %v560, %v555
        %v611 = vpack.c.b16 %v561, %v556
        %v612 = vpack.c.b16 %v562, %v557
        %v613 = vpack.c.b16 %v563, %v558
        %v614 = vpack.c.b16 %v569, %v564
        %v615 = vpack.c.b16 %v570, %v565
        %v616 = vpack.c.b16 %v571, %v566
        %v617 = vpack.c.b16 %v572, %v567
        %v618 = vpack.c.b16 %v573, %v568
        %v619 = vpack.c.b16 %v579, %v574
        %v620 = vpack.c.b16 %v580, %v575
        %v621 = vpack.c.b16 %v581, %v576
        %v622 = vpack.c.b16 %v582, %v577
        %v623 = vpack.c.b16 %v583, %v578
        %vm659 = vcmask 990208
        %v661 = vsel %vm659, %v455, 0
        %vm663 = vcmask 1043456
        %vm664 = vcmask 1044480
        %v665 = vsel %vm663, 4294967295, 65535
        %v666 = vsel %vm664, %v665, 0
        %v668 = vand.u32 %v619, %v666
        %v671 = vand.u32 %v620, %v666
        %v674 = vand.u32 %v621, %v666
        %v677 = vand.u32 %v622, %v666
        %v680 = vand.u32 %v623, %v666
        %682 = vmatprep.subr.bf16.mxu0 %v671
        %683 = vmatpush1.bf16.msra.mxu0 %v668
        %684 = vmatprep.subr.bf16.mxu0 %v615
        %685 = vmatpush1.bf16.msra.mxu0 %v614
        %686 = vmatprep.subr.bf16.mxu0 %v610
        %687 = vmatpush1.bf16.msra.mxu0 %v609
        %688 = vmatprep.subr.bf16.mxu0 %v605
        %689 = vmatpush1.bf16.msra.mxu0 %v604
        %690 = vmatprep.subr.bf16.mxu0 %v600
        %691 = vmatpush1.bf16.msra.mxu0 %v599
        %692 = vmatprep.subr.bf16.mxu0 %v595
        %693 = vmatpush1.bf16.msra.mxu0 %v594
        %694 = vmatprep.subr.bf16.mxu0 %v590
        %695 = vmatpush1.bf16.msra.mxu0 %v589
        %696 = vmatprep.subr.bf16.mxu0 %v585
        %697 = vmatpush1.bf16.msra.mxu0 %v584
        %698 = vmatprep.subr.bf16.mxu0 0
        %699 = vmatpush2.bf16.msra.mxu0 0
        %700 = vmatprep.subr.bf16.mxu0 0
        %701 = vmatpush2.bf16.msra.mxu0 0
        %702 = vmatprep.subr.bf16.mxu0 0
        %703 = vmatpush2.bf16.msra.mxu0 0
        %704 = vmatprep.subr.bf16.mxu0 0
        %705 = vmatpush2.bf16.msra.mxu0 0
        %706 = vmatprep.subr.bf16.mxu0 0
        %707 = vmatpush2.bf16.msra.mxu0 0
        %708 = vmatprep.subr.bf16.mxu0 0
        %709 = vmatpush2.bf16.msra.mxu0 0
        %710 = vmatprep.subr.bf16.mxu0 0
        %711 = vmatpush2.bf16.msra.mxu0 0
        %712 = vmatprep.subr.bf16.mxu0 0
        %713 = vmatpush2.bf16.msra.mxu0 0
        %714 = vmatprep.mubr.bf16.mxu0 0
        %715 = vmatmul.mubr.bf16.gmra.mxu0 %v661
        %v716 = vpop.f32.mrf.mxu0
        %v717 = vadd.f32 0.0, %v716
        %v718 = vpop.f32.mrf.mxu0
        %v719 = vadd.f32 0.0, %v718
        %v720 = vpop.f32.mrf.mxu0
        %v721 = vadd.f32 0.0, %v720
        %v722 = vpop.f32.mrf.mxu0
        %v723 = vadd.f32 0.0, %v722
        %724 = vdwg.mxu0
        %725 = vmatprep.subr.bf16.mxu0 %v677
        %726 = vmatpush1.bf16.msra.mxu0 %v674
        %727 = vmatprep.subr.bf16.mxu0 %v617
        %728 = vmatpush1.bf16.msra.mxu0 %v616
        %729 = vmatprep.subr.bf16.mxu0 %v612
        %730 = vmatpush1.bf16.msra.mxu0 %v611
        %731 = vmatprep.subr.bf16.mxu0 %v607
        %732 = vmatpush1.bf16.msra.mxu0 %v606
        %733 = vmatprep.subr.bf16.mxu0 %v602
        %734 = vmatpush1.bf16.msra.mxu0 %v601
        %735 = vmatprep.subr.bf16.mxu0 %v597
        %736 = vmatpush1.bf16.msra.mxu0 %v596
        %737 = vmatprep.subr.bf16.mxu0 %v592
        %738 = vmatpush1.bf16.msra.mxu0 %v591
        %739 = vmatprep.subr.bf16.mxu0 %v587
        %740 = vmatpush1.bf16.msra.mxu0 %v586
        %741 = vmatprep.subr.bf16.mxu0 0
        %742 = vmatpush2.bf16.msra.mxu0 0
        %743 = vmatprep.subr.bf16.mxu0 0
        %744 = vmatpush2.bf16.msra.mxu0 0
        %745 = vmatprep.subr.bf16.mxu0 0
        %746 = vmatpush2.bf16.msra.mxu0 0
        %747 = vmatprep.subr.bf16.mxu0 0
        %748 = vmatpush2.bf16.msra.mxu0 0
        %749 = vmatprep.subr.bf16.mxu0 0
        %750 = vmatpush2.bf16.msra.mxu0 0
        %751 = vmatprep.subr.bf16.mxu0 0
        %752 = vmatpush2.bf16.msra.mxu0 0
        %753 = vmatprep.subr.bf16.mxu0 0
        %754 = vmatpush2.bf16.msra.mxu0 0
        %755 = vmatprep.subr.bf16.mxu0 0
        %756 = vmatpush2.bf16.msra.mxu0 0
        %757 = vmatprep.mubr.bf16.mxu0 0
        %758 = vmatmul.mubr.bf16.gmra.mxu0 %v661
        %v759 = vpop.f32.mrf.mxu0
        %v760 = vadd.f32 0.0, %v759
        %v761 = vpop.f32.mrf.mxu0
        %v762 = vadd.f32 0.0, %v761
        %v763 = vpop.f32.mrf.mxu0
        %v764 = vadd.f32 0.0, %v763
        %v765 = vpop.f32.mrf.mxu0
        %v766 = vadd.f32 0.0, %v765
        %767 = vdwg.mxu0
        %768 = vmatprep.subr.bf16.mxu0 0
        %769 = vmatpush1.bf16.msra.mxu0 %v680
        %770 = vmatprep.subr.bf16.mxu0 0
        %771 = vmatpush1.bf16.msra.mxu0 %v618
        %772 = vmatprep.subr.bf16.mxu0 0
        %773 = vmatpush1.bf16.msra.mxu0 %v613
        %774 = vmatprep.subr.bf16.mxu0 0
        %775 = vmatpush1.bf16.msra.mxu0 %v608
        %776 = vmatprep.subr.bf16.mxu0 0
        %777 = vmatpush1.bf16.msra.mxu0 %v603
        %778 = vmatprep.subr.bf16.mxu0 0
        %779 = vmatpush1.bf16.msra.mxu0 %v598
        %780 = vmatprep.subr.bf16.mxu0 0
        %781 = vmatpush1.bf16.msra.mxu0 %v593
        %782 = vmatprep.subr.bf16.mxu0 0
        %783 = vmatpush1.bf16.msra.mxu0 %v588
        %784 = vmatprep.subr.bf16.mxu0 0
        %785 = vmatpush2.bf16.msra.mxu0 0
        %786 = vmatprep.subr.bf16.mxu0 0
        %787 = vmatpush2.bf16.msra.mxu0 0
        %788 = vmatprep.subr.bf16.mxu0 0
        %789 = vmatpush2.bf16.msra.mxu0 0
        %790 = vmatprep.subr.bf16.mxu0 0
        %791 = vmatpush2.bf16.msra.mxu0 0
        %792 = vmatprep.subr.bf16.mxu0 0
        %793 = vmatpush2.bf16.msra.mxu0 0
        %794 = vmatprep.subr.bf16.mxu0 0
        %795 = vmatpush2.bf16.msra.mxu0 0
        %796 = vmatprep.subr.bf16.mxu0 0
        %797 = vmatpush2.bf16.msra.mxu0 0
        %798 = vmatprep.subr.bf16.mxu0 0
        %799 = vmatpush2.bf16.msra.mxu0 0
        %800 = vmatprep.mubr.bf16.mxu0 0
        %801 = vmatmul.mubr.bf16.gmra.mxu0 %v661
        %v802 = vpop.f32.mrf.mxu0
        %v803 = vadd.f32 0.0, %v802
        %v804 = vpop.f32.mrf.mxu0
        %v805 = vpop.f32.mrf.mxu0
        %v806 = vadd.f32 0.0, %v805
        %v807 = vpop.f32.mrf.mxu0
        %808 = vdwg.mxu0
        %v809 = vmax.f32 %v717, 0.0
        %v810 = vmax.f32 %v719, 0.0
        %v811 = vmax.f32 %v760, 0.0
        %v812 = vmax.f32 %v762, 0.0
        %v813 = vmax.f32 %v803, 0.0
        %v814 = vmax.f32 %v721, 0.0
        %v815 = vmax.f32 %v723, 0.0
        %v816 = vmax.f32 %v764, 0.0
        %v817 = vmax.f32 %v766, 0.0
        %v818 = vmax.f32 %v806, 0.0
        %v819 = vpack.c.bf16 %v814, %v809
        %v820 = vpack.c.bf16 %v815, %v810
        %v821 = vpack.c.bf16 %v816, %v811
        %v822 = vpack.c.bf16 %v817, %v812
        %v823 = vpack.c.bf16 %v818, %v813
        %v824 = vld [vmem:[%s2] sm:$0xf]
        %v825 = vld [vmem:[%s2 + $0x4] sm:$0xf]
        %v826 = vld [vmem:[%s2 + $0x8] sm:$0xf]
        %v827 = vld [vmem:[%s2 + $0xc] sm:$0xf]
        %v828 = vld [vmem:[%s2 + $0x10] sm:$0xf]
        %v829 = vld [vmem:[%s2 + $0x14] sm:$0xf]
        %v830 = vld [vmem:[%s2 + $0x18] sm:$0xf]
        %v831 = vld [vmem:[%s2 + $0x1c] sm:$0xf]
        %v832 = vld [vmem:[%s2 + $0x20] sm:$0xf]
        %v833 = vld [vmem:[%s2 + $0x24] sm:$0xf]
        %v834 = vld [vmem:[%s2 + $0x28] sm:$0xf]
        %v835 = vld [vmem:[%s2 + $0x2c] sm:$0xf]
        %v836 = vld [vmem:[%s2 + $0x30] sm:$0xf]
        %v837 = vld [vmem:[%s2 + $0x34] sm:$0xf]
        %v838 = vld [vmem:[%s2 + $0x38] sm:$0xf]
        %v839 = vld [vmem:[%s2 + $0x3c] sm:$0xf]
        %v840 = vld [vmem:[%s2 + $0x40] sm:$0xf]
        %v841 = vld [vmem:[%s2 + $0x44] sm:$0xf]
        %v842 = vld [vmem:[%s2 + $0x48] sm:$0xf]
        %v843 = vld [vmem:[%s2 + $0x4c] sm:$0xf]
        %s844 = scalar_lea.vmem %s357, 8 [#allocation2]
        %v845 = vld [vmem:[%s844] sm:$0xf]
        %v846 = vld [vmem:[%s844 + $0x4] sm:$0xf]
        %v849 = vunpack.c.l.b16 %v845
        %v850 = vunpack.c.l.b16 %v846
        %v851 = vpack.c.b16 %v850, %v849
        %v853 = vsel %vm659, %v851, 0
        %855 = vmatprep.subr.bf16.mxu0 %v671
        %856 = vmatpush1.bf16.msra.mxu0 %v668
        %857 = vmatprep.subr.bf16.mxu0 %v615
        %858 = vmatpush1.bf16.msra.mxu0 %v614
        %859 = vmatprep.subr.bf16.mxu0 %v610
        %860 = vmatpush1.bf16.msra.mxu0 %v609
        %861 = vmatprep.subr.bf16.mxu0 %v605
        %862 = vmatpush1.bf16.msra.mxu0 %v604
        %863 = vmatprep.subr.bf16.mxu0 %v600
        %864 = vmatpush1.bf16.msra.mxu0 %v599
        %865 = vmatprep.subr.bf16.mxu0 %v595
        %866 = vmatpush1.bf16.msra.mxu0 %v594
        %867 = vmatprep.subr.bf16.mxu0 %v590
        %868 = vmatpush1.bf16.msra.mxu0 %v589
        %869 = vmatprep.subr.bf16.mxu0 %v585
        %870 = vmatpush1.bf16.msra.mxu0 %v584
        %871 = vmatprep.subr.bf16.mxu0 0
        %872 = vmatpush2.bf16.msra.mxu0 0
        %873 = vmatprep.subr.bf16.mxu0 0
        %874 = vmatpush2.bf16.msra.mxu0 0
        %875 = vmatprep.subr.bf16.mxu0 0
        %876 = vmatpush2.bf16.msra.mxu0 0
        %877 = vmatprep.subr.bf16.mxu0 0
        %878 = vmatpush2.bf16.msra.mxu0 0
        %879 = vmatprep.subr.bf16.mxu0 0
        %880 = vmatpush2.bf16.msra.mxu0 0
        %881 = vmatprep.subr.bf16.mxu0 0
        %882 = vmatpush2.bf16.msra.mxu0 0
        %883 = vmatprep.subr.bf16.mxu0 0
        %884 = vmatpush2.bf16.msra.mxu0 0
        %885 = vmatprep.subr.bf16.mxu0 0
        %886 = vmatpush2.bf16.msra.mxu0 0
        %887 = vmatprep.mubr.bf16.mxu0 0
        %888 = vmatmul.mubr.bf16.gmra.mxu0 %v853
        %v889 = vpop.f32.mrf.mxu0
        %v890 = vadd.f32 0.0, %v889
        %v891 = vpop.f32.mrf.mxu0
        %v892 = vadd.f32 0.0, %v891
        %v893 = vpop.f32.mrf.mxu0
        %v894 = vadd.f32 0.0, %v893
        %v895 = vpop.f32.mrf.mxu0
        %v896 = vadd.f32 0.0, %v895
        %897 = vdwg.mxu0
        %898 = vmatprep.subr.bf16.mxu0 %v677
        %899 = vmatpush1.bf16.msra.mxu0 %v674
        %900 = vmatprep.subr.bf16.mxu0 %v617
        %901 = vmatpush1.bf16.msra.mxu0 %v616
        %902 = vmatprep.subr.bf16.mxu0 %v612
        %903 = vmatpush1.bf16.msra.mxu0 %v611
        %904 = vmatprep.subr.bf16.mxu0 %v607
        %905 = vmatpush1.bf16.msra.mxu0 %v606
        %906 = vmatprep.subr.bf16.mxu0 %v602
        %907 = vmatpush1.bf16.msra.mxu0 %v601
        %908 = vmatprep.subr.bf16.mxu0 %v597
        %909 = vmatpush1.bf16.msra.mxu0 %v596
        %910 = vmatprep.subr.bf16.mxu0 %v592
        %911 = vmatpush1.bf16.msra.mxu0 %v591
        %912 = vmatprep.subr.bf16.mxu0 %v587
        %913 = vmatpush1.bf16.msra.mxu0 %v586
        %914 = vmatprep.subr.bf16.mxu0 0
        %915 = vmatpush2.bf16.msra.mxu0 0
        %916 = vmatprep.subr.bf16.mxu0 0
        %917 = vmatpush2.bf16.msra.mxu0 0
        %918 = vmatprep.subr.bf16.mxu0 0
        %919 = vmatpush2.bf16.msra.mxu0 0
        %920 = vmatprep.subr.bf16.mxu0 0
        %921 = vmatpush2.bf16.msra.mxu0 0
        %922 = vmatprep.subr.bf16.mxu0 0
        %923 = vmatpush2.bf16.msra.mxu0 0
        %924 = vmatprep.subr.bf16.mxu0 0
        %925 = vmatpush2.bf16.msra.mxu0 0
        %926 = vmatprep.subr.bf16.mxu0 0
        %927 = vmatpush2.bf16.msra.mxu0 0
        %928 = vmatprep.subr.bf16.mxu0 0
        %929 = vmatpush2.bf16.msra.mxu0 0
        %930 = vmatprep.mubr.bf16.mxu0 0
        %931 = vmatmul.mubr.bf16.gmra.mxu0 %v853
        %v932 = vpop.f32.mrf.mxu0
        %v933 = vadd.f32 0.0, %v932
        %v934 = vpop.f32.mrf.mxu0
        %v935 = vadd.f32 0.0, %v934
        %v936 = vpop.f32.mrf.mxu0
        %v937 = vadd.f32 0.0, %v936
        %v938 = vpop.f32.mrf.mxu0
        %v939 = vadd.f32 0.0, %v938
        %940 = vdwg.mxu0
        %941 = vmatprep.subr.bf16.mxu0 0
        %942 = vmatpush1.bf16.msra.mxu0 %v680
        %943 = vmatprep.subr.bf16.mxu0 0
        %944 = vmatpush1.bf16.msra.mxu0 %v618
        %945 = vmatprep.subr.bf16.mxu0 0
        %946 = vmatpush1.bf16.msra.mxu0 %v613
        %947 = vmatprep.subr.bf16.mxu0 0
        %948 = vmatpush1.bf16.msra.mxu0 %v608
        %949 = vmatprep.subr.bf16.mxu0 0
        %950 = vmatpush1.bf16.msra.mxu0 %v603
        %951 = vmatprep.subr.bf16.mxu0 0
        %952 = vmatpush1.bf16.msra.mxu0 %v598
        %953 = vmatprep.subr.bf16.mxu0 0
        %954 = vmatpush1.bf16.msra.mxu0 %v593
        %955 = vmatprep.subr.bf16.mxu0 0
        %956 = vmatpush1.bf16.msra.mxu0 %v588
        %957 = vmatprep.subr.bf16.mxu0 0
        %958 = vmatpush2.bf16.msra.mxu0 0
        %959 = vmatprep.subr.bf16.mxu0 0
        %960 = vmatpush2.bf16.msra.mxu0 0
        %961 = vmatprep.subr.bf16.mxu0 0
        %962 = vmatpush2.bf16.msra.mxu0 0
        %963 = vmatprep.subr.bf16.mxu0 0
        %964 = vmatpush2.bf16.msra.mxu0 0
        %965 = vmatprep.subr.bf16.mxu0 0
        %966 = vmatpush2.bf16.msra.mxu0 0
        %967 = vmatprep.subr.bf16.mxu0 0
        %968 = vmatpush2.bf16.msra.mxu0 0
        %969 = vmatprep.subr.bf16.mxu0 0
        %970 = vmatpush2.bf16.msra.mxu0 0
        %971 = vmatprep.subr.bf16.mxu0 0
        %972 = vmatpush2.bf16.msra.mxu0 0
        %973 = vmatprep.mubr.bf16.mxu0 0
        %974 = vmatmul.mubr.bf16.gmra.mxu0 %v853
        %v975 = vpop.f32.mrf.mxu0
        %v976 = vadd.f32 0.0, %v975
        %v977 = vpop.f32.mrf.mxu0
        %v978 = vpop.f32.mrf.mxu0
        %v979 = vadd.f32 0.0, %v978
        %v980 = vpop.f32.mrf.mxu0
        %981 = vdwg.mxu0
        %v982 = vmax.f32 %v890, 0.0
        %v983 = vmax.f32 %v892, 0.0
        %v984 = vmax.f32 %v933, 0.0
        %v985 = vmax.f32 %v935, 0.0
        %v986 = vmax.f32 %v976, 0.0
        %v987 = vmax.f32 %v894, 0.0
        %v988 = vmax.f32 %v896, 0.0
        %v989 = vmax.f32 %v937, 0.0
        %v990 = vmax.f32 %v939, 0.0
        %v991 = vmax.f32 %v979, 0.0
        %v992 = vpack.c.bf16 %v987, %v982
        %v993 = vpack.c.bf16 %v988, %v983
        %v994 = vpack.c.bf16 %v989, %v984
        %v995 = vpack.c.bf16 %v990, %v985
        %v996 = vpack.c.bf16 %v991, %v986
        %s997 = scalar_lea.vmem %s2, 80
        %v998 = vld [vmem:[%s997] sm:$0xf]
        %v999 = vld [vmem:[%s997 + $0x4] sm:$0xf]
        %v1000 = vld [vmem:[%s997 + $0x8] sm:$0xf]
        %v1001 = vld [vmem:[%s997 + $0xc] sm:$0xf]
        %v1002 = vld [vmem:[%s997 + $0x10] sm:$0xf]
        %v1003 = vld [vmem:[%s997 + $0x14] sm:$0xf]
        %v1004 = vld [vmem:[%s997 + $0x18] sm:$0xf]
        %v1005 = vld [vmem:[%s997 + $0x1c] sm:$0xf]
        %v1006 = vld [vmem:[%s997 + $0x20] sm:$0xf]
        %v1007 = vld [vmem:[%s997 + $0x24] sm:$0xf]
        %v1008 = vld [vmem:[%s997 + $0x28] sm:$0xf]
        %v1009 = vld [vmem:[%s997 + $0x2c] sm:$0xf]
        %v1010 = vld [vmem:[%s997 + $0x30] sm:$0xf]
        %v1011 = vld [vmem:[%s997 + $0x34] sm:$0xf]
        %v1012 = vld [vmem:[%s997 + $0x38] sm:$0xf]
        %v1013 = vld [vmem:[%s997 + $0x3c] sm:$0xf]
        %v1014 = vld [vmem:[%s997 + $0x40] sm:$0xf]
        %v1015 = vld [vmem:[%s997 + $0x44] sm:$0xf]
        %v1016 = vld [vmem:[%s997 + $0x48] sm:$0xf]
        %v1017 = vld [vmem:[%s997 + $0x4c] sm:$0xf]
        %v1038 = vunpack.c.l.b16 %v998
        %v1039 = vunpack.c.l.b16 %v999
        %v1040 = vunpack.c.l.b16 %v1000
        %v1041 = vunpack.c.l.b16 %v1001
        %v1042 = vunpack.c.l.b16 %v1002
        %v1043 = vunpack.c.l.b16 %v1003
        %v1044 = vunpack.c.l.b16 %v1004
        %v1045 = vunpack.c.l.b16 %v1005
        %v1046 = vunpack.c.l.b16 %v1006
        %v1047 = vunpack.c.l.b16 %v1007
        %v1048 = vunpack.c.l.b16 %v1008
        %v1049 = vunpack.c.l.b16 %v1009
        %v1050 = vunpack.c.l.b16 %v1010
        %v1051 = vunpack.c.l.b16 %v1011
        %v1052 = vunpack.c.l.b16 %v1012
        %v1053 = vunpack.c.l.b16 %v1013
        %v1054 = vunpack.c.l.b16 %v1014
        %v1055 = vunpack.c.l.b16 %v1015
        %v1056 = vunpack.c.l.b16 %v1016
        %v1057 = vunpack.c.l.b16 %v1017
        %v1058 = vpack.c.b16 %v1039, %v1038
        %v1059 = vpack.c.b16 %v1041, %v1040
        %v1060 = vpack.c.b16 %v1043, %v1042
        %v1061 = vpack.c.b16 %v1045, %v1044
        %v1062 = vpack.c.b16 %v1047, %v1046
        %v1063 = vpack.c.b16 %v1049, %v1048
        %v1064 = vpack.c.b16 %v1051, %v1050
        %v1065 = vpack.c.b16 %v1053, %v1052
        %v1066 = vpack.c.b16 %v1055, %v1054
        %v1067 = vpack.c.b16 %v1057, %v1056
        %vm1078 = vcmask 261120
        %v1080 = vsel %vm1078, %v993, 0
        %1082 = vmatprep.subr.bf16.mxu0 0
        %1083 = vmatpush1.bf16.msra.mxu0 %v1065
        %1084 = vmatprep.subr.bf16.mxu0 0
        %1085 = vmatpush1.bf16.msra.mxu0 %v1064
        %1086 = vmatprep.subr.bf16.mxu0 0
        %1087 = vmatpush1.bf16.msra.mxu0 %v1063
        %1088 = vmatprep.subr.bf16.mxu0 0
        %1089 = vmatpush1.bf16.msra.mxu0 %v1062
        %1090 = vmatprep.subr.bf16.mxu0 0
        %1091 = vmatpush1.bf16.msra.mxu0 %v1061
        %1092 = vmatprep.subr.bf16.mxu0 0
        %1093 = vmatpush1.bf16.msra.mxu0 %v1060
        %1094 = vmatprep.subr.bf16.mxu0 0
        %1095 = vmatpush1.bf16.msra.mxu0 %v1059
        %1096 = vmatprep.subr.bf16.mxu0 0
        %1097 = vmatpush1.bf16.msra.mxu0 %v1058
        %1098 = vmatprep.subr.bf16.mxu0 0
        %1099 = vmatpush2.bf16.msra.mxu0 0
        %1100 = vmatprep.subr.bf16.mxu0 0
        %1101 = vmatpush2.bf16.msra.mxu0 0
        %1102 = vmatprep.subr.bf16.mxu0 0
        %1103 = vmatpush2.bf16.msra.mxu0 0
        %1104 = vmatprep.subr.bf16.mxu0 0
        %1105 = vmatpush2.bf16.msra.mxu0 0
        %1106 = vmatprep.subr.bf16.mxu0 0
        %1107 = vmatpush2.bf16.msra.mxu0 0
        %1108 = vmatprep.subr.bf16.mxu0 0
        %1109 = vmatpush2.bf16.msra.mxu0 0
        %1110 = vmatprep.subr.bf16.mxu0 0
        %1111 = vmatpush2.bf16.msra.mxu0 %v1067
        %1112 = vmatprep.subr.bf16.mxu0 0
        %1113 = vmatpush2.bf16.msra.mxu0 %v1066
        %1114 = vmatprep.mubr.bf16.mxu0 %v1080
        %1115 = vmatmul.mubr.bf16.gmra.mxu0 %v992
        %v1116 = vpop.f32.mrf.mxu0
        %v1117 = vadd.f32 0.0, %v1116
        %v1118 = vpop.f32.mrf.mxu0
        %v1119 = vpop.f32.mrf.mxu0
        %v1120 = vadd.f32 0.0, %v1119
        %v1121 = vpop.f32.mrf.mxu0
        %1122 = vdwg.mxu0
        %v1143 = vunpack.c.l.b16 %v824
        %v1144 = vunpack.c.l.b16 %v825
        %v1145 = vunpack.c.l.b16 %v826
        %v1146 = vunpack.c.l.b16 %v827
        %v1147 = vunpack.c.l.b16 %v828
        %v1148 = vunpack.c.l.b16 %v829
        %v1149 = vunpack.c.l.b16 %v830
        %v1150 = vunpack.c.l.b16 %v831
        %v1151 = vunpack.c.l.b16 %v832
        %v1152 = vunpack.c.l.b16 %v833
        %v1153 = vunpack.c.l.b16 %v834
        %v1154 = vunpack.c.l.b16 %v835
        %v1155 = vunpack.c.l.b16 %v836
        %v1156 = vunpack.c.l.b16 %v837
        %v1157 = vunpack.c.l.b16 %v838
        %v1158 = vunpack.c.l.b16 %v839
        %v1159 = vunpack.c.l.b16 %v840
        %v1160 = vunpack.c.l.b16 %v841
        %v1161 = vunpack.c.l.b16 %v842
        %v1162 = vunpack.c.l.b16 %v843
        %v1163 = vpack.c.b16 %v1144, %v1143
        %v1164 = vpack.c.b16 %v1146, %v1145
        %v1165 = vpack.c.b16 %v1148, %v1147
        %v1166 = vpack.c.b16 %v1150, %v1149
        %v1167 = vpack.c.b16 %v1152, %v1151
        %v1168 = vpack.c.b16 %v1154, %v1153
        %v1169 = vpack.c.b16 %v1156, %v1155
        %v1170 = vpack.c.b16 %v1158, %v1157
        %v1171 = vpack.c.b16 %v1160, %v1159
        %v1172 = vpack.c.b16 %v1162, %v1161
        %v1184 = vsel %vm1078, %v820, 0
        %1186 = vmatprep.subr.bf16.mxu0 0
        %1187 = vmatpush1.bf16.msra.mxu0 %v1170
        %1188 = vmatprep.subr.bf16.mxu0 0
        %1189 = vmatpush1.bf16.msra.mxu0 %v1169
        %1190 = vmatprep.subr.bf16.mxu0 0
        %1191 = vmatpush1.bf16.msra.mxu0 %v1168
        %1192 = vmatprep.subr.bf16.mxu0 0
        %1193 = vmatpush1.bf16.msra.mxu0 %v1167
        %1194 = vmatprep.subr.bf16.mxu0 0
        %1195 = vmatpush1.bf16.msra.mxu0 %v1166
        %1196 = vmatprep.subr.bf16.mxu0 0
        %1197 = vmatpush1.bf16.msra.mxu0 %v1165
        %1198 = vmatprep.subr.bf16.mxu0 0
        %1199 = vmatpush1.bf16.msra.mxu0 %v1164
        %1200 = vmatprep.subr.bf16.mxu0 0
        %1201 = vmatpush1.bf16.msra.mxu0 %v1163
        %1202 = vmatprep.subr.bf16.mxu0 0
        %1203 = vmatpush2.bf16.msra.mxu0 0
        %1204 = vmatprep.subr.bf16.mxu0 0
        %1205 = vmatpush2.bf16.msra.mxu0 0
        %1206 = vmatprep.subr.bf16.mxu0 0
        %1207 = vmatpush2.bf16.msra.mxu0 0
        %1208 = vmatprep.subr.bf16.mxu0 0
        %1209 = vmatpush2.bf16.msra.mxu0 0
        %1210 = vmatprep.subr.bf16.mxu0 0
        %1211 = vmatpush2.bf16.msra.mxu0 0
        %1212 = vmatprep.subr.bf16.mxu0 0
        %1213 = vmatpush2.bf16.msra.mxu0 0
        %1214 = vmatprep.subr.bf16.mxu0 0
        %1215 = vmatpush2.bf16.msra.mxu0 %v1172
        %1216 = vmatprep.subr.bf16.mxu0 0
        %1217 = vmatpush2.bf16.msra.mxu0 %v1171
        %1218 = vmatprep.mubr.bf16.mxu0 %v1184
        %1219 = vmatmul.mubr.bf16.gmra.mxu0 %v819
        %v1220 = vpop.f32.mrf.mxu0
        %v1221 = vadd.f32 %v1117, %v1220
        %v1222 = vpop.f32.mrf.mxu0
        %v1223 = vpop.f32.mrf.mxu0
        %v1224 = vadd.f32 %v1120, %v1223
        %v1225 = vpop.f32.mrf.mxu0
        %1226 = vdwg.mxu0
        %1229 = vrot.lane.b32.xlu0 %v992, 32
        %v1230 = vpop.permute.xlu0 %1229
        %1231 = vrot.lane.b32.xlu0 %v993, 32
        %v1232 = vpop.permute.xlu0 %1231
        %vm1233 = vcmask 261120
        %v1234 = vsel %vm1233, %v1230, %v1232
        %v1237 = vsel %vm1078, %v1232, 0
        %1239 = vmatprep.subr.bf16.mxu0 0
        %1240 = vmatpush1.bf16.msra.mxu0 %v1065
        %1241 = vmatprep.subr.bf16.mxu0 0
        %1242 = vmatpush1.bf16.msra.mxu0 %v1064
        %1243 = vmatprep.subr.bf16.mxu0 0
        %1244 = vmatpush1.bf16.msra.mxu0 %v1063
        %1245 = vmatprep.subr.bf16.mxu0 0
        %1246 = vmatpush1.bf16.msra.mxu0 %v1062
        %1247 = vmatprep.subr.bf16.mxu0 0
        %1248 = vmatpush1.bf16.msra.mxu0 %v1061
        %1249 = vmatprep.subr.bf16.mxu0 0
        %1250 = vmatpush1.bf16.msra.mxu0 %v1060
        %1251 = vmatprep.subr.bf16.mxu0 0
        %1252 = vmatpush1.bf16.msra.mxu0 %v1059
        %1253 = vmatprep.subr.bf16.mxu0 0
        %1254 = vmatpush1.bf16.msra.mxu0 %v1058
        %1255 = vmatprep.subr.bf16.mxu0 0
        %1256 = vmatpush2.bf16.msra.mxu0 0
        %1257 = vmatprep.subr.bf16.mxu0 0
        %1258 = vmatpush2.bf16.msra.mxu0 0
        %1259 = vmatprep.subr.bf16.mxu0 0
        %1260 = vmatpush2.bf16.msra.mxu0 0
        %1261 = vmatprep.subr.bf16.mxu0 0
        %1262 = vmatpush2.bf16.msra.mxu0 0
        %1263 = vmatprep.subr.bf16.mxu0 0
        %1264 = vmatpush2.bf16.msra.mxu0 0
        %1265 = vmatprep.subr.bf16.mxu0 0
        %1266 = vmatpush2.bf16.msra.mxu0 0
        %1267 = vmatprep.subr.bf16.mxu0 0
        %1268 = vmatpush2.bf16.msra.mxu0 %v1067
        %1269 = vmatprep.subr.bf16.mxu0 0
        %1270 = vmatpush2.bf16.msra.mxu0 %v1066
        %1271 = vmatprep.mubr.bf16.mxu0 %v1237
        %1272 = vmatmul.mubr.bf16.gmra.mxu0 %v1234
        %v1273 = vpop.f32.mrf.mxu0
        %v1274 = vadd.f32 0.0, %v1273
        %v1275 = vpop.f32.mrf.mxu0
        %v1276 = vpop.f32.mrf.mxu0
        %v1277 = vadd.f32 0.0, %v1276
        %v1278 = vpop.f32.mrf.mxu0
        %1279 = vdwg.mxu0
        %1282 = vrot.lane.b32.xlu0 %v819, 32
        %v1283 = vpop.permute.xlu0 %1282
        %1284 = vrot.lane.b32.xlu0 %v820, 32
        %v1285 = vpop.permute.xlu0 %1284
        %v1286 = vsel %vm1233, %v1283, %v1285
        %v1289 = vsel %vm1078, %v1285, 0
        %1291 = vmatprep.subr.bf16.mxu0 0
        %1292 = vmatpush1.bf16.msra.mxu0 %v1170
        %1293 = vmatprep.subr.bf16.mxu0 0
        %1294 = vmatpush1.bf16.msra.mxu0 %v1169
        %1295 = vmatprep.subr.bf16.mxu0 0
        %1296 = vmatpush1.bf16.msra.mxu0 %v1168
        %1297 = vmatprep.subr.bf16.mxu0 0
        %1298 = vmatpush1.bf16.msra.mxu0 %v1167
        %1299 = vmatprep.subr.bf16.mxu0 0
        %1300 = vmatpush1.bf16.msra.mxu0 %v1166
        %1301 = vmatprep.subr.bf16.mxu0 0
        %1302 = vmatpush1.bf16.msra.mxu0 %v1165
        %1303 = vmatprep.subr.bf16.mxu0 0
        %1304 = vmatpush1.bf16.msra.mxu0 %v1164
        %1305 = vmatprep.subr.bf16.mxu0 0
        %1306 = vmatpush1.bf16.msra.mxu0 %v1163
        %1307 = vmatprep.subr.bf16.mxu0 0
        %1308 = vmatpush2.bf16.msra.mxu0 0
        %1309 = vmatprep.subr.bf16.mxu0 0
        %1310 = vmatpush2.bf16.msra.mxu0 0
        %1311 = vmatprep.subr.bf16.mxu0 0
        %1312 = vmatpush2.bf16.msra.mxu0 0
        %1313 = vmatprep.subr.bf16.mxu0 0
        %1314 = vmatpush2.bf16.msra.mxu0 0
        %1315 = vmatprep.subr.bf16.mxu0 0
        %1316 = vmatpush2.bf16.msra.mxu0 0
        %1317 = vmatprep.subr.bf16.mxu0 0
        %1318 = vmatpush2.bf16.msra.mxu0 0
        %1319 = vmatprep.subr.bf16.mxu0 0
        %1320 = vmatpush2.bf16.msra.mxu0 %v1172
        %1321 = vmatprep.subr.bf16.mxu0 0
        %1322 = vmatpush2.bf16.msra.mxu0 %v1171
        %1323 = vmatprep.mubr.bf16.mxu0 %v1289
        %1324 = vmatmul.mubr.bf16.gmra.mxu0 %v1286
        %v1325 = vpop.f32.mrf.mxu0
        %v1326 = vadd.f32 %v1274, %v1325
        %v1327 = vpop.f32.mrf.mxu0
        %v1328 = vpop.f32.mrf.mxu0
        %v1329 = vadd.f32 %v1277, %v1328
        %v1330 = vpop.f32.mrf.mxu0
        %1331 = vdwg.mxu0
        %1333 = vrot.lane.b32.xlu0 %v993, 64
        %v1334 = vpop.permute.xlu0 %1333
        %1335 = vrot.lane.b32.xlu0 %v994, 64
        %v1336 = vpop.permute.xlu0 %1335
        %vm1337 = vcmask 523264
        %v1338 = vsel %vm1337, %v1334, %v1336
        %v1341 = vsel %vm1078, %v1336, 0
        %1343 = vmatprep.subr.bf16.mxu0 0
        %1344 = vmatpush1.bf16.msra.mxu0 %v1065
        %1345 = vmatprep.subr.bf16.mxu0 0
        %1346 = vmatpush1.bf16.msra.mxu0 %v1064
        %1347 = vmatprep.subr.bf16.mxu0 0
        %1348 = vmatpush1.bf16.msra.mxu0 %v1063
        %1349 = vmatprep.subr.bf16.mxu0 0
        %1350 = vmatpush1.bf16.msra.mxu0 %v1062
        %1351 = vmatprep.subr.bf16.mxu0 0
        %1352 = vmatpush1.bf16.msra.mxu0 %v1061
        %1353 = vmatprep.subr.bf16.mxu0 0
        %1354 = vmatpush1.bf16.msra.mxu0 %v1060
        %1355 = vmatprep.subr.bf16.mxu0 0
        %1356 = vmatpush1.bf16.msra.mxu0 %v1059
        %1357 = vmatprep.subr.bf16.mxu0 0
        %1358 = vmatpush1.bf16.msra.mxu0 %v1058
        %1359 = vmatprep.subr.bf16.mxu0 0
        %1360 = vmatpush2.bf16.msra.mxu0 0
        %1361 = vmatprep.subr.bf16.mxu0 0
        %1362 = vmatpush2.bf16.msra.mxu0 0
        %1363 = vmatprep.subr.bf16.mxu0 0
        %1364 = vmatpush2.bf16.msra.mxu0 0
        %1365 = vmatprep.subr.bf16.mxu0 0
        %1366 = vmatpush2.bf16.msra.mxu0 0
        %1367 = vmatprep.subr.bf16.mxu0 0
        %1368 = vmatpush2.bf16.msra.mxu0 0
        %1369 = vmatprep.subr.bf16.mxu0 0
        %1370 = vmatpush2.bf16.msra.mxu0 0
        %1371 = vmatprep.subr.bf16.mxu0 0
        %1372 = vmatpush2.bf16.msra.mxu0 %v1067
        %1373 = vmatprep.subr.bf16.mxu0 0
        %1374 = vmatpush2.bf16.msra.mxu0 %v1066
        %1375 = vmatprep.mubr.bf16.mxu0 %v1341
        %1376 = vmatmul.mubr.bf16.gmra.mxu0 %v1338
        %v1377 = vpop.f32.mrf.mxu0
        %v1378 = vadd.f32 0.0, %v1377
        %v1379 = vpop.f32.mrf.mxu0
        %v1380 = vpop.f32.mrf.mxu0
        %v1381 = vadd.f32 0.0, %v1380
        %v1382 = vpop.f32.mrf.mxu0
        %1383 = vdwg.mxu0
        %1385 = vrot.lane.b32.xlu0 %v820, 64
        %v1386 = vpop.permute.xlu0 %1385
        %1387 = vrot.lane.b32.xlu0 %v821, 64
        %v1388 = vpop.permute.xlu0 %1387
        %v1389 = vsel %vm1337, %v1386, %v1388
        %v1392 = vsel %vm1078, %v1388, 0
        %1394 = vmatprep.subr.bf16.mxu0 0
        %1395 = vmatpush1.bf16.msra.mxu0 %v1170
        %1396 = vmatprep.subr.bf16.mxu0 0
        %1397 = vmatpush1.bf16.msra.mxu0 %v1169
        %1398 = vmatprep.subr.bf16.mxu0 0
        %1399 = vmatpush1.bf16.msra.mxu0 %v1168
        %1400 = vmatprep.subr.bf16.mxu0 0
        %1401 = vmatpush1.bf16.msra.mxu0 %v1167
        %1402 = vmatprep.subr.bf16.mxu0 0
        %1403 = vmatpush1.bf16.msra.mxu0 %v1166
        %1404 = vmatprep.subr.bf16.mxu0 0
        %1405 = vmatpush1.bf16.msra.mxu0 %v1165
        %1406 = vmatprep.subr.bf16.mxu0 0
        %1407 = vmatpush1.bf16.msra.mxu0 %v1164
        %1408 = vmatprep.subr.bf16.mxu0 0
        %1409 = vmatpush1.bf16.msra.mxu0 %v1163
        %1410 = vmatprep.subr.bf16.mxu0 0
        %1411 = vmatpush2.bf16.msra.mxu0 0
        %1412 = vmatprep.subr.bf16.mxu0 0
        %1413 = vmatpush2.bf16.msra.mxu0 0
        %1414 = vmatprep.subr.bf16.mxu0 0
        %1415 = vmatpush2.bf16.msra.mxu0 0
        %1416 = vmatprep.subr.bf16.mxu0 0
        %1417 = vmatpush2.bf16.msra.mxu0 0
        %1418 = vmatprep.subr.bf16.mxu0 0
        %1419 = vmatpush2.bf16.msra.mxu0 0
        %1420 = vmatprep.subr.bf16.mxu0 0
        %1421 = vmatpush2.bf16.msra.mxu0 0
        %1422 = vmatprep.subr.bf16.mxu0 0
        %1423 = vmatpush2.bf16.msra.mxu0 %v1172
        %1424 = vmatprep.subr.bf16.mxu0 0
        %1425 = vmatpush2.bf16.msra.mxu0 %v1171
        %1426 = vmatprep.mubr.bf16.mxu0 %v1392
        %1427 = vmatmul.mubr.bf16.gmra.mxu0 %v1389
        %v1428 = vpop.f32.mrf.mxu0
        %v1429 = vadd.f32 %v1378, %v1428
        %v1430 = vpop.f32.mrf.mxu0
        %v1431 = vpop.f32.mrf.mxu0
        %v1432 = vadd.f32 %v1381, %v1431
        %v1433 = vpop.f32.mrf.mxu0
        %1434 = vdwg.mxu0
        %1436 = vrot.lane.b32.xlu0 %v994, 96
        %v1437 = vpop.permute.xlu0 %1436
        %1438 = vrot.lane.b32.xlu0 %v995, 96
        %v1439 = vpop.permute.xlu0 %1438
        %vm1440 = vcmask 785408
        %v1441 = vsel %vm1440, %v1437, %v1439
        %v1444 = vsel %vm1078, %v1439, 0
        %1446 = vmatprep.subr.bf16.mxu0 0
        %1447 = vmatpush1.bf16.msra.mxu0 %v1065
        %1448 = vmatprep.subr.bf16.mxu0 0
        %1449 = vmatpush1.bf16.msra.mxu0 %v1064
        %1450 = vmatprep.subr.bf16.mxu0 0
        %1451 = vmatpush1.bf16.msra.mxu0 %v1063
        %1452 = vmatprep.subr.bf16.mxu0 0
        %1453 = vmatpush1.bf16.msra.mxu0 %v1062
        %1454 = vmatprep.subr.bf16.mxu0 0
        %1455 = vmatpush1.bf16.msra.mxu0 %v1061
        %1456 = vmatprep.subr.bf16.mxu0 0
        %1457 = vmatpush1.bf16.msra.mxu0 %v1060
        %1458 = vmatprep.subr.bf16.mxu0 0
        %1459 = vmatpush1.bf16.msra.mxu0 %v1059
        %1460 = vmatprep.subr.bf16.mxu0 0
        %1461 = vmatpush1.bf16.msra.mxu0 %v1058
        %1462 = vmatprep.subr.bf16.mxu0 0
        %1463 = vmatpush2.bf16.msra.mxu0 0
        %1464 = vmatprep.subr.bf16.mxu0 0
        %1465 = vmatpush2.bf16.msra.mxu0 0
        %1466 = vmatprep.subr.bf16.mxu0 0
        %1467 = vmatpush2.bf16.msra.mxu0 0
        %1468 = vmatprep.subr.bf16.mxu0 0
        %1469 = vmatpush2.bf16.msra.mxu0 0
        %1470 = vmatprep.subr.bf16.mxu0 0
        %1471 = vmatpush2.bf16.msra.mxu0 0
        %1472 = vmatprep.subr.bf16.mxu0 0
        %1473 = vmatpush2.bf16.msra.mxu0 0
        %1474 = vmatprep.subr.bf16.mxu0 0
        %1475 = vmatpush2.bf16.msra.mxu0 %v1067
        %1476 = vmatprep.subr.bf16.mxu0 0
        %1477 = vmatpush2.bf16.msra.mxu0 %v1066
        %1478 = vmatprep.mubr.bf16.mxu0 %v1444
        %1479 = vmatmul.mubr.bf16.gmra.mxu0 %v1441
        %v1480 = vpop.f32.mrf.mxu0
        %v1481 = vadd.f32 0.0, %v1480
        %v1482 = vpop.f32.mrf.mxu0
        %v1483 = vpop.f32.mrf.mxu0
        %v1484 = vadd.f32 0.0, %v1483
        %v1485 = vpop.f32.mrf.mxu0
        %1486 = vdwg.mxu0
        %1488 = vrot.lane.b32.xlu0 %v821, 96
        %v1489 = vpop.permute.xlu0 %1488
        %1490 = vrot.lane.b32.xlu0 %v822, 96
        %v1491 = vpop.permute.xlu0 %1490
        %v1492 = vsel %vm1440, %v1489, %v1491
        %v1495 = vsel %vm1078, %v1491, 0
        %1497 = vmatprep.subr.bf16.mxu0 0
        %1498 = vmatpush1.bf16.msra.mxu0 %v1170
        %1499 = vmatprep.subr.bf16.mxu0 0
        %1500 = vmatpush1.bf16.msra.mxu0 %v1169
        %1501 = vmatprep.subr.bf16.mxu0 0
        %1502 = vmatpush1.bf16.msra.mxu0 %v1168
        %1503 = vmatprep.subr.bf16.mxu0 0
        %1504 = vmatpush1.bf16.msra.mxu0 %v1167
        %1505 = vmatprep.subr.bf16.mxu0 0
        %1506 = vmatpush1.bf16.msra.mxu0 %v1166
        %1507 = vmatprep.subr.bf16.mxu0 0
        %1508 = vmatpush1.bf16.msra.mxu0 %v1165
        %1509 = vmatprep.subr.bf16.mxu0 0
        %1510 = vmatpush1.bf16.msra.mxu0 %v1164
        %1511 = vmatprep.subr.bf16.mxu0 0
        %1512 = vmatpush1.bf16.msra.mxu0 %v1163
        %1513 = vmatprep.subr.bf16.mxu0 0
        %1514 = vmatpush2.bf16.msra.mxu0 0
        %1515 = vmatprep.subr.bf16.mxu0 0
        %1516 = vmatpush2.bf16.msra.mxu0 0
        %1517 = vmatprep.subr.bf16.mxu0 0
        %1518 = vmatpush2.bf16.msra.mxu0 0
        %1519 = vmatprep.subr.bf16.mxu0 0
        %1520 = vmatpush2.bf16.msra.mxu0 0
        %1521 = vmatprep.subr.bf16.mxu0 0
        %1522 = vmatpush2.bf16.msra.mxu0 0
        %1523 = vmatprep.subr.bf16.mxu0 0
        %1524 = vmatpush2.bf16.msra.mxu0 0
        %1525 = vmatprep.subr.bf16.mxu0 0
        %1526 = vmatpush2.bf16.msra.mxu0 %v1172
        %1527 = vmatprep.subr.bf16.mxu0 0
        %1528 = vmatpush2.bf16.msra.mxu0 %v1171
        %1529 = vmatprep.mubr.bf16.mxu0 %v1495
        %1530 = vmatmul.mubr.bf16.gmra.mxu0 %v1492
        %v1531 = vpop.f32.mrf.mxu0
        %v1532 = vadd.f32 %v1481, %v1531
        %v1533 = vpop.f32.mrf.mxu0
        %v1534 = vpop.f32.mrf.mxu0
        %v1535 = vadd.f32 %v1484, %v1534
        %v1536 = vpop.f32.mrf.mxu0
        %1537 = vdwg.mxu0
        %v1539 = vsel %vm1078, %v996, 0
        %1541 = vmatprep.subr.bf16.mxu0 0
        %1542 = vmatpush1.bf16.msra.mxu0 %v1065
        %1543 = vmatprep.subr.bf16.mxu0 0
        %1544 = vmatpush1.bf16.msra.mxu0 %v1064
        %1545 = vmatprep.subr.bf16.mxu0 0
        %1546 = vmatpush1.bf16.msra.mxu0 %v1063
        %1547 = vmatprep.subr.bf16.mxu0 0
        %1548 = vmatpush1.bf16.msra.mxu0 %v1062
        %1549 = vmatprep.subr.bf16.mxu0 0
        %1550 = vmatpush1.bf16.msra.mxu0 %v1061
        %1551 = vmatprep.subr.bf16.mxu0 0
        %1552 = vmatpush1.bf16.msra.mxu0 %v1060
        %1553 = vmatprep.subr.bf16.mxu0 0
        %1554 = vmatpush1.bf16.msra.mxu0 %v1059
        %1555 = vmatprep.subr.bf16.mxu0 0
        %1556 = vmatpush1.bf16.msra.mxu0 %v1058
        %1557 = vmatprep.subr.bf16.mxu0 0
        %1558 = vmatpush2.bf16.msra.mxu0 0
        %1559 = vmatprep.subr.bf16.mxu0 0
        %1560 = vmatpush2.bf16.msra.mxu0 0
        %1561 = vmatprep.subr.bf16.mxu0 0
        %1562 = vmatpush2.bf16.msra.mxu0 0
        %1563 = vmatprep.subr.bf16.mxu0 0
        %1564 = vmatpush2.bf16.msra.mxu0 0
        %1565 = vmatprep.subr.bf16.mxu0 0
        %1566 = vmatpush2.bf16.msra.mxu0 0
        %1567 = vmatprep.subr.bf16.mxu0 0
        %1568 = vmatpush2.bf16.msra.mxu0 0
        %1569 = vmatprep.subr.bf16.mxu0 0
        %1570 = vmatpush2.bf16.msra.mxu0 %v1067
        %1571 = vmatprep.subr.bf16.mxu0 0
        %1572 = vmatpush2.bf16.msra.mxu0 %v1066
        %1573 = vmatprep.mubr.bf16.mxu0 %v1539
        %1574 = vmatmul.mubr.bf16.gmra.mxu0 %v995
        %v1575 = vpop.f32.mrf.mxu0
        %v1576 = vadd.f32 0.0, %v1575
        %v1577 = vpop.f32.mrf.mxu0
        %v1578 = vpop.f32.mrf.mxu0
        %v1579 = vadd.f32 0.0, %v1578
        %v1580 = vpop.f32.mrf.mxu0
        %1581 = vdwg.mxu0
        %v1583 = vsel %vm1078, %v823, 0
        %1585 = vmatprep.subr.bf16.mxu0 0
        %1586 = vmatpush1.bf16.msra.mxu0 %v1170
        %1587 = vmatprep.subr.bf16.mxu0 0
        %1588 = vmatpush1.bf16.msra.mxu0 %v1169
        %1589 = vmatprep.subr.bf16.mxu0 0
        %1590 = vmatpush1.bf16.msra.mxu0 %v1168
        %1591 = vmatprep.subr.bf16.mxu0 0
        %1592 = vmatpush1.bf16.msra.mxu0 %v1167
        %1593 = vmatprep.subr.bf16.mxu0 0
        %1594 = vmatpush1.bf16.msra.mxu0 %v1166
        %1595 = vmatprep.subr.bf16.mxu0 0
        %1596 = vmatpush1.bf16.msra.mxu0 %v1165
        %1597 = vmatprep.subr.bf16.mxu0 0
        %1598 = vmatpush1.bf16.msra.mxu0 %v1164
        %1599 = vmatprep.subr.bf16.mxu0 0
        %1600 = vmatpush1.bf16.msra.mxu0 %v1163
        %1601 = vmatprep.subr.bf16.mxu0 0
        %1602 = vmatpush2.bf16.msra.mxu0 0
        %1603 = vmatprep.subr.bf16.mxu0 0
        %1604 = vmatpush2.bf16.msra.mxu0 0
        %1605 = vmatprep.subr.bf16.mxu0 0
        %1606 = vmatpush2.bf16.msra.mxu0 0
        %1607 = vmatprep.subr.bf16.mxu0 0
        %1608 = vmatpush2.bf16.msra.mxu0 0
        %1609 = vmatprep.subr.bf16.mxu0 0
        %1610 = vmatpush2.bf16.msra.mxu0 0
        %1611 = vmatprep.subr.bf16.mxu0 0
        %1612 = vmatpush2.bf16.msra.mxu0 0
        %1613 = vmatprep.subr.bf16.mxu0 0
        %1614 = vmatpush2.bf16.msra.mxu0 %v1172
        %1615 = vmatprep.subr.bf16.mxu0 0
        %1616 = vmatpush2.bf16.msra.mxu0 %v1171
        %1617 = vmatprep.mubr.bf16.mxu0 %v1583
        %1618 = vmatmul.mubr.bf16.gmra.mxu0 %v822
        %v1619 = vpop.f32.mrf.mxu0
        %v1620 = vadd.f32 %v1576, %v1619
        %v1621 = vpop.f32.mrf.mxu0
        %v1622 = vpop.f32.mrf.mxu0
        %v1623 = vadd.f32 %v1579, %v1622
        %v1624 = vpop.f32.mrf.mxu0
        %1625 = vdwg.mxu0
        %s1626 = scalar_lea.vmem %s357, 16 [#allocation2]
        %v1627 = vld [vmem:[%s1626] sm:$0xf]
        %v1628 = vld [vmem:[%s1626 + $0x4] sm:$0xf]
        %v1631 = vunpack.c.l.b16 %v1627
        %v1632 = vunpack.c.l.b16 %v1628
        %v1633 = vpack.c.b16 %v1632, %v1631
        %v1635 = vsel %vm659, %v1633, 0
        %1637 = vmatprep.subr.bf16.mxu0 %v671
        %1638 = vmatpush1.bf16.msra.mxu0 %v668
        %1639 = vmatprep.subr.bf16.mxu0 %v615
        %1640 = vmatpush1.bf16.msra.mxu0 %v614
        %1641 = vmatprep.subr.bf16.mxu0 %v610
        %1642 = vmatpush1.bf16.msra.mxu0 %v609
        %1643 = vmatprep.subr.bf16.mxu0 %v605
        %1644 = vmatpush1.bf16.msra.mxu0 %v604
        %1645 = vmatprep.subr.bf16.mxu0 %v600
        %1646 = vmatpush1.bf16.msra.mxu0 %v599
        %1647 = vmatprep.subr.bf16.mxu0 %v595
        %1648 = vmatpush1.bf16.msra.mxu0 %v594
        %1649 = vmatprep.subr.bf16.mxu0 %v590
        %1650 = vmatpush1.bf16.msra.mxu0 %v589
        %1651 = vmatprep.subr.bf16.mxu0 %v585
        %1652 = vmatpush1.bf16.msra.mxu0 %v584
        %1653 = vmatprep.subr.bf16.mxu0 0
        %1654 = vmatpush2.bf16.msra.mxu0 0
        %1655 = vmatprep.subr.bf16.mxu0 0
        %1656 = vmatpush2.bf16.msra.mxu0 0
        %1657 = vmatprep.subr.bf16.mxu0 0
        %1658 = vmatpush2.bf16.msra.mxu0 0
        %1659 = vmatprep.subr.bf16.mxu0 0
        %1660 = vmatpush2.bf16.msra.mxu0 0
        %1661 = vmatprep.subr.bf16.mxu0 0
        %1662 = vmatpush2.bf16.msra.mxu0 0
        %1663 = vmatprep.subr.bf16.mxu0 0
        %1664 = vmatpush2.bf16.msra.mxu0 0
        %1665 = vmatprep.subr.bf16.mxu0 0
        %1666 = vmatpush2.bf16.msra.mxu0 0
        %1667 = vmatprep.subr.bf16.mxu0 0
        %1668 = vmatpush2.bf16.msra.mxu0 0
        %1669 = vmatprep.mubr.bf16.mxu0 0
        %1670 = vmatmul.mubr.bf16.gmra.mxu0 %v1635
        %v1671 = vpop.f32.mrf.mxu0
        %v1672 = vadd.f32 0.0, %v1671
        %v1673 = vpop.f32.mrf.mxu0
        %v1674 = vadd.f32 0.0, %v1673
        %v1675 = vpop.f32.mrf.mxu0
        %v1676 = vadd.f32 0.0, %v1675
        %v1677 = vpop.f32.mrf.mxu0
        %v1678 = vadd.f32 0.0, %v1677
        %1679 = vdwg.mxu0
        %1680 = vmatprep.subr.bf16.mxu0 %v677
        %1681 = vmatpush1.bf16.msra.mxu0 %v674
        %1682 = vmatprep.subr.bf16.mxu0 %v617
        %1683 = vmatpush1.bf16.msra.mxu0 %v616
        %1684 = vmatprep.subr.bf16.mxu0 %v612
        %1685 = vmatpush1.bf16.msra.mxu0 %v611
        %1686 = vmatprep.subr.bf16.mxu0 %v607
        %1687 = vmatpush1.bf16.msra.mxu0 %v606
        %1688 = vmatprep.subr.bf16.mxu0 %v602
        %1689 = vmatpush1.bf16.msra.mxu0 %v601
        %1690 = vmatprep.subr.bf16.mxu0 %v597
        %1691 = vmatpush1.bf16.msra.mxu0 %v596
        %1692 = vmatprep.subr.bf16.mxu0 %v592
        %1693 = vmatpush1.bf16.msra.mxu0 %v591
        %1694 = vmatprep.subr.bf16.mxu0 %v587
        %1695 = vmatpush1.bf16.msra.mxu0 %v586
        %1696 = vmatprep.subr.bf16.mxu0 0
        %1697 = vmatpush2.bf16.msra.mxu0 0
        %1698 = vmatprep.subr.bf16.mxu0 0
        %1699 = vmatpush2.bf16.msra.mxu0 0
        %1700 = vmatprep.subr.bf16.mxu0 0
        %1701 = vmatpush2.bf16.msra.mxu0 0
        %1702 = vmatprep.subr.bf16.mxu0 0
        %1703 = vmatpush2.bf16.msra.mxu0 0
        %1704 = vmatprep.subr.bf16.mxu0 0
        %1705 = vmatpush2.bf16.msra.mxu0 0
        %1706 = vmatprep.subr.bf16.mxu0 0
        %1707 = vmatpush2.bf16.msra.mxu0 0
        %1708 = vmatprep.subr.bf16.mxu0 0
        %1709 = vmatpush2.bf16.msra.mxu0 0
        %1710 = vmatprep.subr.bf16.mxu0 0
        %1711 = vmatpush2.bf16.msra.mxu0 0
        %1712 = vmatprep.mubr.bf16.mxu0 0
        %1713 = vmatmul.mubr.bf16.gmra.mxu0 %v1635
        %v1714 = vpop.f32.mrf.mxu0
        %v1715 = vadd.f32 0.0, %v1714
        %v1716 = vpop.f32.mrf.mxu0
        %v1717 = vadd.f32 0.0, %v1716
        %v1718 = vpop.f32.mrf.mxu0
        %v1719 = vadd.f32 0.0, %v1718
        %v1720 = vpop.f32.mrf.mxu0
        %v1721 = vadd.f32 0.0, %v1720
        %1722 = vdwg.mxu0
        %1723 = vmatprep.subr.bf16.mxu0 0
        %1724 = vmatpush1.bf16.msra.mxu0 %v680
        %1725 = vmatprep.subr.bf16.mxu0 0
        %1726 = vmatpush1.bf16.msra.mxu0 %v618
        %1727 = vmatprep.subr.bf16.mxu0 0
        %1728 = vmatpush1.bf16.msra.mxu0 %v613
        %1729 = vmatprep.subr.bf16.mxu0 0
        %1730 = vmatpush1.bf16.msra.mxu0 %v608
        %1731 = vmatprep.subr.bf16.mxu0 0
        %1732 = vmatpush1.bf16.msra.mxu0 %v603
        %1733 = vmatprep.subr.bf16.mxu0 0
        %1734 = vmatpush1.bf16.msra.mxu0 %v598
        %1735 = vmatprep.subr.bf16.mxu0 0
        %1736 = vmatpush1.bf16.msra.mxu0 %v593
        %1737 = vmatprep.subr.bf16.mxu0 0
        %1738 = vmatpush1.bf16.msra.mxu0 %v588
        %1739 = vmatprep.subr.bf16.mxu0 0
        %1740 = vmatpush2.bf16.msra.mxu0 0
        %1741 = vmatprep.subr.bf16.mxu0 0
        %1742 = vmatpush2.bf16.msra.mxu0 0
        %1743 = vmatprep.subr.bf16.mxu0 0
        %1744 = vmatpush2.bf16.msra.mxu0 0
        %1745 = vmatprep.subr.bf16.mxu0 0
        %1746 = vmatpush2.bf16.msra.mxu0 0
        %1747 = vmatprep.subr.bf16.mxu0 0
        %1748 = vmatpush2.bf16.msra.mxu0 0
        %1749 = vmatprep.subr.bf16.mxu0 0
        %1750 = vmatpush2.bf16.msra.mxu0 0
        %1751 = vmatprep.subr.bf16.mxu0 0
        %1752 = vmatpush2.bf16.msra.mxu0 0
        %1753 = vmatprep.subr.bf16.mxu0 0
        %1754 = vmatpush2.bf16.msra.mxu0 0
        %1755 = vmatprep.mubr.bf16.mxu0 0
        %1756 = vmatmul.mubr.bf16.gmra.mxu0 %v1635
        %v1757 = vpop.f32.mrf.mxu0
        %v1758 = vadd.f32 0.0, %v1757
        %v1759 = vpop.f32.mrf.mxu0
        %v1760 = vpop.f32.mrf.mxu0
        %v1761 = vadd.f32 0.0, %v1760
        %v1762 = vpop.f32.mrf.mxu0
        %1763 = vdwg.mxu0
        %v1764 = vmax.f32 %v1672, 0.0
        %v1765 = vmax.f32 %v1674, 0.0
        %v1766 = vmax.f32 %v1715, 0.0
        %v1767 = vmax.f32 %v1717, 0.0
        %v1768 = vmax.f32 %v1758, 0.0
        %v1769 = vmax.f32 %v1676, 0.0
        %v1770 = vmax.f32 %v1678, 0.0
        %v1771 = vmax.f32 %v1719, 0.0
        %v1772 = vmax.f32 %v1721, 0.0
        %v1773 = vmax.f32 %v1761, 0.0
        %v1774 = vpack.c.bf16 %v1769, %v1764
        %v1775 = vpack.c.bf16 %v1770, %v1765
        %v1776 = vpack.c.bf16 %v1771, %v1766
        %v1777 = vpack.c.bf16 %v1772, %v1767
        %v1778 = vpack.c.bf16 %v1773, %v1768
        %s1779 = scalar_lea.vmem %s2, 160
        %v1780 = vld [vmem:[%s1779] sm:$0xf]
        %v1781 = vld [vmem:[%s1779 + $0x4] sm:$0xf]
        %v1782 = vld [vmem:[%s1779 + $0x8] sm:$0xf]
        %v1783 = vld [vmem:[%s1779 + $0xc] sm:$0xf]
        %v1784 = vld [vmem:[%s1779 + $0x10] sm:$0xf]
        %v1785 = vld [vmem:[%s1779 + $0x14] sm:$0xf]
        %v1786 = vld [vmem:[%s1779 + $0x18] sm:$0xf]
        %v1787 = vld [vmem:[%s1779 + $0x1c] sm:$0xf]
        %v1788 = vld [vmem:[%s1779 + $0x20] sm:$0xf]
        %v1789 = vld [vmem:[%s1779 + $0x24] sm:$0xf]
        %v1790 = vld [vmem:[%s1779 + $0x28] sm:$0xf]
        %v1791 = vld [vmem:[%s1779 + $0x2c] sm:$0xf]
        %v1792 = vld [vmem:[%s1779 + $0x30] sm:$0xf]
        %v1793 = vld [vmem:[%s1779 + $0x34] sm:$0xf]
        %v1794 = vld [vmem:[%s1779 + $0x38] sm:$0xf]
        %v1795 = vld [vmem:[%s1779 + $0x3c] sm:$0xf]
        %v1796 = vld [vmem:[%s1779 + $0x40] sm:$0xf]
        %v1797 = vld [vmem:[%s1779 + $0x44] sm:$0xf]
        %v1798 = vld [vmem:[%s1779 + $0x48] sm:$0xf]
        %v1799 = vld [vmem:[%s1779 + $0x4c] sm:$0xf]
        %v1820 = vunpack.c.l.b16 %v1780
        %v1821 = vunpack.c.l.b16 %v1781
        %v1822 = vunpack.c.l.b16 %v1782
        %v1823 = vunpack.c.l.b16 %v1783
        %v1824 = vunpack.c.l.b16 %v1784
        %v1825 = vunpack.c.l.b16 %v1785
        %v1826 = vunpack.c.l.b16 %v1786
        %v1827 = vunpack.c.l.b16 %v1787
        %v1828 = vunpack.c.l.b16 %v1788
        %v1829 = vunpack.c.l.b16 %v1789
        %v1830 = vunpack.c.l.b16 %v1790
        %v1831 = vunpack.c.l.b16 %v1791
        %v1832 = vunpack.c.l.b16 %v1792
        %v1833 = vunpack.c.l.b16 %v1793
        %v1834 = vunpack.c.l.b16 %v1794
        %v1835 = vunpack.c.l.b16 %v1795
        %v1836 = vunpack.c.l.b16 %v1796
        %v1837 = vunpack.c.l.b16 %v1797
        %v1838 = vunpack.c.l.b16 %v1798
        %v1839 = vunpack.c.l.b16 %v1799
        %v1840 = vpack.c.b16 %v1821, %v1820
        %v1841 = vpack.c.b16 %v1823, %v1822
        %v1842 = vpack.c.b16 %v1825, %v1824
        %v1843 = vpack.c.b16 %v1827, %v1826
        %v1844 = vpack.c.b16 %v1829, %v1828
        %v1845 = vpack.c.b16 %v1831, %v1830
        %v1846 = vpack.c.b16 %v1833, %v1832
        %v1847 = vpack.c.b16 %v1835, %v1834
        %v1848 = vpack.c.b16 %v1837, %v1836
        %v1849 = vpack.c.b16 %v1839, %v1838
        %v1861 = vsel %vm1078, %v1775, 0
        %1863 = vmatprep.subr.bf16.mxu0 0
        %1864 = vmatpush1.bf16.msra.mxu0 %v1847
        %1865 = vmatprep.subr.bf16.mxu0 0
        %1866 = vmatpush1.bf16.msra.mxu0 %v1846
        %1867 = vmatprep.subr.bf16.mxu0 0
        %1868 = vmatpush1.bf16.msra.mxu0 %v1845
        %1869 = vmatprep.subr.bf16.mxu0 0
        %1870 = vmatpush1.bf16.msra.mxu0 %v1844
        %1871 = vmatprep.subr.bf16.mxu0 0
        %1872 = vmatpush1.bf16.msra.mxu0 %v1843
        %1873 = vmatprep.subr.bf16.mxu0 0
        %1874 = vmatpush1.bf16.msra.mxu0 %v1842
        %1875 = vmatprep.subr.bf16.mxu0 0
        %1876 = vmatpush1.bf16.msra.mxu0 %v1841
        %1877 = vmatprep.subr.bf16.mxu0 0
        %1878 = vmatpush1.bf16.msra.mxu0 %v1840
        %1879 = vmatprep.subr.bf16.mxu0 0
        %1880 = vmatpush2.bf16.msra.mxu0 0
        %1881 = vmatprep.subr.bf16.mxu0 0
        %1882 = vmatpush2.bf16.msra.mxu0 0
        %1883 = vmatprep.subr.bf16.mxu0 0
        %1884 = vmatpush2.bf16.msra.mxu0 0
        %1885 = vmatprep.subr.bf16.mxu0 0
        %1886 = vmatpush2.bf16.msra.mxu0 0
        %1887 = vmatprep.subr.bf16.mxu0 0
        %1888 = vmatpush2.bf16.msra.mxu0 0
        %1889 = vmatprep.subr.bf16.mxu0 0
        %1890 = vmatpush2.bf16.msra.mxu0 0
        %1891 = vmatprep.subr.bf16.mxu0 0
        %1892 = vmatpush2.bf16.msra.mxu0 %v1849
        %1893 = vmatprep.subr.bf16.mxu0 0
        %1894 = vmatpush2.bf16.msra.mxu0 %v1848
        %1895 = vmatprep.mubr.bf16.mxu0 %v1861
        %1896 = vmatmul.mubr.bf16.gmra.mxu0 %v1774
        %v1897 = vpop.f32.mrf.mxu0
        %v1898 = vadd.f32 0.0, %v1897
        %v1899 = vpop.f32.mrf.mxu0
        %v1900 = vpop.f32.mrf.mxu0
        %v1901 = vadd.f32 0.0, %v1900
        %v1902 = vpop.f32.mrf.mxu0
        %1903 = vdwg.mxu0
        %v1904 = vadd.f32 %v1221, %v1898
        %v1905 = vadd.f32 %v1224, %v1901
        %1908 = vrot.lane.b32.xlu0 %v1774, 32
        %v1909 = vpop.permute.xlu0 %1908
        %1910 = vrot.lane.b32.xlu0 %v1775, 32
        %v1911 = vpop.permute.xlu0 %1910
        %v1912 = vsel %vm1233, %v1909, %v1911
        %v1915 = vsel %vm1078, %v1911, 0
        %1917 = vmatprep.subr.bf16.mxu0 0
        %1918 = vmatpush1.bf16.msra.mxu0 %v1847
        %1919 = vmatprep.subr.bf16.mxu0 0
        %1920 = vmatpush1.bf16.msra.mxu0 %v1846
        %1921 = vmatprep.subr.bf16.mxu0 0
        %1922 = vmatpush1.bf16.msra.mxu0 %v1845
        %1923 = vmatprep.subr.bf16.mxu0 0
        %1924 = vmatpush1.bf16.msra.mxu0 %v1844
        %1925 = vmatprep.subr.bf16.mxu0 0
        %1926 = vmatpush1.bf16.msra.mxu0 %v1843
        %1927 = vmatprep.subr.bf16.mxu0 0
        %1928 = vmatpush1.bf16.msra.mxu0 %v1842
        %1929 = vmatprep.subr.bf16.mxu0 0
        %1930 = vmatpush1.bf16.msra.mxu0 %v1841
        %1931 = vmatprep.subr.bf16.mxu0 0
        %1932 = vmatpush1.bf16.msra.mxu0 %v1840
        %1933 = vmatprep.subr.bf16.mxu0 0
        %1934 = vmatpush2.bf16.msra.mxu0 0
        %1935 = vmatprep.subr.bf16.mxu0 0
        %1936 = vmatpush2.bf16.msra.mxu0 0
        %1937 = vmatprep.subr.bf16.mxu0 0
        %1938 = vmatpush2.bf16.msra.mxu0 0
        %1939 = vmatprep.subr.bf16.mxu0 0
        %1940 = vmatpush2.bf16.msra.mxu0 0
        %1941 = vmatprep.subr.bf16.mxu0 0
        %1942 = vmatpush2.bf16.msra.mxu0 0
        %1943 = vmatprep.subr.bf16.mxu0 0
        %1944 = vmatpush2.bf16.msra.mxu0 0
        %1945 = vmatprep.subr.bf16.mxu0 0
        %1946 = vmatpush2.bf16.msra.mxu0 %v1849
        %1947 = vmatprep.subr.bf16.mxu0 0
        %1948 = vmatpush2.bf16.msra.mxu0 %v1848
        %1949 = vmatprep.mubr.bf16.mxu0 %v1915
        %1950 = vmatmul.mubr.bf16.gmra.mxu0 %v1912
        %v1951 = vpop.f32.mrf.mxu0
        %v1952 = vadd.f32 0.0, %v1951
        %v1953 = vpop.f32.mrf.mxu0
        %v1954 = vpop.f32.mrf.mxu0
        %v1955 = vadd.f32 0.0, %v1954
        %v1956 = vpop.f32.mrf.mxu0
        %1957 = vdwg.mxu0
        %v1958 = vadd.f32 %v1326, %v1952
        %v1959 = vadd.f32 %v1329, %v1955
        %1961 = vrot.lane.b32.xlu0 %v1775, 64
        %v1962 = vpop.permute.xlu0 %1961
        %1963 = vrot.lane.b32.xlu0 %v1776, 64
        %v1964 = vpop.permute.xlu0 %1963
        %v1965 = vsel %vm1337, %v1962, %v1964
        %v1968 = vsel %vm1078, %v1964, 0
        %1970 = vmatprep.subr.bf16.mxu0 0
        %1971 = vmatpush1.bf16.msra.mxu0 %v1847
        %1972 = vmatprep.subr.bf16.mxu0 0
        %1973 = vmatpush1.bf16.msra.mxu0 %v1846
        %1974 = vmatprep.subr.bf16.mxu0 0
        %1975 = vmatpush1.bf16.msra.mxu0 %v1845
        %1976 = vmatprep.subr.bf16.mxu0 0
        %1977 = vmatpush1.bf16.msra.mxu0 %v1844
        %1978 = vmatprep.subr.bf16.mxu0 0
        %1979 = vmatpush1.bf16.msra.mxu0 %v1843
        %1980 = vmatprep.subr.bf16.mxu0 0
        %1981 = vmatpush1.bf16.msra.mxu0 %v1842
        %1982 = vmatprep.subr.bf16.mxu0 0
        %1983 = vmatpush1.bf16.msra.mxu0 %v1841
        %1984 = vmatprep.subr.bf16.mxu0 0
        %1985 = vmatpush1.bf16.msra.mxu0 %v1840
        %1986 = vmatprep.subr.bf16.mxu0 0
        %1987 = vmatpush2.bf16.msra.mxu0 0
        %1988 = vmatprep.subr.bf16.mxu0 0
        %1989 = vmatpush2.bf16.msra.mxu0 0
        %1990 = vmatprep.subr.bf16.mxu0 0
        %1991 = vmatpush2.bf16.msra.mxu0 0
        %1992 = vmatprep.subr.bf16.mxu0 0
        %1993 = vmatpush2.bf16.msra.mxu0 0
        %1994 = vmatprep.subr.bf16.mxu0 0
        %1995 = vmatpush2.bf16.msra.mxu0 0
        %1996 = vmatprep.subr.bf16.mxu0 0
        %1997 = vmatpush2.bf16.msra.mxu0 0
        %1998 = vmatprep.subr.bf16.mxu0 0
        %1999 = vmatpush2.bf16.msra.mxu0 %v1849
        %2000 = vmatprep.subr.bf16.mxu0 0
        %2001 = vmatpush2.bf16.msra.mxu0 %v1848
        %2002 = vmatprep.mubr.bf16.mxu0 %v1968
        %2003 = vmatmul.mubr.bf16.gmra.mxu0 %v1965
        %v2004 = vpop.f32.mrf.mxu0
        %v2005 = vadd.f32 0.0, %v2004
        %v2006 = vpop.f32.mrf.mxu0
        %v2007 = vpop.f32.mrf.mxu0
        %v2008 = vadd.f32 0.0, %v2007
        %v2009 = vpop.f32.mrf.mxu0
        %2010 = vdwg.mxu0
        %v2011 = vadd.f32 %v1429, %v2005
        %v2012 = vadd.f32 %v1432, %v2008
        %2014 = vrot.lane.b32.xlu0 %v1776, 96
        %v2015 = vpop.permute.xlu0 %2014
        %2016 = vrot.lane.b32.xlu0 %v1777, 96
        %v2017 = vpop.permute.xlu0 %2016
        %v2018 = vsel %vm1440, %v2015, %v2017
        %v2021 = vsel %vm1078, %v2017, 0
        %2023 = vmatprep.subr.bf16.mxu0 0
        %2024 = vmatpush1.bf16.msra.mxu0 %v1847
        %2025 = vmatprep.subr.bf16.mxu0 0
        %2026 = vmatpush1.bf16.msra.mxu0 %v1846
        %2027 = vmatprep.subr.bf16.mxu0 0
        %2028 = vmatpush1.bf16.msra.mxu0 %v1845
        %2029 = vmatprep.subr.bf16.mxu0 0
        %2030 = vmatpush1.bf16.msra.mxu0 %v1844
        %2031 = vmatprep.subr.bf16.mxu0 0
        %2032 = vmatpush1.bf16.msra.mxu0 %v1843
        %2033 = vmatprep.subr.bf16.mxu0 0
        %2034 = vmatpush1.bf16.msra.mxu0 %v1842
        %2035 = vmatprep.subr.bf16.mxu0 0
        %2036 = vmatpush1.bf16.msra.mxu0 %v1841
        %2037 = vmatprep.subr.bf16.mxu0 0
        %2038 = vmatpush1.bf16.msra.mxu0 %v1840
        %2039 = vmatprep.subr.bf16.mxu0 0
        %2040 = vmatpush2.bf16.msra.mxu0 0
        %2041 = vmatprep.subr.bf16.mxu0 0
        %2042 = vmatpush2.bf16.msra.mxu0 0
        %2043 = vmatprep.subr.bf16.mxu0 0
        %2044 = vmatpush2.bf16.msra.mxu0 0
        %2045 = vmatprep.subr.bf16.mxu0 0
        %2046 = vmatpush2.bf16.msra.mxu0 0
        %2047 = vmatprep.subr.bf16.mxu0 0
        %2048 = vmatpush2.bf16.msra.mxu0 0
        %2049 = vmatprep.subr.bf16.mxu0 0
        %2050 = vmatpush2.bf16.msra.mxu0 0
        %2051 = vmatprep.subr.bf16.mxu0 0
        %2052 = vmatpush2.bf16.msra.mxu0 %v1849
        %2053 = vmatprep.subr.bf16.mxu0 0
        %2054 = vmatpush2.bf16.msra.mxu0 %v1848
        %2055 = vmatprep.mubr.bf16.mxu0 %v2021
        %2056 = vmatmul.mubr.bf16.gmra.mxu0 %v2018
        %v2057 = vpop.f32.mrf.mxu0
        %v2058 = vadd.f32 0.0, %v2057
        %v2059 = vpop.f32.mrf.mxu0
        %v2060 = vpop.f32.mrf.mxu0
        %v2061 = vadd.f32 0.0, %v2060
        %v2062 = vpop.f32.mrf.mxu0
        %2063 = vdwg.mxu0
        %v2064 = vadd.f32 %v1532, %v2058
        %v2065 = vadd.f32 %v1535, %v2061
        %v2067 = vsel %vm1078, %v1778, 0
        %2069 = vmatprep.subr.bf16.mxu0 0
        %2070 = vmatpush1.bf16.msra.mxu0 %v1847
        %2071 = vmatprep.subr.bf16.mxu0 0
        %2072 = vmatpush1.bf16.msra.mxu0 %v1846
        %2073 = vmatprep.subr.bf16.mxu0 0
        %2074 = vmatpush1.bf16.msra.mxu0 %v1845
        %2075 = vmatprep.subr.bf16.mxu0 0
        %2076 = vmatpush1.bf16.msra.mxu0 %v1844
        %2077 = vmatprep.subr.bf16.mxu0 0
        %2078 = vmatpush1.bf16.msra.mxu0 %v1843
        %2079 = vmatprep.subr.bf16.mxu0 0
        %2080 = vmatpush1.bf16.msra.mxu0 %v1842
        %2081 = vmatprep.subr.bf16.mxu0 0
        %2082 = vmatpush1.bf16.msra.mxu0 %v1841
        %2083 = vmatprep.subr.bf16.mxu0 0
        %2084 = vmatpush1.bf16.msra.mxu0 %v1840
        %2085 = vmatprep.subr.bf16.mxu0 0
        %2086 = vmatpush2.bf16.msra.mxu0 0
        %2087 = vmatprep.subr.bf16.mxu0 0
        %2088 = vmatpush2.bf16.msra.mxu0 0
        %2089 = vmatprep.subr.bf16.mxu0 0
        %2090 = vmatpush2.bf16.msra.mxu0 0
        %2091 = vmatprep.subr.bf16.mxu0 0
        %2092 = vmatpush2.bf16.msra.mxu0 0
        %2093 = vmatprep.subr.bf16.mxu0 0
        %2094 = vmatpush2.bf16.msra.mxu0 0
        %2095 = vmatprep.subr.bf16.mxu0 0
        %2096 = vmatpush2.bf16.msra.mxu0 0
        %2097 = vmatprep.subr.bf16.mxu0 0
        %2098 = vmatpush2.bf16.msra.mxu0 %v1849
        %2099 = vmatprep.subr.bf16.mxu0 0
        %2100 = vmatpush2.bf16.msra.mxu0 %v1848
        %2101 = vmatprep.mubr.bf16.mxu0 %v2067
        %2102 = vmatmul.mubr.bf16.gmra.mxu0 %v1777
        %v2103 = vpop.f32.mrf.mxu0
        %v2104 = vadd.f32 0.0, %v2103
        %v2105 = vpop.f32.mrf.mxu0
        %v2106 = vpop.f32.mrf.mxu0
        %v2107 = vadd.f32 0.0, %v2106
        %v2108 = vpop.f32.mrf.mxu0
        %2109 = vdwg.mxu0
        %v2110 = vadd.f32 %v1620, %v2104
        %v2111 = vadd.f32 %v1623, %v2107
        %s2112 = scalar_lea.vmem %s357, 24 [#allocation2]
        %v2113 = vld [vmem:[%s2112] sm:$0xf]
        %v2114 = vld [vmem:[%s2112 + $0x4] sm:$0xf]
        %v2117 = vunpack.c.l.b16 %v2113
        %v2118 = vunpack.c.l.b16 %v2114
        %v2119 = vpack.c.b16 %v2118, %v2117
        %v2121 = vsel %vm659, %v2119, 0
        %2123 = vmatprep.subr.bf16.mxu0 %v671
        %2124 = vmatpush1.bf16.msra.mxu0 %v668
        %2125 = vmatprep.subr.bf16.mxu0 %v615
        %2126 = vmatpush1.bf16.msra.mxu0 %v614
        %2127 = vmatprep.subr.bf16.mxu0 %v610
        %2128 = vmatpush1.bf16.msra.mxu0 %v609
        %2129 = vmatprep.subr.bf16.mxu0 %v605
        %2130 = vmatpush1.bf16.msra.mxu0 %v604
        %2131 = vmatprep.subr.bf16.mxu0 %v600
        %2132 = vmatpush1.bf16.msra.mxu0 %v599
        %2133 = vmatprep.subr.bf16.mxu0 %v595
        %2134 = vmatpush1.bf16.msra.mxu0 %v594
        %2135 = vmatprep.subr.bf16.mxu0 %v590
        %2136 = vmatpush1.bf16.msra.mxu0 %v589
        %2137 = vmatprep.subr.bf16.mxu0 %v585
        %2138 = vmatpush1.bf16.msra.mxu0 %v584
        %2139 = vmatprep.subr.bf16.mxu0 0
        %2140 = vmatpush2.bf16.msra.mxu0 0
        %2141 = vmatprep.subr.bf16.mxu0 0
        %2142 = vmatpush2.bf16.msra.mxu0 0
        %2143 = vmatprep.subr.bf16.mxu0 0
        %2144 = vmatpush2.bf16.msra.mxu0 0
        %2145 = vmatprep.subr.bf16.mxu0 0
        %2146 = vmatpush2.bf16.msra.mxu0 0
        %2147 = vmatprep.subr.bf16.mxu0 0
        %2148 = vmatpush2.bf16.msra.mxu0 0
        %2149 = vmatprep.subr.bf16.mxu0 0
        %2150 = vmatpush2.bf16.msra.mxu0 0
        %2151 = vmatprep.subr.bf16.mxu0 0
        %2152 = vmatpush2.bf16.msra.mxu0 0
        %2153 = vmatprep.subr.bf16.mxu0 0
        %2154 = vmatpush2.bf16.msra.mxu0 0
        %2155 = vmatprep.mubr.bf16.mxu0 0
        %2156 = vmatmul.mubr.bf16.gmra.mxu0 %v2121
        %v2157 = vpop.f32.mrf.mxu0
        %v2158 = vadd.f32 0.0, %v2157
        %v2159 = vpop.f32.mrf.mxu0
        %v2160 = vadd.f32 0.0, %v2159
        %v2161 = vpop.f32.mrf.mxu0
        %v2162 = vadd.f32 0.0, %v2161
        %v2163 = vpop.f32.mrf.mxu0
        %v2164 = vadd.f32 0.0, %v2163
        %2165 = vdwg.mxu0
        %2166 = vmatprep.subr.bf16.mxu0 %v677
        %2167 = vmatpush1.bf16.msra.mxu0 %v674
        %2168 = vmatprep.subr.bf16.mxu0 %v617
        %2169 = vmatpush1.bf16.msra.mxu0 %v616
        %2170 = vmatprep.subr.bf16.mxu0 %v612
        %2171 = vmatpush1.bf16.msra.mxu0 %v611
        %2172 = vmatprep.subr.bf16.mxu0 %v607
        %2173 = vmatpush1.bf16.msra.mxu0 %v606
        %2174 = vmatprep.subr.bf16.mxu0 %v602
        %2175 = vmatpush1.bf16.msra.mxu0 %v601
        %2176 = vmatprep.subr.bf16.mxu0 %v597
        %2177 = vmatpush1.bf16.msra.mxu0 %v596
        %2178 = vmatprep.subr.bf16.mxu0 %v592
        %2179 = vmatpush1.bf16.msra.mxu0 %v591
        %2180 = vmatprep.subr.bf16.mxu0 %v587
        %2181 = vmatpush1.bf16.msra.mxu0 %v586
        %2182 = vmatprep.subr.bf16.mxu0 0
        %2183 = vmatpush2.bf16.msra.mxu0 0
        %2184 = vmatprep.subr.bf16.mxu0 0
        %2185 = vmatpush2.bf16.msra.mxu0 0
        %2186 = vmatprep.subr.bf16.mxu0 0
        %2187 = vmatpush2.bf16.msra.mxu0 0
        %2188 = vmatprep.subr.bf16.mxu0 0
        %2189 = vmatpush2.bf16.msra.mxu0 0
        %2190 = vmatprep.subr.bf16.mxu0 0
        %2191 = vmatpush2.bf16.msra.mxu0 0
        %2192 = vmatprep.subr.bf16.mxu0 0
        %2193 = vmatpush2.bf16.msra.mxu0 0
        %2194 = vmatprep.subr.bf16.mxu0 0
        %2195 = vmatpush2.bf16.msra.mxu0 0
        %2196 = vmatprep.subr.bf16.mxu0 0
        %2197 = vmatpush2.bf16.msra.mxu0 0
        %2198 = vmatprep.mubr.bf16.mxu0 0
        %2199 = vmatmul.mubr.bf16.gmra.mxu0 %v2121
        %v2200 = vpop.f32.mrf.mxu0
        %v2201 = vadd.f32 0.0, %v2200
        %v2202 = vpop.f32.mrf.mxu0
        %v2203 = vadd.f32 0.0, %v2202
        %v2204 = vpop.f32.mrf.mxu0
        %v2205 = vadd.f32 0.0, %v2204
        %v2206 = vpop.f32.mrf.mxu0
        %v2207 = vadd.f32 0.0, %v2206
        %2208 = vdwg.mxu0
        %2209 = vmatprep.subr.bf16.mxu0 0
        %2210 = vmatpush1.bf16.msra.mxu0 %v680
        %2211 = vmatprep.subr.bf16.mxu0 0
        %2212 = vmatpush1.bf16.msra.mxu0 %v618
        %2213 = vmatprep.subr.bf16.mxu0 0
        %2214 = vmatpush1.bf16.msra.mxu0 %v613
        %2215 = vmatprep.subr.bf16.mxu0 0
        %2216 = vmatpush1.bf16.msra.mxu0 %v608
        %2217 = vmatprep.subr.bf16.mxu0 0
        %2218 = vmatpush1.bf16.msra.mxu0 %v603
        %2219 = vmatprep.subr.bf16.mxu0 0
        %2220 = vmatpush1.bf16.msra.mxu0 %v598
        %2221 = vmatprep.subr.bf16.mxu0 0
        %2222 = vmatpush1.bf16.msra.mxu0 %v593
        %2223 = vmatprep.subr.bf16.mxu0 0
        %2224 = vmatpush1.bf16.msra.mxu0 %v588
        %2225 = vmatprep.subr.bf16.mxu0 0
        %2226 = vmatpush2.bf16.msra.mxu0 0
        %2227 = vmatprep.subr.bf16.mxu0 0
        %2228 = vmatpush2.bf16.msra.mxu0 0
        %2229 = vmatprep.subr.bf16.mxu0 0
        %2230 = vmatpush2.bf16.msra.mxu0 0
        %2231 = vmatprep.subr.bf16.mxu0 0
        %2232 = vmatpush2.bf16.msra.mxu0 0
        %2233 = vmatprep.subr.bf16.mxu0 0
        %2234 = vmatpush2.bf16.msra.mxu0 0
        %2235 = vmatprep.subr.bf16.mxu0 0
        %2236 = vmatpush2.bf16.msra.mxu0 0
        %2237 = vmatprep.subr.bf16.mxu0 0
        %2238 = vmatpush2.bf16.msra.mxu0 0
        %2239 = vmatprep.subr.bf16.mxu0 0
        %2240 = vmatpush2.bf16.msra.mxu0 0
        %2241 = vmatprep.mubr.bf16.mxu0 0
        %2242 = vmatmul.mubr.bf16.gmra.mxu0 %v2121
        %v2243 = vpop.f32.mrf.mxu0
        %v2244 = vadd.f32 0.0, %v2243
        %v2245 = vpop.f32.mrf.mxu0
        %v2246 = vpop.f32.mrf.mxu0
        %v2247 = vadd.f32 0.0, %v2246
        %v2248 = vpop.f32.mrf.mxu0
        %2249 = vdwg.mxu0
        %v2250 = vmax.f32 %v2158, 0.0
        %v2251 = vmax.f32 %v2160, 0.0
        %v2252 = vmax.f32 %v2201, 0.0
        %v2253 = vmax.f32 %v2203, 0.0
        %v2254 = vmax.f32 %v2244, 0.0
        %v2255 = vmax.f32 %v2162, 0.0
        %v2256 = vmax.f32 %v2164, 0.0
        %v2257 = vmax.f32 %v2205, 0.0
        %v2258 = vmax.f32 %v2207, 0.0
        %v2259 = vmax.f32 %v2247, 0.0
        %v2260 = vpack.c.bf16 %v2255, %v2250
        %v2261 = vpack.c.bf16 %v2256, %v2251
        %v2262 = vpack.c.bf16 %v2257, %v2252
        %v2263 = vpack.c.bf16 %v2258, %v2253
        %v2264 = vpack.c.bf16 %v2259, %v2254
        %s2265 = scalar_lea.vmem %s2, 240
        %v2266 = vld [vmem:[%s2265] sm:$0xf]
        %v2267 = vld [vmem:[%s2265 + $0x4] sm:$0xf]
        %v2268 = vld [vmem:[%s2265 + $0x8] sm:$0xf]
        %v2269 = vld [vmem:[%s2265 + $0xc] sm:$0xf]
        %v2270 = vld [vmem:[%s2265 + $0x10] sm:$0xf]
        %v2271 = vld [vmem:[%s2265 + $0x14] sm:$0xf]
        %v2272 = vld [vmem:[%s2265 + $0x18] sm:$0xf]
        %v2273 = vld [vmem:[%s2265 + $0x1c] sm:$0xf]
        %v2274 = vld [vmem:[%s2265 + $0x20] sm:$0xf]
        %v2275 = vld [vmem:[%s2265 + $0x24] sm:$0xf]
        %v2276 = vld [vmem:[%s2265 + $0x28] sm:$0xf]
        %v2277 = vld [vmem:[%s2265 + $0x2c] sm:$0xf]
        %v2278 = vld [vmem:[%s2265 + $0x30] sm:$0xf]
        %v2279 = vld [vmem:[%s2265 + $0x34] sm:$0xf]
        %v2280 = vld [vmem:[%s2265 + $0x38] sm:$0xf]
        %v2281 = vld [vmem:[%s2265 + $0x3c] sm:$0xf]
        %v2282 = vld [vmem:[%s2265 + $0x40] sm:$0xf]
        %v2283 = vld [vmem:[%s2265 + $0x44] sm:$0xf]
        %v2284 = vld [vmem:[%s2265 + $0x48] sm:$0xf]
        %v2285 = vld [vmem:[%s2265 + $0x4c] sm:$0xf]
        %v2306 = vunpack.c.l.b16 %v2266
        %v2307 = vunpack.c.l.b16 %v2267
        %v2308 = vunpack.c.l.b16 %v2268
        %v2309 = vunpack.c.l.b16 %v2269
        %v2310 = vunpack.c.l.b16 %v2270
        %v2311 = vunpack.c.l.b16 %v2271
        %v2312 = vunpack.c.l.b16 %v2272
        %v2313 = vunpack.c.l.b16 %v2273
        %v2314 = vunpack.c.l.b16 %v2274
        %v2315 = vunpack.c.l.b16 %v2275
        %v2316 = vunpack.c.l.b16 %v2276
        %v2317 = vunpack.c.l.b16 %v2277
        %v2318 = vunpack.c.l.b16 %v2278
        %v2319 = vunpack.c.l.b16 %v2279
        %v2320 = vunpack.c.l.b16 %v2280
        %v2321 = vunpack.c.l.b16 %v2281
        %v2322 = vunpack.c.l.b16 %v2282
        %v2323 = vunpack.c.l.b16 %v2283
        %v2324 = vunpack.c.l.b16 %v2284
        %v2325 = vunpack.c.l.b16 %v2285
        %v2326 = vpack.c.b16 %v2307, %v2306
        %v2327 = vpack.c.b16 %v2309, %v2308
        %v2328 = vpack.c.b16 %v2311, %v2310
        %v2329 = vpack.c.b16 %v2313, %v2312
        %v2330 = vpack.c.b16 %v2315, %v2314
        %v2331 = vpack.c.b16 %v2317, %v2316
        %v2332 = vpack.c.b16 %v2319, %v2318
        %v2333 = vpack.c.b16 %v2321, %v2320
        %v2334 = vpack.c.b16 %v2323, %v2322
        %v2335 = vpack.c.b16 %v2325, %v2324
        %v2347 = vsel %vm1078, %v2261, 0
        %2349 = vmatprep.subr.bf16.mxu0 0
        %2350 = vmatpush1.bf16.msra.mxu0 %v2333
        %2351 = vmatprep.subr.bf16.mxu0 0
        %2352 = vmatpush1.bf16.msra.mxu0 %v2332
        %2353 = vmatprep.subr.bf16.mxu0 0
        %2354 = vmatpush1.bf16.msra.mxu0 %v2331
        %2355 = vmatprep.subr.bf16.mxu0 0
        %2356 = vmatpush1.bf16.msra.mxu0 %v2330
        %2357 = vmatprep.subr.bf16.mxu0 0
        %2358 = vmatpush1.bf16.msra.mxu0 %v2329
        %2359 = vmatprep.subr.bf16.mxu0 0
        %2360 = vmatpush1.bf16.msra.mxu0 %v2328
        %2361 = vmatprep.subr.bf16.mxu0 0
        %2362 = vmatpush1.bf16.msra.mxu0 %v2327
        %2363 = vmatprep.subr.bf16.mxu0 0
        %2364 = vmatpush1.bf16.msra.mxu0 %v2326
        %2365 = vmatprep.subr.bf16.mxu0 0
        %2366 = vmatpush2.bf16.msra.mxu0 0
        %2367 = vmatprep.subr.bf16.mxu0 0
        %2368 = vmatpush2.bf16.msra.mxu0 0
        %2369 = vmatprep.subr.bf16.mxu0 0
        %2370 = vmatpush2.bf16.msra.mxu0 0
        %2371 = vmatprep.subr.bf16.mxu0 0
        %2372 = vmatpush2.bf16.msra.mxu0 0
        %2373 = vmatprep.subr.bf16.mxu0 0
        %2374 = vmatpush2.bf16.msra.mxu0 0
        %2375 = vmatprep.subr.bf16.mxu0 0
        %2376 = vmatpush2.bf16.msra.mxu0 0
        %2377 = vmatprep.subr.bf16.mxu0 0
        %2378 = vmatpush2.bf16.msra.mxu0 %v2335
        %2379 = vmatprep.subr.bf16.mxu0 0
        %2380 = vmatpush2.bf16.msra.mxu0 %v2334
        %2381 = vmatprep.mubr.bf16.mxu0 %v2347
        %2382 = vmatmul.mubr.bf16.gmra.mxu0 %v2260
        %v2383 = vpop.f32.mrf.mxu0
        %v2384 = vadd.f32 0.0, %v2383
        %v2385 = vpop.f32.mrf.mxu0
        %v2386 = vpop.f32.mrf.mxu0
        %v2387 = vadd.f32 0.0, %v2386
        %v2388 = vpop.f32.mrf.mxu0
        %2389 = vdwg.mxu0
        %v2390 = vadd.f32 %v1904, %v2384
        %v2391 = vadd.f32 %v1905, %v2387
        %2394 = vrot.lane.b32.xlu0 %v2260, 32
        %v2395 = vpop.permute.xlu0 %2394
        %2396 = vrot.lane.b32.xlu0 %v2261, 32
        %v2397 = vpop.permute.xlu0 %2396
        %v2398 = vsel %vm1233, %v2395, %v2397
        %v2401 = vsel %vm1078, %v2397, 0
        %2403 = vmatprep.subr.bf16.mxu0 0
        %2404 = vmatpush1.bf16.msra.mxu0 %v2333
        %2405 = vmatprep.subr.bf16.mxu0 0
        %2406 = vmatpush1.bf16.msra.mxu0 %v2332
        %2407 = vmatprep.subr.bf16.mxu0 0
        %2408 = vmatpush1.bf16.msra.mxu0 %v2331
        %2409 = vmatprep.subr.bf16.mxu0 0
        %2410 = vmatpush1.bf16.msra.mxu0 %v2330
        %2411 = vmatprep.subr.bf16.mxu0 0
        %2412 = vmatpush1.bf16.msra.mxu0 %v2329
        %2413 = vmatprep.subr.bf16.mxu0 0
        %2414 = vmatpush1.bf16.msra.mxu0 %v2328
        %2415 = vmatprep.subr.bf16.mxu0 0
        %2416 = vmatpush1.bf16.msra.mxu0 %v2327
        %2417 = vmatprep.subr.bf16.mxu0 0
        %2418 = vmatpush1.bf16.msra.mxu0 %v2326
        %2419 = vmatprep.subr.bf16.mxu0 0
        %2420 = vmatpush2.bf16.msra.mxu0 0
        %2421 = vmatprep.subr.bf16.mxu0 0
        %2422 = vmatpush2.bf16.msra.mxu0 0
        %2423 = vmatprep.subr.bf16.mxu0 0
        %2424 = vmatpush2.bf16.msra.mxu0 0
        %2425 = vmatprep.subr.bf16.mxu0 0
        %2426 = vmatpush2.bf16.msra.mxu0 0
        %2427 = vmatprep.subr.bf16.mxu0 0
        %2428 = vmatpush2.bf16.msra.mxu0 0
        %2429 = vmatprep.subr.bf16.mxu0 0
        %2430 = vmatpush2.bf16.msra.mxu0 0
        %2431 = vmatprep.subr.bf16.mxu0 0
        %2432 = vmatpush2.bf16.msra.mxu0 %v2335
        %2433 = vmatprep.subr.bf16.mxu0 0
        %2434 = vmatpush2.bf16.msra.mxu0 %v2334
        %2435 = vmatprep.mubr.bf16.mxu0 %v2401
        %2436 = vmatmul.mubr.bf16.gmra.mxu0 %v2398
        %v2437 = vpop.f32.mrf.mxu0
        %v2438 = vadd.f32 0.0, %v2437
        %v2439 = vpop.f32.mrf.mxu0
        %v2440 = vpop.f32.mrf.mxu0
        %v2441 = vadd.f32 0.0, %v2440
        %v2442 = vpop.f32.mrf.mxu0
        %2443 = vdwg.mxu0
        %v2444 = vadd.f32 %v1958, %v2438
        %v2445 = vadd.f32 %v1959, %v2441
        %2447 = vrot.lane.b32.xlu0 %v2261, 64
        %v2448 = vpop.permute.xlu0 %2447
        %2449 = vrot.lane.b32.xlu0 %v2262, 64
        %v2450 = vpop.permute.xlu0 %2449
        %v2451 = vsel %vm1337, %v2448, %v2450
        %v2454 = vsel %vm1078, %v2450, 0
        %2456 = vmatprep.subr.bf16.mxu0 0
        %2457 = vmatpush1.bf16.msra.mxu0 %v2333
        %2458 = vmatprep.subr.bf16.mxu0 0
        %2459 = vmatpush1.bf16.msra.mxu0 %v2332
        %2460 = vmatprep.subr.bf16.mxu0 0
        %2461 = vmatpush1.bf16.msra.mxu0 %v2331
        %2462 = vmatprep.subr.bf16.mxu0 0
        %2463 = vmatpush1.bf16.msra.mxu0 %v2330
        %2464 = vmatprep.subr.bf16.mxu0 0
        %2465 = vmatpush1.bf16.msra.mxu0 %v2329
        %2466 = vmatprep.subr.bf16.mxu0 0
        %2467 = vmatpush1.bf16.msra.mxu0 %v2328
        %2468 = vmatprep.subr.bf16.mxu0 0
        %2469 = vmatpush1.bf16.msra.mxu0 %v2327
        %2470 = vmatprep.subr.bf16.mxu0 0
        %2471 = vmatpush1.bf16.msra.mxu0 %v2326
        %2472 = vmatprep.subr.bf16.mxu0 0
        %2473 = vmatpush2.bf16.msra.mxu0 0
        %2474 = vmatprep.subr.bf16.mxu0 0
        %2475 = vmatpush2.bf16.msra.mxu0 0
        %2476 = vmatprep.subr.bf16.mxu0 0
        %2477 = vmatpush2.bf16.msra.mxu0 0
        %2478 = vmatprep.subr.bf16.mxu0 0
        %2479 = vmatpush2.bf16.msra.mxu0 0
        %2480 = vmatprep.subr.bf16.mxu0 0
        %2481 = vmatpush2.bf16.msra.mxu0 0
        %2482 = vmatprep.subr.bf16.mxu0 0
        %2483 = vmatpush2.bf16.msra.mxu0 0
        %2484 = vmatprep.subr.bf16.mxu0 0
        %2485 = vmatpush2.bf16.msra.mxu0 %v2335
        %2486 = vmatprep.subr.bf16.mxu0 0
        %2487 = vmatpush2.bf16.msra.mxu0 %v2334
        %2488 = vmatprep.mubr.bf16.mxu0 %v2454
        %2489 = vmatmul.mubr.bf16.gmra.mxu0 %v2451
        %v2490 = vpop.f32.mrf.mxu0
        %v2491 = vadd.f32 0.0, %v2490
        %v2492 = vpop.f32.mrf.mxu0
        %v2493 = vpop.f32.mrf.mxu0
        %v2494 = vadd.f32 0.0, %v2493
        %v2495 = vpop.f32.mrf.mxu0
        %2496 = vdwg.mxu0
        %v2497 = vadd.f32 %v2011, %v2491
        %v2498 = vadd.f32 %v2012, %v2494
        %2500 = vrot.lane.b32.xlu0 %v2262, 96
        %v2501 = vpop.permute.xlu0 %2500
        %2502 = vrot.lane.b32.xlu0 %v2263, 96
        %v2503 = vpop.permute.xlu0 %2502
        %v2504 = vsel %vm1440, %v2501, %v2503
        %v2507 = vsel %vm1078, %v2503, 0
        %2509 = vmatprep.subr.bf16.mxu0 0
        %2510 = vmatpush1.bf16.msra.mxu0 %v2333
        %2511 = vmatprep.subr.bf16.mxu0 0
        %2512 = vmatpush1.bf16.msra.mxu0 %v2332
        %2513 = vmatprep.subr.bf16.mxu0 0
        %2514 = vmatpush1.bf16.msra.mxu0 %v2331
        %2515 = vmatprep.subr.bf16.mxu0 0
        %2516 = vmatpush1.bf16.msra.mxu0 %v2330
        %2517 = vmatprep.subr.bf16.mxu0 0
        %2518 = vmatpush1.bf16.msra.mxu0 %v2329
        %2519 = vmatprep.subr.bf16.mxu0 0
        %2520 = vmatpush1.bf16.msra.mxu0 %v2328
        %2521 = vmatprep.subr.bf16.mxu0 0
        %2522 = vmatpush1.bf16.msra.mxu0 %v2327
        %2523 = vmatprep.subr.bf16.mxu0 0
        %2524 = vmatpush1.bf16.msra.mxu0 %v2326
        %2525 = vmatprep.subr.bf16.mxu0 0
        %2526 = vmatpush2.bf16.msra.mxu0 0
        %2527 = vmatprep.subr.bf16.mxu0 0
        %2528 = vmatpush2.bf16.msra.mxu0 0
        %2529 = vmatprep.subr.bf16.mxu0 0
        %2530 = vmatpush2.bf16.msra.mxu0 0
        %2531 = vmatprep.subr.bf16.mxu0 0
        %2532 = vmatpush2.bf16.msra.mxu0 0
        %2533 = vmatprep.subr.bf16.mxu0 0
        %2534 = vmatpush2.bf16.msra.mxu0 0
        %2535 = vmatprep.subr.bf16.mxu0 0
        %2536 = vmatpush2.bf16.msra.mxu0 0
        %2537 = vmatprep.subr.bf16.mxu0 0
        %2538 = vmatpush2.bf16.msra.mxu0 %v2335
        %2539 = vmatprep.subr.bf16.mxu0 0
        %2540 = vmatpush2.bf16.msra.mxu0 %v2334
        %2541 = vmatprep.mubr.bf16.mxu0 %v2507
        %2542 = vmatmul.mubr.bf16.gmra.mxu0 %v2504
        %v2543 = vpop.f32.mrf.mxu0
        %v2544 = vadd.f32 0.0, %v2543
        %v2545 = vpop.f32.mrf.mxu0
        %v2546 = vpop.f32.mrf.mxu0
        %v2547 = vadd.f32 0.0, %v2546
        %v2548 = vpop.f32.mrf.mxu0
        %2549 = vdwg.mxu0
        %v2550 = vadd.f32 %v2064, %v2544
        %v2551 = vadd.f32 %v2065, %v2547
        %v2553 = vsel %vm1078, %v2264, 0
        %2555 = vmatprep.subr.bf16.mxu0 0
        %2556 = vmatpush1.bf16.msra.mxu0 %v2333
        %2557 = vmatprep.subr.bf16.mxu0 0
        %2558 = vmatpush1.bf16.msra.mxu0 %v2332
        %2559 = vmatprep.subr.bf16.mxu0 0
        %2560 = vmatpush1.bf16.msra.mxu0 %v2331
        %2561 = vmatprep.subr.bf16.mxu0 0
        %2562 = vmatpush1.bf16.msra.mxu0 %v2330
        %2563 = vmatprep.subr.bf16.mxu0 0
        %2564 = vmatpush1.bf16.msra.mxu0 %v2329
        %2565 = vmatprep.subr.bf16.mxu0 0
        %2566 = vmatpush1.bf16.msra.mxu0 %v2328
        %2567 = vmatprep.subr.bf16.mxu0 0
        %2568 = vmatpush1.bf16.msra.mxu0 %v2327
        %2569 = vmatprep.subr.bf16.mxu0 0
        %2570 = vmatpush1.bf16.msra.mxu0 %v2326
        %2571 = vmatprep.subr.bf16.mxu0 0
        %2572 = vmatpush2.bf16.msra.mxu0 0
        %2573 = vmatprep.subr.bf16.mxu0 0
        %2574 = vmatpush2.bf16.msra.mxu0 0
        %2575 = vmatprep.subr.bf16.mxu0 0
        %2576 = vmatpush2.bf16.msra.mxu0 0
        %2577 = vmatprep.subr.bf16.mxu0 0
        %2578 = vmatpush2.bf16.msra.mxu0 0
        %2579 = vmatprep.subr.bf16.mxu0 0
        %2580 = vmatpush2.bf16.msra.mxu0 0
        %2581 = vmatprep.subr.bf16.mxu0 0
        %2582 = vmatpush2.bf16.msra.mxu0 0
        %2583 = vmatprep.subr.bf16.mxu0 0
        %2584 = vmatpush2.bf16.msra.mxu0 %v2335
        %2585 = vmatprep.subr.bf16.mxu0 0
        %2586 = vmatpush2.bf16.msra.mxu0 %v2334
        %2587 = vmatprep.mubr.bf16.mxu0 %v2553
        %2588 = vmatmul.mubr.bf16.gmra.mxu0 %v2263
        %v2589 = vpop.f32.mrf.mxu0
        %v2590 = vadd.f32 0.0, %v2589
        %v2591 = vpop.f32.mrf.mxu0
        %v2592 = vpop.f32.mrf.mxu0
        %v2593 = vadd.f32 0.0, %v2592
        %v2594 = vpop.f32.mrf.mxu0
        %2595 = vdwg.mxu0
        %v2596 = vadd.f32 %v2110, %v2590
        %v2597 = vadd.f32 %v2111, %v2593
        %s2598 = scalar_lea.vmem %s357, 32 [#allocation2]
        %v2599 = vld [vmem:[%s2598] sm:$0xf]
        %v2600 = vld [vmem:[%s2598 + $0x4] sm:$0xf]
        %v2603 = vunpack.c.l.b16 %v2599
        %v2604 = vunpack.c.l.b16 %v2600
        %v2605 = vpack.c.b16 %v2604, %v2603
        %v2607 = vsel %vm659, %v2605, 0
        %2609 = vmatprep.subr.bf16.mxu0 %v671
        %2610 = vmatpush1.bf16.msra.mxu0 %v668
        %2611 = vmatprep.subr.bf16.mxu0 %v615
        %2612 = vmatpush1.bf16.msra.mxu0 %v614
        %2613 = vmatprep.subr.bf16.mxu0 %v610
        %2614 = vmatpush1.bf16.msra.mxu0 %v609
        %2615 = vmatprep.subr.bf16.mxu0 %v605
        %2616 = vmatpush1.bf16.msra.mxu0 %v604
        %2617 = vmatprep.subr.bf16.mxu0 %v600
        %2618 = vmatpush1.bf16.msra.mxu0 %v599
        %2619 = vmatprep.subr.bf16.mxu0 %v595
        %2620 = vmatpush1.bf16.msra.mxu0 %v594
        %2621 = vmatprep.subr.bf16.mxu0 %v590
        %2622 = vmatpush1.bf16.msra.mxu0 %v589
        %2623 = vmatprep.subr.bf16.mxu0 %v585
        %2624 = vmatpush1.bf16.msra.mxu0 %v584
        %2625 = vmatprep.subr.bf16.mxu0 0
        %2626 = vmatpush2.bf16.msra.mxu0 0
        %2627 = vmatprep.subr.bf16.mxu0 0
        %2628 = vmatpush2.bf16.msra.mxu0 0
        %2629 = vmatprep.subr.bf16.mxu0 0
        %2630 = vmatpush2.bf16.msra.mxu0 0
        %2631 = vmatprep.subr.bf16.mxu0 0
        %2632 = vmatpush2.bf16.msra.mxu0 0
        %2633 = vmatprep.subr.bf16.mxu0 0
        %2634 = vmatpush2.bf16.msra.mxu0 0
        %2635 = vmatprep.subr.bf16.mxu0 0
        %2636 = vmatpush2.bf16.msra.mxu0 0
        %2637 = vmatprep.subr.bf16.mxu0 0
        %2638 = vmatpush2.bf16.msra.mxu0 0
        %2639 = vmatprep.subr.bf16.mxu0 0
        %2640 = vmatpush2.bf16.msra.mxu0 0
        %2641 = vmatprep.mubr.bf16.mxu0 0
        %2642 = vmatmul.mubr.bf16.gmra.mxu0 %v2607
        %v2643 = vpop.f32.mrf.mxu0
        %v2644 = vadd.f32 0.0, %v2643
        %v2645 = vpop.f32.mrf.mxu0
        %v2646 = vadd.f32 0.0, %v2645
        %v2647 = vpop.f32.mrf.mxu0
        %v2648 = vadd.f32 0.0, %v2647
        %v2649 = vpop.f32.mrf.mxu0
        %v2650 = vadd.f32 0.0, %v2649
        %2651 = vdwg.mxu0
        %2652 = vmatprep.subr.bf16.mxu0 %v677
        %2653 = vmatpush1.bf16.msra.mxu0 %v674
        %2654 = vmatprep.subr.bf16.mxu0 %v617
        %2655 = vmatpush1.bf16.msra.mxu0 %v616
        %2656 = vmatprep.subr.bf16.mxu0 %v612
        %2657 = vmatpush1.bf16.msra.mxu0 %v611
        %2658 = vmatprep.subr.bf16.mxu0 %v607
        %2659 = vmatpush1.bf16.msra.mxu0 %v606
        %2660 = vmatprep.subr.bf16.mxu0 %v602
        %2661 = vmatpush1.bf16.msra.mxu0 %v601
        %2662 = vmatprep.subr.bf16.mxu0 %v597
        %2663 = vmatpush1.bf16.msra.mxu0 %v596
        %2664 = vmatprep.subr.bf16.mxu0 %v592
        %2665 = vmatpush1.bf16.msra.mxu0 %v591
        %2666 = vmatprep.subr.bf16.mxu0 %v587
        %2667 = vmatpush1.bf16.msra.mxu0 %v586
        %2668 = vmatprep.subr.bf16.mxu0 0
        %2669 = vmatpush2.bf16.msra.mxu0 0
        %2670 = vmatprep.subr.bf16.mxu0 0
        %2671 = vmatpush2.bf16.msra.mxu0 0
        %2672 = vmatprep.subr.bf16.mxu0 0
        %2673 = vmatpush2.bf16.msra.mxu0 0
        %2674 = vmatprep.subr.bf16.mxu0 0
        %2675 = vmatpush2.bf16.msra.mxu0 0
        %2676 = vmatprep.subr.bf16.mxu0 0
        %2677 = vmatpush2.bf16.msra.mxu0 0
        %2678 = vmatprep.subr.bf16.mxu0 0
        %2679 = vmatpush2.bf16.msra.mxu0 0
        %2680 = vmatprep.subr.bf16.mxu0 0
        %2681 = vmatpush2.bf16.msra.mxu0 0
        %2682 = vmatprep.subr.bf16.mxu0 0
        %2683 = vmatpush2.bf16.msra.mxu0 0
        %2684 = vmatprep.mubr.bf16.mxu0 0
        %2685 = vmatmul.mubr.bf16.gmra.mxu0 %v2607
        %v2686 = vpop.f32.mrf.mxu0
        %v2687 = vadd.f32 0.0, %v2686
        %v2688 = vpop.f32.mrf.mxu0
        %v2689 = vadd.f32 0.0, %v2688
        %v2690 = vpop.f32.mrf.mxu0
        %v2691 = vadd.f32 0.0, %v2690
        %v2692 = vpop.f32.mrf.mxu0
        %v2693 = vadd.f32 0.0, %v2692
        %2694 = vdwg.mxu0
        %2695 = vmatprep.subr.bf16.mxu0 0
        %2696 = vmatpush1.bf16.msra.mxu0 %v680
        %2697 = vmatprep.subr.bf16.mxu0 0
        %2698 = vmatpush1.bf16.msra.mxu0 %v618
        %2699 = vmatprep.subr.bf16.mxu0 0
        %2700 = vmatpush1.bf16.msra.mxu0 %v613
        %2701 = vmatprep.subr.bf16.mxu0 0
        %2702 = vmatpush1.bf16.msra.mxu0 %v608
        %2703 = vmatprep.subr.bf16.mxu0 0
        %2704 = vmatpush1.bf16.msra.mxu0 %v603
        %2705 = vmatprep.subr.bf16.mxu0 0
        %2706 = vmatpush1.bf16.msra.mxu0 %v598
        %2707 = vmatprep.subr.bf16.mxu0 0
        %2708 = vmatpush1.bf16.msra.mxu0 %v593
        %2709 = vmatprep.subr.bf16.mxu0 0
        %2710 = vmatpush1.bf16.msra.mxu0 %v588
        %2711 = vmatprep.subr.bf16.mxu0 0
        %2712 = vmatpush2.bf16.msra.mxu0 0
        %2713 = vmatprep.subr.bf16.mxu0 0
        %2714 = vmatpush2.bf16.msra.mxu0 0
        %2715 = vmatprep.subr.bf16.mxu0 0
        %2716 = vmatpush2.bf16.msra.mxu0 0
        %2717 = vmatprep.subr.bf16.mxu0 0
        %2718 = vmatpush2.bf16.msra.mxu0 0
        %2719 = vmatprep.subr.bf16.mxu0 0
        %2720 = vmatpush2.bf16.msra.mxu0 0
        %2721 = vmatprep.subr.bf16.mxu0 0
        %2722 = vmatpush2.bf16.msra.mxu0 0
        %2723 = vmatprep.subr.bf16.mxu0 0
        %2724 = vmatpush2.bf16.msra.mxu0 0
        %2725 = vmatprep.subr.bf16.mxu0 0
        %2726 = vmatpush2.bf16.msra.mxu0 0
        %2727 = vmatprep.mubr.bf16.mxu0 0
        %2728 = vmatmul.mubr.bf16.gmra.mxu0 %v2607
        %v2729 = vpop.f32.mrf.mxu0
        %v2730 = vadd.f32 0.0, %v2729
        %v2731 = vpop.f32.mrf.mxu0
        %v2732 = vpop.f32.mrf.mxu0
        %v2733 = vadd.f32 0.0, %v2732
        %v2734 = vpop.f32.mrf.mxu0
        %2735 = vdwg.mxu0
        %v2736 = vmax.f32 %v2644, 0.0
        %v2737 = vmax.f32 %v2646, 0.0
        %v2738 = vmax.f32 %v2687, 0.0
        %v2739 = vmax.f32 %v2689, 0.0
        %v2740 = vmax.f32 %v2730, 0.0
        %v2741 = vmax.f32 %v2648, 0.0
        %v2742 = vmax.f32 %v2650, 0.0
        %v2743 = vmax.f32 %v2691, 0.0
        %v2744 = vmax.f32 %v2693, 0.0
        %v2745 = vmax.f32 %v2733, 0.0
        %v2746 = vpack.c.bf16 %v2741, %v2736
        %v2747 = vpack.c.bf16 %v2742, %v2737
        %v2748 = vpack.c.bf16 %v2743, %v2738
        %v2749 = vpack.c.bf16 %v2744, %v2739
        %v2750 = vpack.c.bf16 %v2745, %v2740
        %s2751 = scalar_lea.vmem %s2, 320
        %v2752 = vld [vmem:[%s2751] sm:$0xf]
        %v2753 = vld [vmem:[%s2751 + $0x4] sm:$0xf]
        %v2754 = vld [vmem:[%s2751 + $0x8] sm:$0xf]
        %v2755 = vld [vmem:[%s2751 + $0xc] sm:$0xf]
        %v2756 = vld [vmem:[%s2751 + $0x10] sm:$0xf]
        %v2757 = vld [vmem:[%s2751 + $0x14] sm:$0xf]
        %v2758 = vld [vmem:[%s2751 + $0x18] sm:$0xf]
        %v2759 = vld [vmem:[%s2751 + $0x1c] sm:$0xf]
        %v2760 = vld [vmem:[%s2751 + $0x20] sm:$0xf]
        %v2761 = vld [vmem:[%s2751 + $0x24] sm:$0xf]
        %v2762 = vld [vmem:[%s2751 + $0x28] sm:$0xf]
        %v2763 = vld [vmem:[%s2751 + $0x2c] sm:$0xf]
        %v2764 = vld [vmem:[%s2751 + $0x30] sm:$0xf]
        %v2765 = vld [vmem:[%s2751 + $0x34] sm:$0xf]
        %v2766 = vld [vmem:[%s2751 + $0x38] sm:$0xf]
        %v2767 = vld [vmem:[%s2751 + $0x3c] sm:$0xf]
        %v2768 = vld [vmem:[%s2751 + $0x40] sm:$0xf]
        %v2769 = vld [vmem:[%s2751 + $0x44] sm:$0xf]
        %v2770 = vld [vmem:[%s2751 + $0x48] sm:$0xf]
        %v2771 = vld [vmem:[%s2751 + $0x4c] sm:$0xf]
        %v2792 = vunpack.c.l.b16 %v2752
        %v2793 = vunpack.c.l.b16 %v2753
        %v2794 = vunpack.c.l.b16 %v2754
        %v2795 = vunpack.c.l.b16 %v2755
        %v2796 = vunpack.c.l.b16 %v2756
        %v2797 = vunpack.c.l.b16 %v2757
        %v2798 = vunpack.c.l.b16 %v2758
        %v2799 = vunpack.c.l.b16 %v2759
        %v2800 = vunpack.c.l.b16 %v2760
        %v2801 = vunpack.c.l.b16 %v2761
        %v2802 = vunpack.c.l.b16 %v2762
        %v2803 = vunpack.c.l.b16 %v2763
        %v2804 = vunpack.c.l.b16 %v2764
        %v2805 = vunpack.c.l.b16 %v2765
        %v2806 = vunpack.c.l.b16 %v2766
        %v2807 = vunpack.c.l.b16 %v2767
        %v2808 = vunpack.c.l.b16 %v2768
        %v2809 = vunpack.c.l.b16 %v2769
        %v2810 = vunpack.c.l.b16 %v2770
        %v2811 = vunpack.c.l.b16 %v2771
        %v2812 = vpack.c.b16 %v2793, %v2792
        %v2813 = vpack.c.b16 %v2795, %v2794
        %v2814 = vpack.c.b16 %v2797, %v2796
        %v2815 = vpack.c.b16 %v2799, %v2798
        %v2816 = vpack.c.b16 %v2801, %v2800
        %v2817 = vpack.c.b16 %v2803, %v2802
        %v2818 = vpack.c.b16 %v2805, %v2804
        %v2819 = vpack.c.b16 %v2807, %v2806
        %v2820 = vpack.c.b16 %v2809, %v2808
        %v2821 = vpack.c.b16 %v2811, %v2810
        %v2833 = vsel %vm1078, %v2747, 0
        %2835 = vmatprep.subr.bf16.mxu0 0
        %2836 = vmatpush1.bf16.msra.mxu0 %v2819
        %2837 = vmatprep.subr.bf16.mxu0 0
        %2838 = vmatpush1.bf16.msra.mxu0 %v2818
        %2839 = vmatprep.subr.bf16.mxu0 0
        %2840 = vmatpush1.bf16.msra.mxu0 %v2817
        %2841 = vmatprep.subr.bf16.mxu0 0
        %2842 = vmatpush1.bf16.msra.mxu0 %v2816
        %2843 = vmatprep.subr.bf16.mxu0 0
        %2844 = vmatpush1.bf16.msra.mxu0 %v2815
        %2845 = vmatprep.subr.bf16.mxu0 0
        %2846 = vmatpush1.bf16.msra.mxu0 %v2814
        %2847 = vmatprep.subr.bf16.mxu0 0
        %2848 = vmatpush1.bf16.msra.mxu0 %v2813
        %2849 = vmatprep.subr.bf16.mxu0 0
        %2850 = vmatpush1.bf16.msra.mxu0 %v2812
        %2851 = vmatprep.subr.bf16.mxu0 0
        %2852 = vmatpush2.bf16.msra.mxu0 0
        %2853 = vmatprep.subr.bf16.mxu0 0
        %2854 = vmatpush2.bf16.msra.mxu0 0
        %2855 = vmatprep.subr.bf16.mxu0 0
        %2856 = vmatpush2.bf16.msra.mxu0 0
        %2857 = vmatprep.subr.bf16.mxu0 0
        %2858 = vmatpush2.bf16.msra.mxu0 0
        %2859 = vmatprep.subr.bf16.mxu0 0
        %2860 = vmatpush2.bf16.msra.mxu0 0
        %2861 = vmatprep.subr.bf16.mxu0 0
        %2862 = vmatpush2.bf16.msra.mxu0 0
        %2863 = vmatprep.subr.bf16.mxu0 0
        %2864 = vmatpush2.bf16.msra.mxu0 %v2821
        %2865 = vmatprep.subr.bf16.mxu0 0
        %2866 = vmatpush2.bf16.msra.mxu0 %v2820
        %2867 = vmatprep.mubr.bf16.mxu0 %v2833
        %2868 = vmatmul.mubr.bf16.gmra.mxu0 %v2746
        %v2869 = vpop.f32.mrf.mxu0
        %v2870 = vadd.f32 0.0, %v2869
        %v2871 = vpop.f32.mrf.mxu0
        %v2872 = vpop.f32.mrf.mxu0
        %v2873 = vadd.f32 0.0, %v2872
        %v2874 = vpop.f32.mrf.mxu0
        %2875 = vdwg.mxu0
        %v2876 = vadd.f32 %v2390, %v2870
        %v2877 = vadd.f32 %v2391, %v2873
        %2880 = vrot.lane.b32.xlu0 %v2746, 32
        %v2881 = vpop.permute.xlu0 %2880
        %2882 = vrot.lane.b32.xlu0 %v2747, 32
        %v2883 = vpop.permute.xlu0 %2882
        %v2884 = vsel %vm1233, %v2881, %v2883
        %v2887 = vsel %vm1078, %v2883, 0
        %2889 = vmatprep.subr.bf16.mxu0 0
        %2890 = vmatpush1.bf16.msra.mxu0 %v2819
        %2891 = vmatprep.subr.bf16.mxu0 0
        %2892 = vmatpush1.bf16.msra.mxu0 %v2818
        %2893 = vmatprep.subr.bf16.mxu0 0
        %2894 = vmatpush1.bf16.msra.mxu0 %v2817
        %2895 = vmatprep.subr.bf16.mxu0 0
        %2896 = vmatpush1.bf16.msra.mxu0 %v2816
        %2897 = vmatprep.subr.bf16.mxu0 0
        %2898 = vmatpush1.bf16.msra.mxu0 %v2815
        %2899 = vmatprep.subr.bf16.mxu0 0
        %2900 = vmatpush1.bf16.msra.mxu0 %v2814
        %2901 = vmatprep.subr.bf16.mxu0 0
        %2902 = vmatpush1.bf16.msra.mxu0 %v2813
        %2903 = vmatprep.subr.bf16.mxu0 0
        %2904 = vmatpush1.bf16.msra.mxu0 %v2812
        %2905 = vmatprep.subr.bf16.mxu0 0
        %2906 = vmatpush2.bf16.msra.mxu0 0
        %2907 = vmatprep.subr.bf16.mxu0 0
        %2908 = vmatpush2.bf16.msra.mxu0 0
        %2909 = vmatprep.subr.bf16.mxu0 0
        %2910 = vmatpush2.bf16.msra.mxu0 0
        %2911 = vmatprep.subr.bf16.mxu0 0
        %2912 = vmatpush2.bf16.msra.mxu0 0
        %2913 = vmatprep.subr.bf16.mxu0 0
        %2914 = vmatpush2.bf16.msra.mxu0 0
        %2915 = vmatprep.subr.bf16.mxu0 0
        %2916 = vmatpush2.bf16.msra.mxu0 0
        %2917 = vmatprep.subr.bf16.mxu0 0
        %2918 = vmatpush2.bf16.msra.mxu0 %v2821
        %2919 = vmatprep.subr.bf16.mxu0 0
        %2920 = vmatpush2.bf16.msra.mxu0 %v2820
        %2921 = vmatprep.mubr.bf16.mxu0 %v2887
        %2922 = vmatmul.mubr.bf16.gmra.mxu0 %v2884
        %v2923 = vpop.f32.mrf.mxu0
        %v2924 = vadd.f32 0.0, %v2923
        %v2925 = vpop.f32.mrf.mxu0
        %v2926 = vpop.f32.mrf.mxu0
        %v2927 = vadd.f32 0.0, %v2926
        %v2928 = vpop.f32.mrf.mxu0
        %2929 = vdwg.mxu0
        %v2930 = vadd.f32 %v2444, %v2924
        %v2931 = vadd.f32 %v2445, %v2927
        %2933 = vrot.lane.b32.xlu0 %v2747, 64
        %v2934 = vpop.permute.xlu0 %2933
        %2935 = vrot.lane.b32.xlu0 %v2748, 64
        %v2936 = vpop.permute.xlu0 %2935
        %v2937 = vsel %vm1337, %v2934, %v2936
        %v2940 = vsel %vm1078, %v2936, 0
        %2942 = vmatprep.subr.bf16.mxu0 0
        %2943 = vmatpush1.bf16.msra.mxu0 %v2819
        %2944 = vmatprep.subr.bf16.mxu0 0
        %2945 = vmatpush1.bf16.msra.mxu0 %v2818
        %2946 = vmatprep.subr.bf16.mxu0 0
        %2947 = vmatpush1.bf16.msra.mxu0 %v2817
        %2948 = vmatprep.subr.bf16.mxu0 0
        %2949 = vmatpush1.bf16.msra.mxu0 %v2816
        %2950 = vmatprep.subr.bf16.mxu0 0
        %2951 = vmatpush1.bf16.msra.mxu0 %v2815
        %2952 = vmatprep.subr.bf16.mxu0 0
        %2953 = vmatpush1.bf16.msra.mxu0 %v2814
        %2954 = vmatprep.subr.bf16.mxu0 0
        %2955 = vmatpush1.bf16.msra.mxu0 %v2813
        %2956 = vmatprep.subr.bf16.mxu0 0
        %2957 = vmatpush1.bf16.msra.mxu0 %v2812
        %2958 = vmatprep.subr.bf16.mxu0 0
        %2959 = vmatpush2.bf16.msra.mxu0 0
        %2960 = vmatprep.subr.bf16.mxu0 0
        %2961 = vmatpush2.bf16.msra.mxu0 0
        %2962 = vmatprep.subr.bf16.mxu0 0
        %2963 = vmatpush2.bf16.msra.mxu0 0
        %2964 = vmatprep.subr.bf16.mxu0 0
        %2965 = vmatpush2.bf16.msra.mxu0 0
        %2966 = vmatprep.subr.bf16.mxu0 0
        %2967 = vmatpush2.bf16.msra.mxu0 0
        %2968 = vmatprep.subr.bf16.mxu0 0
        %2969 = vmatpush2.bf16.msra.mxu0 0
        %2970 = vmatprep.subr.bf16.mxu0 0
        %2971 = vmatpush2.bf16.msra.mxu0 %v2821
        %2972 = vmatprep.subr.bf16.mxu0 0
        %2973 = vmatpush2.bf16.msra.mxu0 %v2820
        %2974 = vmatprep.mubr.bf16.mxu0 %v2940
        %2975 = vmatmul.mubr.bf16.gmra.mxu0 %v2937
        %v2976 = vpop.f32.mrf.mxu0
        %v2977 = vadd.f32 0.0, %v2976
        %v2978 = vpop.f32.mrf.mxu0
        %v2979 = vpop.f32.mrf.mxu0
        %v2980 = vadd.f32 0.0, %v2979
        %v2981 = vpop.f32.mrf.mxu0
        %2982 = vdwg.mxu0
        %v2983 = vadd.f32 %v2497, %v2977
        %v2984 = vadd.f32 %v2498, %v2980
        %2986 = vrot.lane.b32.xlu0 %v2748, 96
        %v2987 = vpop.permute.xlu0 %2986
        %2988 = vrot.lane.b32.xlu0 %v2749, 96
        %v2989 = vpop.permute.xlu0 %2988
        %v2990 = vsel %vm1440, %v2987, %v2989
        %v2993 = vsel %vm1078, %v2989, 0
        %2995 = vmatprep.subr.bf16.mxu0 0
        %2996 = vmatpush1.bf16.msra.mxu0 %v2819
        %2997 = vmatprep.subr.bf16.mxu0 0
        %2998 = vmatpush1.bf16.msra.mxu0 %v2818
        %2999 = vmatprep.subr.bf16.mxu0 0
        %3000 = vmatpush1.bf16.msra.mxu0 %v2817
        %3001 = vmatprep.subr.bf16.mxu0 0
        %3002 = vmatpush1.bf16.msra.mxu0 %v2816
        %3003 = vmatprep.subr.bf16.mxu0 0
        %3004 = vmatpush1.bf16.msra.mxu0 %v2815
        %3005 = vmatprep.subr.bf16.mxu0 0
        %3006 = vmatpush1.bf16.msra.mxu0 %v2814
        %3007 = vmatprep.subr.bf16.mxu0 0
        %3008 = vmatpush1.bf16.msra.mxu0 %v2813
        %3009 = vmatprep.subr.bf16.mxu0 0
        %3010 = vmatpush1.bf16.msra.mxu0 %v2812
        %3011 = vmatprep.subr.bf16.mxu0 0
        %3012 = vmatpush2.bf16.msra.mxu0 0
        %3013 = vmatprep.subr.bf16.mxu0 0
        %3014 = vmatpush2.bf16.msra.mxu0 0
        %3015 = vmatprep.subr.bf16.mxu0 0
        %3016 = vmatpush2.bf16.msra.mxu0 0
        %3017 = vmatprep.subr.bf16.mxu0 0
        %3018 = vmatpush2.bf16.msra.mxu0 0
        %3019 = vmatprep.subr.bf16.mxu0 0
        %3020 = vmatpush2.bf16.msra.mxu0 0
        %3021 = vmatprep.subr.bf16.mxu0 0
        %3022 = vmatpush2.bf16.msra.mxu0 0
        %3023 = vmatprep.subr.bf16.mxu0 0
        %3024 = vmatpush2.bf16.msra.mxu0 %v2821
        %3025 = vmatprep.subr.bf16.mxu0 0
        %3026 = vmatpush2.bf16.msra.mxu0 %v2820
        %3027 = vmatprep.mubr.bf16.mxu0 %v2993
        %3028 = vmatmul.mubr.bf16.gmra.mxu0 %v2990
        %v3029 = vpop.f32.mrf.mxu0
        %v3030 = vadd.f32 0.0, %v3029
        %v3031 = vpop.f32.mrf.mxu0
        %v3032 = vpop.f32.mrf.mxu0
        %v3033 = vadd.f32 0.0, %v3032
        %v3034 = vpop.f32.mrf.mxu0
        %3035 = vdwg.mxu0
        %v3036 = vadd.f32 %v2550, %v3030
        %v3037 = vadd.f32 %v2551, %v3033
        %v3039 = vsel %vm1078, %v2750, 0
        %3041 = vmatprep.subr.bf16.mxu0 0
        %3042 = vmatpush1.bf16.msra.mxu0 %v2819
        %3043 = vmatprep.subr.bf16.mxu0 0
        %3044 = vmatpush1.bf16.msra.mxu0 %v2818
        %3045 = vmatprep.subr.bf16.mxu0 0
        %3046 = vmatpush1.bf16.msra.mxu0 %v2817
        %3047 = vmatprep.subr.bf16.mxu0 0
        %3048 = vmatpush1.bf16.msra.mxu0 %v2816
        %3049 = vmatprep.subr.bf16.mxu0 0
        %3050 = vmatpush1.bf16.msra.mxu0 %v2815
        %3051 = vmatprep.subr.bf16.mxu0 0
        %3052 = vmatpush1.bf16.msra.mxu0 %v2814
        %3053 = vmatprep.subr.bf16.mxu0 0
        %3054 = vmatpush1.bf16.msra.mxu0 %v2813
        %3055 = vmatprep.subr.bf16.mxu0 0
        %3056 = vmatpush1.bf16.msra.mxu0 %v2812
        %3057 = vmatprep.subr.bf16.mxu0 0
        %3058 = vmatpush2.bf16.msra.mxu0 0
        %3059 = vmatprep.subr.bf16.mxu0 0
        %3060 = vmatpush2.bf16.msra.mxu0 0
        %3061 = vmatprep.subr.bf16.mxu0 0
        %3062 = vmatpush2.bf16.msra.mxu0 0
        %3063 = vmatprep.subr.bf16.mxu0 0
        %3064 = vmatpush2.bf16.msra.mxu0 0
        %3065 = vmatprep.subr.bf16.mxu0 0
        %3066 = vmatpush2.bf16.msra.mxu0 0
        %3067 = vmatprep.subr.bf16.mxu0 0
        %3068 = vmatpush2.bf16.msra.mxu0 0
        %3069 = vmatprep.subr.bf16.mxu0 0
        %3070 = vmatpush2.bf16.msra.mxu0 %v2821
        %3071 = vmatprep.subr.bf16.mxu0 0
        %3072 = vmatpush2.bf16.msra.mxu0 %v2820
        %3073 = vmatprep.mubr.bf16.mxu0 %v3039
        %3074 = vmatmul.mubr.bf16.gmra.mxu0 %v2749
        %v3075 = vpop.f32.mrf.mxu0
        %v3076 = vadd.f32 0.0, %v3075
        %v3077 = vpop.f32.mrf.mxu0
        %v3078 = vpop.f32.mrf.mxu0
        %v3079 = vadd.f32 0.0, %v3078
        %v3080 = vpop.f32.mrf.mxu0
        %3081 = vdwg.mxu0
        %v3082 = vadd.f32 %v2596, %v3076
        %v3083 = vadd.f32 %v2597, %v3079
        %v3085 = vlaneseq
        %v3086 = vshrl.u32 %v3085, 7
        %v3087 = vsub.s32 0, %v3086
        %v3088 = vrot.slane %v448, %v3087
        %v3090 = vadd.f32 %v2876, %v3088
        %v3091 = vadd.f32 %v2877, %v3088
        %v3092 = vmax.f32 %v3090, 0.0
        %v3093 = vmax.f32 %v3091, 0.0
        %v3094 = vpack.c.bf16 %v3093, %v3092
        %v3095 = vld [vmem:[%s4] sm:$0xf]
        %v3096 = vld [vmem:[%s4 + $0x4] sm:$0xf]
        %v3097 = vld [vmem:[%s4 + $0x8] sm:$0xf]
        %v3098 = vld [vmem:[%s4 + $0xc] sm:$0xf]
        %v3099 = vadd.f32 %v2930, %v3088
        %v3100 = vadd.f32 %v2931, %v3088
        %v3101 = vmax.f32 %v3099, 0.0
        %v3102 = vmax.f32 %v3100, 0.0
        %v3103 = vpack.c.bf16 %v3102, %v3101
        %s3104 = scalar_lea.vmem %s4, 16
        %v3105 = vld [vmem:[%s3104] sm:$0xf]
        %v3106 = vld [vmem:[%s3104 + $0x4] sm:$0xf]
        %v3107 = vld [vmem:[%s3104 + $0x8] sm:$0xf]
        %v3108 = vld [vmem:[%s3104 + $0xc] sm:$0xf]
        %v3113 = vunpack.c.l.b16 %v3105
        %v3114 = vunpack.c.l.b16 %v3106
        %v3115 = vunpack.c.l.b16 %v3107
        %v3116 = vunpack.c.l.b16 %v3108
        %v3117 = vpack.c.b16 %v3114, %v3113
        %v3118 = vpack.c.b16 %v3116, %v3115
        %v3122 = vsel %vm1078, %v3103, 0
        %3124 = vmatprep.subr.bf16.mxu0 0
        %3125 = vmatpush1.bf16.msra.mxu0 0
        %3126 = vmatprep.subr.bf16.mxu0 0
        %3127 = vmatpush1.bf16.msra.mxu0 0
        %3128 = vmatprep.subr.bf16.mxu0 0
        %3129 = vmatpush1.bf16.msra.mxu0 0
        %3130 = vmatprep.subr.bf16.mxu0 0
        %3131 = vmatpush1.bf16.msra.mxu0 0
        %3132 = vmatprep.subr.bf16.mxu0 0
        %3133 = vmatpush1.bf16.msra.mxu0 0
        %3134 = vmatprep.subr.bf16.mxu0 0
        %3135 = vmatpush1.bf16.msra.mxu0 0
        %3136 = vmatprep.subr.bf16.mxu0 0
        %3137 = vmatpush1.bf16.msra.mxu0 %v3118
        %3138 = vmatprep.subr.bf16.mxu0 0
        %3139 = vmatpush1.bf16.msra.mxu0 %v3117
        %3140 = vmatprep.subr.bf16.mxu0 0
        %3141 = vmatpush2.bf16.msra.mxu0 0
        %3142 = vmatprep.subr.bf16.mxu0 0
        %3143 = vmatpush2.bf16.msra.mxu0 0
        %3144 = vmatprep.subr.bf16.mxu0 0
        %3145 = vmatpush2.bf16.msra.mxu0 0
        %3146 = vmatprep.subr.bf16.mxu0 0
        %3147 = vmatpush2.bf16.msra.mxu0 0
        %3148 = vmatprep.subr.bf16.mxu0 0
        %3149 = vmatpush2.bf16.msra.mxu0 0
        %3150 = vmatprep.subr.bf16.mxu0 0
        %3151 = vmatpush2.bf16.msra.mxu0 0
        %3152 = vmatprep.subr.bf16.mxu0 0
        %3153 = vmatpush2.bf16.msra.mxu0 0
        %3154 = vmatprep.subr.bf16.mxu0 0
        %3155 = vmatpush2.bf16.msra.mxu0 0
        %3156 = vmatprep.mubr.bf16.mxu0 0
        %3157 = vmatmul.mubr.bf16.gmra.mxu0 %v3122
        %v3158 = vpop.f32.mrf.mxu0
        %v3159 = vadd.f32 0.0, %v3158
        %v3160 = vpop.f32.mrf.mxu0
        %v3161 = vpop.f32.mrf.mxu0
        %v3162 = vadd.f32 0.0, %v3161
        %v3163 = vpop.f32.mrf.mxu0
        %3164 = vdwg.mxu0
        %v3169 = vunpack.c.l.b16 %v3095
        %v3170 = vunpack.c.l.b16 %v3096
        %v3171 = vunpack.c.l.b16 %v3097
        %v3172 = vunpack.c.l.b16 %v3098
        %v3173 = vpack.c.b16 %v3170, %v3169
        %v3174 = vpack.c.b16 %v3172, %v3171
        %v3178 = vsel %vm1078, %v3094, 0
        %3180 = vmatprep.subr.bf16.mxu0 0
        %3181 = vmatpush1.bf16.msra.mxu0 0
        %3182 = vmatprep.subr.bf16.mxu0 0
        %3183 = vmatpush1.bf16.msra.mxu0 0
        %3184 = vmatprep.subr.bf16.mxu0 0
        %3185 = vmatpush1.bf16.msra.mxu0 0
        %3186 = vmatprep.subr.bf16.mxu0 0
        %3187 = vmatpush1.bf16.msra.mxu0 0
        %3188 = vmatprep.subr.bf16.mxu0 0
        %3189 = vmatpush1.bf16.msra.mxu0 0
        %3190 = vmatprep.subr.bf16.mxu0 0
        %3191 = vmatpush1.bf16.msra.mxu0 0
        %3192 = vmatprep.subr.bf16.mxu0 0
        %3193 = vmatpush1.bf16.msra.mxu0 %v3174
        %3194 = vmatprep.subr.bf16.mxu0 0
        %3195 = vmatpush1.bf16.msra.mxu0 %v3173
        %3196 = vmatprep.subr.bf16.mxu0 0
        %3197 = vmatpush2.bf16.msra.mxu0 0
        %3198 = vmatprep.subr.bf16.mxu0 0
        %3199 = vmatpush2.bf16.msra.mxu0 0
        %3200 = vmatprep.subr.bf16.mxu0 0
        %3201 = vmatpush2.bf16.msra.mxu0 0
        %3202 = vmatprep.subr.bf16.mxu0 0
        %3203 = vmatpush2.bf16.msra.mxu0 0
        %3204 = vmatprep.subr.bf16.mxu0 0
        %3205 = vmatpush2.bf16.msra.mxu0 0
        %3206 = vmatprep.subr.bf16.mxu0 0
        %3207 = vmatpush2.bf16.msra.mxu0 0
        %3208 = vmatprep.subr.bf16.mxu0 0
        %3209 = vmatpush2.bf16.msra.mxu0 0
        %3210 = vmatprep.subr.bf16.mxu0 0
        %3211 = vmatpush2.bf16.msra.mxu0 0
        %3212 = vmatprep.mubr.bf16.mxu0 0
        %3213 = vmatmul.mubr.bf16.gmra.mxu0 %v3178
        %v3214 = vpop.f32.mrf.mxu0
        %v3215 = vadd.f32 %v3159, %v3214
        %v3216 = vpop.f32.mrf.mxu0
        %v3217 = vpop.f32.mrf.mxu0
        %v3218 = vadd.f32 %v3162, %v3217
        %v3219 = vpop.f32.mrf.mxu0
        %3220 = vdwg.mxu0
        %v3221 = vadd.f32 %v2983, %v3088
        %v3222 = vadd.f32 %v2984, %v3088
        %v3223 = vmax.f32 %v3221, 0.0
        %v3224 = vmax.f32 %v3222, 0.0
        %v3225 = vpack.c.bf16 %v3224, %v3223
        %s3226 = scalar_lea.vmem %s4, 32
        %v3227 = vld [vmem:[%s3226] sm:$0xf]
        %v3228 = vld [vmem:[%s3226 + $0x4] sm:$0xf]
        %v3229 = vld [vmem:[%s3226 + $0x8] sm:$0xf]
        %v3230 = vld [vmem:[%s3226 + $0xc] sm:$0xf]
        %v3235 = vunpack.c.l.b16 %v3227
        %v3236 = vunpack.c.l.b16 %v3228
        %v3237 = vunpack.c.l.b16 %v3229
        %v3238 = vunpack.c.l.b16 %v3230
        %v3239 = vpack.c.b16 %v3236, %v3235
        %v3240 = vpack.c.b16 %v3238, %v3237
        %v3244 = vsel %vm1078, %v3225, 0
        %3246 = vmatprep.subr.bf16.mxu0 0
        %3247 = vmatpush1.bf16.msra.mxu0 0
        %3248 = vmatprep.subr.bf16.mxu0 0
        %3249 = vmatpush1.bf16.msra.mxu0 0
        %3250 = vmatprep.subr.bf16.mxu0 0
        %3251 = vmatpush1.bf16.msra.mxu0 0
        %3252 = vmatprep.subr.bf16.mxu0 0
        %3253 = vmatpush1.bf16.msra.mxu0 0
        %3254 = vmatprep.subr.bf16.mxu0 0
        %3255 = vmatpush1.bf16.msra.mxu0 0
        %3256 = vmatprep.subr.bf16.mxu0 0
        %3257 = vmatpush1.bf16.msra.mxu0 0
        %3258 = vmatprep.subr.bf16.mxu0 0
        %3259 = vmatpush1.bf16.msra.mxu0 %v3240
        %3260 = vmatprep.subr.bf16.mxu0 0
        %3261 = vmatpush1.bf16.msra.mxu0 %v3239
        %3262 = vmatprep.subr.bf16.mxu0 0
        %3263 = vmatpush2.bf16.msra.mxu0 0
        %3264 = vmatprep.subr.bf16.mxu0 0
        %3265 = vmatpush2.bf16.msra.mxu0 0
        %3266 = vmatprep.subr.bf16.mxu0 0
        %3267 = vmatpush2.bf16.msra.mxu0 0
        %3268 = vmatprep.subr.bf16.mxu0 0
        %3269 = vmatpush2.bf16.msra.mxu0 0
        %3270 = vmatprep.subr.bf16.mxu0 0
        %3271 = vmatpush2.bf16.msra.mxu0 0
        %3272 = vmatprep.subr.bf16.mxu0 0
        %3273 = vmatpush2.bf16.msra.mxu0 0
        %3274 = vmatprep.subr.bf16.mxu0 0
        %3275 = vmatpush2.bf16.msra.mxu0 0
        %3276 = vmatprep.subr.bf16.mxu0 0
        %3277 = vmatpush2.bf16.msra.mxu0 0
        %3278 = vmatprep.mubr.bf16.mxu0 0
        %3279 = vmatmul.mubr.bf16.gmra.mxu0 %v3244
        %v3280 = vpop.f32.mrf.mxu0
        %v3281 = vadd.f32 0.0, %v3280
        %v3282 = vpop.f32.mrf.mxu0
        %v3283 = vpop.f32.mrf.mxu0
        %v3284 = vadd.f32 0.0, %v3283
        %v3285 = vpop.f32.mrf.mxu0
        %3286 = vdwg.mxu0
        %v3287 = vadd.f32 %v3215, %v3281
        %v3288 = vadd.f32 %v3218, %v3284
        %v3289 = vadd.f32 %v3036, %v3088
        %v3290 = vadd.f32 %v3037, %v3088
        %v3291 = vmax.f32 %v3289, 0.0
        %v3292 = vmax.f32 %v3290, 0.0
        %v3293 = vpack.c.bf16 %v3292, %v3291
        %s3294 = scalar_lea.vmem %s4, 48
        %v3295 = vld [vmem:[%s3294] sm:$0xf]
        %v3296 = vld [vmem:[%s3294 + $0x4] sm:$0xf]
        %v3297 = vld [vmem:[%s3294 + $0x8] sm:$0xf]
        %v3298 = vld [vmem:[%s3294 + $0xc] sm:$0xf]
        %v3303 = vunpack.c.l.b16 %v3295
        %v3304 = vunpack.c.l.b16 %v3296
        %v3305 = vunpack.c.l.b16 %v3297
        %v3306 = vunpack.c.l.b16 %v3298
        %v3307 = vpack.c.b16 %v3304, %v3303
        %v3308 = vpack.c.b16 %v3306, %v3305
        %v3312 = vsel %vm1078, %v3293, 0
        %3314 = vmatprep.subr.bf16.mxu0 0
        %3315 = vmatpush1.bf16.msra.mxu0 0
        %3316 = vmatprep.subr.bf16.mxu0 0
        %3317 = vmatpush1.bf16.msra.mxu0 0
        %3318 = vmatprep.subr.bf16.mxu0 0
        %3319 = vmatpush1.bf16.msra.mxu0 0
        %3320 = vmatprep.subr.bf16.mxu0 0
        %3321 = vmatpush1.bf16.msra.mxu0 0
        %3322 = vmatprep.subr.bf16.mxu0 0
        %3323 = vmatpush1.bf16.msra.mxu0 0
        %3324 = vmatprep.subr.bf16.mxu0 0
        %3325 = vmatpush1.bf16.msra.mxu0 0
        %3326 = vmatprep.subr.bf16.mxu0 0
        %3327 = vmatpush1.bf16.msra.mxu0 %v3308
        %3328 = vmatprep.subr.bf16.mxu0 0
        %3329 = vmatpush1.bf16.msra.mxu0 %v3307
        %3330 = vmatprep.subr.bf16.mxu0 0
        %3331 = vmatpush2.bf16.msra.mxu0 0
        %3332 = vmatprep.subr.bf16.mxu0 0
        %3333 = vmatpush2.bf16.msra.mxu0 0
        %3334 = vmatprep.subr.bf16.mxu0 0
        %3335 = vmatpush2.bf16.msra.mxu0 0
        %3336 = vmatprep.subr.bf16.mxu0 0
        %3337 = vmatpush2.bf16.msra.mxu0 0
        %3338 = vmatprep.subr.bf16.mxu0 0
        %3339 = vmatpush2.bf16.msra.mxu0 0
        %3340 = vmatprep.subr.bf16.mxu0 0
        %3341 = vmatpush2.bf16.msra.mxu0 0
        %3342 = vmatprep.subr.bf16.mxu0 0
        %3343 = vmatpush2.bf16.msra.mxu0 0
        %3344 = vmatprep.subr.bf16.mxu0 0
        %3345 = vmatpush2.bf16.msra.mxu0 0
        %3346 = vmatprep.mubr.bf16.mxu0 0
        %3347 = vmatmul.mubr.bf16.gmra.mxu0 %v3312
        %v3348 = vpop.f32.mrf.mxu0
        %v3349 = vadd.f32 0.0, %v3348
        %v3350 = vpop.f32.mrf.mxu0
        %v3351 = vpop.f32.mrf.mxu0
        %v3352 = vadd.f32 0.0, %v3351
        %v3353 = vpop.f32.mrf.mxu0
        %3354 = vdwg.mxu0
        %v3355 = vadd.f32 %v3287, %v3349
        %v3356 = vadd.f32 %v3288, %v3352
        %v3357 = vadd.f32 %v3082, %v3088
        %v3358 = vadd.f32 %v3083, %v3088
        %v3359 = vmax.f32 %v3357, 0.0
        %v3360 = vmax.f32 %v3358, 0.0
        %v3361 = vpack.c.bf16 %v3360, %v3359
        %s3362 = scalar_lea.vmem %s4, 64
        %v3363 = vld [vmem:[%s3362] sm:$0xf]
        %v3364 = vld [vmem:[%s3362 + $0x4] sm:$0xf]
        %v3365 = vld [vmem:[%s3362 + $0x8] sm:$0xf]
        %v3366 = vld [vmem:[%s3362 + $0xc] sm:$0xf]
        %v3371 = vunpack.c.l.b16 %v3363
        %v3372 = vunpack.c.l.b16 %v3364
        %v3373 = vunpack.c.l.b16 %v3365
        %v3374 = vunpack.c.l.b16 %v3366
        %v3375 = vpack.c.b16 %v3372, %v3371
        %v3376 = vpack.c.b16 %v3374, %v3373
        %v3380 = vsel %vm1078, %v3361, 0
        %3382 = vmatprep.subr.bf16.mxu0 0
        %3383 = vmatpush1.bf16.msra.mxu0 0
        %3384 = vmatprep.subr.bf16.mxu0 0
        %3385 = vmatpush1.bf16.msra.mxu0 0
        %3386 = vmatprep.subr.bf16.mxu0 0
        %3387 = vmatpush1.bf16.msra.mxu0 0
        %3388 = vmatprep.subr.bf16.mxu0 0
        %3389 = vmatpush1.bf16.msra.mxu0 0
        %3390 = vmatprep.subr.bf16.mxu0 0
        %3391 = vmatpush1.bf16.msra.mxu0 0
        %3392 = vmatprep.subr.bf16.mxu0 0
        %3393 = vmatpush1.bf16.msra.mxu0 0
        %3394 = vmatprep.subr.bf16.mxu0 0
        %3395 = vmatpush1.bf16.msra.mxu0 %v3376
        %3396 = vmatprep.subr.bf16.mxu0 0
        %3397 = vmatpush1.bf16.msra.mxu0 %v3375
        %3398 = vmatprep.subr.bf16.mxu0 0
        %3399 = vmatpush2.bf16.msra.mxu0 0
        %3400 = vmatprep.subr.bf16.mxu0 0
        %3401 = vmatpush2.bf16.msra.mxu0 0
        %3402 = vmatprep.subr.bf16.mxu0 0
        %3403 = vmatpush2.bf16.msra.mxu0 0
        %3404 = vmatprep.subr.bf16.mxu0 0
        %3405 = vmatpush2.bf16.msra.mxu0 0
        %3406 = vmatprep.subr.bf16.mxu0 0
        %3407 = vmatpush2.bf16.msra.mxu0 0
        %3408 = vmatprep.subr.bf16.mxu0 0
        %3409 = vmatpush2.bf16.msra.mxu0 0
        %3410 = vmatprep.subr.bf16.mxu0 0
        %3411 = vmatpush2.bf16.msra.mxu0 0
        %3412 = vmatprep.subr.bf16.mxu0 0
        %3413 = vmatpush2.bf16.msra.mxu0 0
        %3414 = vmatprep.mubr.bf16.mxu0 0
        %3415 = vmatmul.mubr.bf16.gmra.mxu0 %v3380
        %v3416 = vpop.f32.mrf.mxu0
        %v3417 = vadd.f32 0.0, %v3416
        %v3418 = vpop.f32.mrf.mxu0
        %v3419 = vpop.f32.mrf.mxu0
        %v3420 = vadd.f32 0.0, %v3419
        %v3421 = vpop.f32.mrf.mxu0
        %3422 = vdwg.mxu0
        %v3423 = vadd.f32 %v3355, %v3417
        %v3424 = vadd.f32 %v3356, %v3420
        %v3425 = vld [vmem:[%s5] sm:$0x1]
        %v3427 = vlaneseq
        %v3428 = vshrl.u32 %v3427, 7
        %v3429 = vsub.s32 0, %v3428
        %v3430 = vrot.slane %v3425, %v3429
        %v3432 = vadd.f32 %v3423, %v3430
        %v3433 = vadd.f32 %v3424, %v3430
        %v3434 = vld [vmem:[%s396] sm:$0xff]
        %v3435 = vld [vmem:[%s396 + $0x8] sm:$0xff]
        %v3436 = vadd.f32 %v3432, %v3434
        %v3437 = vadd.f32 %v3433, %v3435
        %3438 = vst [vmem:[%s390] sm:$0xff] %v3436
        %3439 = vst [vmem:[%s390 + $0x8] sm:$0xff] %v3437
        %s3440 = sand.u32 %s202, 1
        %s3441 = scalar_lea.sflag [#allocation4], %s3440
        %s3442 = sand.u32 %s202, 1
        %s3443 = smul.addr %s3442, 16
        %s3444 = scalar_lea.vmem [#allocation3], %s3443
        // Predicated region
        $region90: #{tpu_custom_call.1} parent=84 // pred_check
          %p3445 = pneg %p212
        $region91: #{tpu_custom_call.1} parent=84 // pred_check_branch
          %3447 = sbr.rel (%p3445) target = $region93
        $region92: #{tpu_custom_call.1} parent=84 // pred_region
          %s3448 = smul.u32 2, %s26
          %s3450 = ssub.s32 256, 256
          %3451 = vsyncadd %s3441, %s3450
          %s3452 = smul.addr %s25, 2
          %s3453 = sadd.s32 %s3448, %s3452
          %s3454 = smul.addr %s3453, 128
          %s3455 = scalar_lea.hbm %s7, %s3454
          %s3456 = sshll.u32 %s3444, 4
          %s3457 = int_to_ptr.vmem [resolvable:$true] %s3456
          %3462 = dma.vmem_to_hbm [thread:$0]  %s3457, 256, %s3455, %s3441, 128, 128, 8
        $region93: #{tpu_custom_call.1} parent=84 // pred_fallthru
          _
      $region85: #{tpu_custom_call.1} parent=5 // pred_fallthru
        _
      %p3463 = scmp.le.s32.totalorder 2, %s16
      // Predicated region
      $region94: #{tpu_custom_call.1} parent=5 // pred_check
        %p3464 = pneg %p3463
      $region95: #{tpu_custom_call.1} parent=5 // pred_check_branch
        %3466 = sbr.rel (%p3464) target = $region97
      $region96: #{tpu_custom_call.1} parent=5 // pred_region
        %s3467 = ssub.s32 %s16, 2
        // Predicated region
        $region98: #{tpu_custom_call.1} parent=96 // pred_check
          %p3468 = pneg %p218
        $region99: #{tpu_custom_call.1} parent=96 // pred_check_branch
          %3470 = sbr.rel (%p3468) target = $region101
        $region100: #{tpu_custom_call.1} parent=96 // pred_region
          %s3471 = sand.u32 %s203, 1
          %s3472 = scalar_lea.sflag [#allocation4], %s3471
          %s3473 = sand.u32 %s203, 1
          %s3474 = smul.addr %s3473, 16
          %s3475 = scalar_lea.vmem [#allocation3], %s3474
          %3476 = dma.done %s3472, 256
        $region101: #{tpu_custom_call.1} parent=96 // pred_fallthru
          _
      $region97: #{tpu_custom_call.1} parent=5 // pred_fallthru
        _
    $region6: #{tpu_custom_call.1} parent=1 // loop_footer
      %s20 = sadd.s32 1, %s16
    $region7: #{tpu_custom_call.1} parent=1 // loop_footer_branch
      %15 = sbr.rel target = $region3
    $region8: #{tpu_custom_call.1} parent=1 // loop_exit
      _
    %3477 = vsyncpa [#allocation4], 1
    %s3478 = scalar_lea.sflag [#allocation4], 1
    %3479 = vsyncpa %s3478, 1

</llo_original>
